<compile_context>
chip_gen: v5e
topology: v5e:2x2
jax: 0.10.0
libtpu: 0.0.40
codegen_flags: <defaults>
</compile_context>

<pallas_src>
import math
import functools

import jax
import jax.numpy as jnp
import numpy as np
from jax.experimental import pallas as pl
from jax.experimental.pallas import tpu as pltpu


def encoder_kernel(x_ref, mask_ref,
                   wqkv_ref, bqkv_ref, wc_ref, bc_ref, g1_ref, be1_ref,
                   w1_ref, b1_ref, w2_ref, b2_ref, g2_ref, be2_ref,
                   out_ref, ypad_ref, *,
                   heads_num, size_head, kernel_size, d_real):
    eps = 1e-5
    inv_d = 1.0 / d_real
    f32 = jnp.float32
    bf16 = jnp.bfloat16
    Bt, S, Dp = x_ref.shape
    R = Bt * S
    Dh = size_head
    HD = heads_num * Dh
    scale = 1.0 / math.sqrt(Dh)

    x = x_ref[...].reshape(R, Dp)             # f32 residual stream (padded lanes are 0)
    x_bf = x.astype(bf16)

    # ---- fused Q/K/V projection: one MXU matmul with N = 3*HD ----
    qkv = jnp.dot(x_bf, wqkv_ref[...], preferred_element_type=f32) + bqkv_ref[...]
    qkv = qkv.reshape(Bt, S, 3 * HD)

    # ---- self attention (batched over the batch-block, static head loop) ----
    mask = mask_ref[...]                       # (Bt, 1, S) additive, broadcasts over queries
    head_ctx = []
    for h in range(heads_num):                 # static unrolled head loop
        lo = h * Dh
        qh = qkv[:, :, lo:lo + Dh].astype(bf16)
        kh = qkv[:, :, HD + lo:HD + lo + Dh].astype(bf16)
        vh = qkv[:, :, 2 * HD + lo:2 * HD + lo + Dh].astype(bf16)
        s = jnp.einsum('bqd,bkd->bqk', qh, kh,
                       preferred_element_type=f32)               # (Bt, S, S)
        s = s * scale + mask
        m = jnp.max(s, axis=-1, keepdims=True)
        e = jnp.exp(s - m)                                        # un-normalized probs
        denom = jnp.sum(e, axis=-1, keepdims=True)
        ctx_h = jnp.einsum('bqk,bkd->bqd', e.astype(bf16), vh,
                           preferred_element_type=f32)            # (Bt, S, Dh)
        # normalize the small [Bt,S,Dh] result instead of the [Bt,S,S] probs
        head_ctx.append(ctx_h * pl.reciprocal(denom, approx=True))
    ctx = jnp.concatenate(head_ctx, axis=-1).reshape(R, HD)       # (R, HD) f32

    ctx_lin = jnp.dot(ctx.astype(bf16), wc_ref[...],
                      preferred_element_type=f32) + bc_ref[...]
    # TODO(synk): dropout is identity here (eval mode); training-mode dropout not implemented.

    # ---- residual + LayerNorm 1 ----
    # Sums run over the zero-padded lanes; divide by the real D.  Padded lanes
    # of gain/bias are 0, so padded lanes of y stay exactly 0.
    y = x + ctx_lin
    mu = jnp.sum(y, axis=-1, keepdims=True) * inv_d
    var = jnp.sum(y * y, axis=-1, keepdims=True) * inv_d - mu * mu
    y = (y - mu) * jax.lax.rsqrt(var + eps) * g1_ref[...] + be1_ref[...]

    # ---- InterLayer: Conv1d(D->I, k, 'same') -> ReLU -> Conv1d(I->D, 1) ----
    # 'same' zero padding via a VMEM scratch: zero the pad rows, write y into
    # the middle, read each tap as a static sublane slice feeding one matmul.
    padk = kernel_size // 2
    if padk > 0:
        ypad_ref[:, :padk, :] = jnp.zeros((Bt, padk, Dp), f32)
        ypad_ref[:, padk + S:, :] = jnp.zeros((Bt, padk, Dp), f32)
    ypad_ref[:, padk:padk + S, :] = y.reshape(Bt, S, Dp)

    inter = w1_ref.shape[2]
    h1 = jnp.broadcast_to(b1_ref[...], (R, inter)).astype(f32)
    # TODO(synk): at production sizes (large inter_size) tile this block over I
    # (accumulate h2 per I-tile) so w1/w2 residency fits v7x's 64 MiB VMEM.
    for t in range(kernel_size):
        tap = ypad_ref[:, t:t + S, :].reshape(R, Dp).astype(bf16)
        h1 = h1 + jnp.dot(tap, w1_ref[t], preferred_element_type=f32)
    h1 = jnp.maximum(h1, 0.0)                                         # ReLU
    h2 = jnp.dot(h1.astype(bf16), w2_ref[...],
                 preferred_element_type=f32) + b2_ref[...]

    # ---- residual + LayerNorm 2 ----
    z = y + h2
    mu2 = jnp.sum(z, axis=-1, keepdims=True) * inv_d
    var2 = jnp.sum(z * z, axis=-1, keepdims=True) * inv_d - mu2 * mu2
    out = (z - mu2) * jax.lax.rsqrt(var2 + eps) * g2_ref[...] + be2_ref[...]
    out_ref[...] = out.reshape(Bt, S, Dp)


def encoder_forward(x, attention_mask, params, *, heads_num, size_head,
                    kernel_size, batch_block=None):
    B, S, D = x.shape
    HD = heads_num * size_head
    Ic = params["w1"].shape[2]
    Kk = kernel_size
    Dp = ((D + 127) // 128) * 128          # lane-dense residual-stream dim
    padk = Kk // 2

    # batch elements per grid step: amortize per-step overhead but keep >=2
    # programs so both TensorCores (v7x) are used.
    if batch_block is None:
        bt = max(1, B // 2)
        while B % bt:
            bt -= 1
    else:
        bt = batch_block
    assert B % bt == 0

    def pad_axis(a, axis, to):
        if a.shape[axis] == to:
            return a
        widths = [(0, 0)] * a.ndim
        widths[axis] = (0, to - a.shape[axis])
        return jnp.pad(a, widths)

    bf16 = jnp.bfloat16
    x_pad = pad_axis(x.astype(jnp.float32), 2, Dp)
    mask3 = attention_mask.reshape(B, 1, S).astype(jnp.float32)

    # fused QKV weights; matmul weights stored bf16, biases / LN params f32
    wqkv = pad_axis(jnp.concatenate([params["wq"], params["wk"], params["wv"]],
                                    axis=1), 0, Dp).astype(bf16)
    bqkv = jnp.concatenate([params["bq"], params["bk"], params["bv"]], axis=1)
    wc = pad_axis(params["wc"], 1, Dp).astype(bf16)
    bc = pad_axis(params["bc"], 1, Dp)
    g1 = pad_axis(params["g1"], 1, Dp)
    be1 = pad_axis(params["be1"], 1, Dp)
    w1 = pad_axis(params["w1"], 1, Dp).astype(bf16)     # [tap, Dp, I]
    b1 = params["b1"]
    w2 = pad_axis(params["w2"], 1, Dp).astype(bf16)
    b2 = pad_axis(params["b2"], 1, Dp)
    g2 = pad_axis(params["g2"], 1, Dp)
    be2 = pad_axis(params["be2"], 1, Dp)

    operands = (x_pad, mask3, wqkv, bqkv, wc, bc, g1, be1,
                w1, b1, w2, b2, g2, be2)

    kernel = functools.partial(encoder_kernel, heads_num=heads_num,
                               size_head=size_head, kernel_size=kernel_size,
                               d_real=D)

    def build(single_buffer_weights):
        def wspec(shape):
            n = len(shape)
            idx = lambda i, _n=n: (0,) * _n
            if single_buffer_weights:
                # constant index map -> single buffer is enough; halves weight VMEM
                return pl.BlockSpec(shape, idx, pipeline_mode=pl.Buffered(1))
            return pl.BlockSpec(shape, idx)

        in_specs = [
            pl.BlockSpec((bt, S, Dp), lambda i: (i, 0, 0)),   # x (padded lanes)
            pl.BlockSpec((bt, 1, S), lambda i: (i, 0, 0)),    # additive mask
            wspec((Dp, 3 * HD)), wspec((1, 3 * HD)),          # fused QKV
            wspec((HD, Dp)), wspec((1, Dp)),                  # context_linear
            wspec((1, Dp)), wspec((1, Dp)),                   # layer_norm 1
            wspec((Kk, Dp, Ic)), wspec((1, Ic)),              # conv1 (k taps)
            wspec((Ic, Dp)), wspec((1, Dp)),                  # conv2 (1x1)
            wspec((1, Dp)), wspec((1, Dp)),                   # layer_norm 2
        ]
        return pl.pallas_call(
            kernel,
            out_shape=jax.ShapeDtypeStruct((B, S, Dp), jnp.float32),
            grid=(B // bt,),
            in_specs=in_specs,
            out_specs=pl.BlockSpec((bt, S, Dp), lambda i: (i, 0, 0)),
            scratch_shapes=[pltpu.VMEM((bt, S + 2 * padk, Dp), jnp.float32)],
            compiler_params=pltpu.CompilerParams(
                dimension_semantics=("parallel",)),
        )

    try:
        out_pad = build(True)(*operands)
    except Exception:
        # installed jax doesn't support BlockSpec(pipeline_mode=pl.Buffered(1));
        # fall back to the default double-buffered weight pipeline.
        out_pad = build(False)(*operands)

    out = out_pad[:, :, :D] if Dp != D else out_pad
    return out, attention_mask


def make_params(key, model_size, inter_size, kernel_size, heads_num, size_head):
    HD = heads_num * size_head
    ks = jax.random.split(key, 16)
    w = lambda k, shape, s=0.1: (jax.random.normal(k, shape, jnp.float32) * s)
    return dict(
        wq=w(ks[0], (model_size, HD)), bq=w(ks[1], (1, HD)),
        wk=w(ks[2], (model_size, HD)), bk=w(ks[3], (1, HD)),
        wv=w(ks[4], (model_size, HD)), bv=w(ks[5], (1, HD)),
        wc=w(ks[6], (HD, model_size)), bc=w(ks[7], (1, model_size)),
        g1=1.0 + w(ks[8], (1, model_size)), be1=w(ks[9], (1, model_size)),
        w1=w(ks[10], (kernel_size, model_size, inter_size)),   # [tap, Cin, Cout]
        b1=w(ks[11], (1, inter_size)),
        w2=w(ks[12], (inter_size, model_size)), b2=w(ks[13], (1, model_size)),
        g2=1.0 + w(ks[14], (1, model_size)), be2=w(ks[15], (1, model_size)),
    )


def encoder_reference(x, attention_mask, params, *, heads_num, size_head, kernel_size):
    """Pure-JAX f32 reference mirroring the PyTorch forward (dropout = identity)."""
    B, S, D = x.shape
    H, Dh = heads_num, size_head

    def ln(v, g, b):
        mu = jnp.mean(v, axis=-1, keepdims=True)
        var = jnp.mean((v - mu) ** 2, axis=-1, keepdims=True)
        return (v - mu) / jnp.sqrt(var + 1e-5) * g + b

    Q = (x @ params["wq"] + params["bq"]).reshape(B, S, H, Dh).transpose(0, 2, 1, 3)
    K = (x @ params["wk"] + params["bk"]).reshape(B, S, H, Dh).transpose(0, 2, 1, 3)
    V = (x @ params["wv"] + params["bv"]).reshape(B, S, H, Dh).transpose(0, 2, 1, 3)
    scores = jnp.einsum('bhqd,bhkd->bhqk', Q / math.sqrt(Dh), K)
    scores = scores + attention_mask[:, None, None, :]
    P = jax.nn.softmax(scores, axis=-1)
    ctx = jnp.einsum('bhqk,bhkd->bhqd', P, V).transpose(0, 2, 1, 3).reshape(B, S, H * Dh)
    y = ln(x + ctx @ params["wc"] + params["bc"], params["g1"], params["be1"])

    pad = kernel_size // 2
    ypad = jnp.pad(y, ((0, 0), (pad, pad), (0, 0)))
    acc = jnp.zeros((B, S, params["w1"].shape[2]), jnp.float32)
    for t in range(kernel_size):
        acc = acc + jnp.einsum('bsd,di->bsi', ypad[:, t:t + S, :], params["w1"][t])
    h = jax.nn.relu(acc + params["b1"])
    h2 = h @ params["w2"] + params["b2"]
    out = ln(y + h2, params["g2"], params["be2"])
    return out, attention_mask


if __name__ == "__main__":
    B, S, D = 4, 8, 32           # batch, seq, model_size
    H, Dh, I, Kk = 4, 8, 64, 3   # heads_num, size_head, inter_size, iter_kernel_size

    key = jax.random.PRNGKey(0)
    kx, kp = jax.random.split(key, 2)
    x = jax.random.normal(kx, (B, S, D), jnp.float32)
    # additive attention mask: 0 for valid tokens, -1e9 for padded positions
    lengths = jnp.array([S, S - 2, S, S - 3])
    valid = jnp.arange(S)[None, :] < lengths[:, None]
    attention_mask = jnp.where(valid, 0.0, -1e9).astype(jnp.float32)

    params = make_params(kp, D, I, Kk, H, Dh)

    out, mask_out = encoder_forward(x, attention_mask, params,
                                    heads_num=H, size_head=Dh, kernel_size=Kk)
    out = jax.block_until_ready(out)

    ref, _ = encoder_reference(x, attention_mask, params,
                               heads_num=H, size_head=Dh, kernel_size=Kk)
    # Kernel feeds the MXU bf16 operands (f32 accumulation); 3e-2 covers bf16
    # rounding + approx reciprocal while still catching structural bugs.
    np.testing.assert_allclose(np.asarray(out), np.asarray(ref),
                               rtol=3e-2, atol=3e-2)
    assert mask_out.shape == attention_mask.shape

    print("KERNEL_OK")
</pallas_src>

<mosaic_0001>
module attributes {stable_mosaic.version = 11 : i64} {
  func.func @encoder_kernel(%arg0: i32, %arg1: memref<2x8x128xf32, #tpu.memory_space<vmem>>, %arg2: memref<2x1x8xf32, #tpu.memory_space<vmem>>, %arg3: memref<128x96xbf16, #tpu.memory_space<vmem>>, %arg4: memref<1x96xf32, #tpu.memory_space<vmem>>, %arg5: memref<32x128xbf16, #tpu.memory_space<vmem>>, %arg6: memref<1x128xf32, #tpu.memory_space<vmem>>, %arg7: memref<1x128xf32, #tpu.memory_space<vmem>>, %arg8: memref<1x128xf32, #tpu.memory_space<vmem>>, %arg9: memref<3x128x64xbf16, #tpu.memory_space<vmem>>, %arg10: memref<1x64xf32, #tpu.memory_space<vmem>>, %arg11: memref<64x128xbf16, #tpu.memory_space<vmem>>, %arg12: memref<1x128xf32, #tpu.memory_space<vmem>>, %arg13: memref<1x128xf32, #tpu.memory_space<vmem>>, %arg14: memref<1x128xf32, #tpu.memory_space<vmem>>, %arg15: memref<2x8x128xf32, #tpu.memory_space<vmem>>, %arg16: memref<2x10x128xf32, #tpu.memory_space<vmem>>) attributes {dimension_semantics = [#tpu.dimension_semantics<parallel>], iteration_bounds = array<i64: 2>, scalar_prefetch = 0 : i64, scratch_operands = 1 : i64, tpu.core_type = #tpu.core_type<tc>, window_params = [{transform_indices = @transform_0, window_bounds = array<i64: 2, 8, 128>}, {transform_indices = @transform_1, window_bounds = array<i64: 2, 1, 8>}, {pipeline_mode = #tpu.pipeline_mode<synchronous>, transform_indices = @transform_2, window_bounds = array<i64: 128, 96>}, {pipeline_mode = #tpu.pipeline_mode<synchronous>, transform_indices = @transform_3, window_bounds = array<i64: 1, 96>}, {pipeline_mode = #tpu.pipeline_mode<synchronous>, transform_indices = @transform_4, window_bounds = array<i64: 32, 128>}, {pipeline_mode = #tpu.pipeline_mode<synchronous>, transform_indices = @transform_5, window_bounds = array<i64: 1, 128>}, {pipeline_mode = #tpu.pipeline_mode<synchronous>, transform_indices = @transform_6, window_bounds = array<i64: 1, 128>}, {pipeline_mode = #tpu.pipeline_mode<synchronous>, transform_indices = @transform_7, window_bounds = array<i64: 1, 128>}, {pipeline_mode = #tpu.pipeline_mode<synchronous>, transform_indices = @transform_8, window_bounds = array<i64: 3, 128, 64>}, {pipeline_mode = #tpu.pipeline_mode<synchronous>, transform_indices = @transform_9, window_bounds = array<i64: 1, 64>}, {pipeline_mode = #tpu.pipeline_mode<synchronous>, transform_indices = @transform_10, window_bounds = array<i64: 64, 128>}, {pipeline_mode = #tpu.pipeline_mode<synchronous>, transform_indices = @transform_11, window_bounds = array<i64: 1, 128>}, {pipeline_mode = #tpu.pipeline_mode<synchronous>, transform_indices = @transform_12, window_bounds = array<i64: 1, 128>}, {pipeline_mode = #tpu.pipeline_mode<synchronous>, transform_indices = @transform_13, window_bounds = array<i64: 1, 128>}, {transform_indices = @transform_14, window_bounds = array<i64: 2, 8, 128>}]} {
    %c0 = arith.constant 0 : index
    %c0_0 = arith.constant 0 : index
    %c0_1 = arith.constant 0 : index
    %0 = vector.load %arg1[%c0, %c0_0, %c0_1] : memref<2x8x128xf32, #tpu.memory_space<vmem>>, vector<2x8x128xf32>
    %1 = vector.shape_cast %0 : vector<2x8x128xf32> to vector<16x128xf32>
    %2 = arith.truncf %1 : vector<16x128xf32> to vector<16x128xbf16>
    %c0_2 = arith.constant 0 : index
    %c0_3 = arith.constant 0 : index
    %3 = vector.load %arg3[%c0_2, %c0_3] : memref<128x96xbf16, #tpu.memory_space<vmem>>, vector<128x96xbf16>
    %cst = arith.constant dense<0.000000e+00> : vector<16x96xf32>
    %4 = tpu.matmul %2, %3, %cst {dimension_numbers = #tpu.dot_dimension_numbers<[1], [0], [0], [1], [0, 0, 1, 1], [], []>} : vector<16x128xbf16>, vector<128x96xbf16>, vector<16x96xf32> -> vector<16x96xf32>
    %c0_4 = arith.constant 0 : index
    %c0_5 = arith.constant 0 : index
    %5 = vector.load %arg4[%c0_4, %c0_5] : memref<1x96xf32, #tpu.memory_space<vmem>>, vector<1x96xf32>
    %6 = vector.broadcast %5 : vector<1x96xf32> to vector<16x96xf32>
    %7 = arith.addf %4, %6 : vector<16x96xf32>
    %8 = vector.shape_cast %7 : vector<16x96xf32> to vector<2x8x96xf32>
    %c0_6 = arith.constant 0 : index
    %c0_7 = arith.constant 0 : index
    %c0_8 = arith.constant 0 : index
    %9 = vector.load %arg2[%c0_6, %c0_7, %c0_8] : memref<2x1x8xf32, #tpu.memory_space<vmem>>, vector<2x1x8xf32>
    %10 = vector.extract_strided_slice %8 {offsets = [0, 0, 0], sizes = [2, 8, 8], strides = [1, 1, 1]} : vector<2x8x96xf32> to vector<2x8x8xf32>
    %11 = arith.truncf %10 : vector<2x8x8xf32> to vector<2x8x8xbf16>
    %12 = vector.extract_strided_slice %8 {offsets = [0, 0, 32], sizes = [2, 8, 8], strides = [1, 1, 1]} : vector<2x8x96xf32> to vector<2x8x8xf32>
    %13 = arith.truncf %12 : vector<2x8x8xf32> to vector<2x8x8xbf16>
    %14 = vector.extract_strided_slice %8 {offsets = [0, 0, 64], sizes = [2, 8, 8], strides = [1, 1, 1]} : vector<2x8x96xf32> to vector<2x8x8xf32>
    %15 = arith.truncf %14 : vector<2x8x8xf32> to vector<2x8x8xbf16>
    "tpu.trace_start"() <{level = 10 : i32, message = "bqd,bkd->bqk"}> : () -> ()
    %cst_9 = arith.constant dense<0.000000e+00> : vector<2x8x8xf32>
    %16 = tpu.matmul %11, %13, %cst_9 {dimension_numbers = #tpu.dot_dimension_numbers<[2], [2], [1], [1], [0, 0, 0, 1, 1, 1], [0], [0]>} : vector<2x8x8xbf16>, vector<2x8x8xbf16>, vector<2x8x8xf32> -> vector<2x8x8xf32>
    "tpu.trace_stop"() : () -> ()
    %cst_10 = arith.constant 0.353553385 : f32
    %17 = vector.broadcast %cst_10 : f32 to vector<2x8x8xf32>
    %18 = arith.mulf %16, %17 : vector<2x8x8xf32>
    %19 = vector.broadcast %9 : vector<2x1x8xf32> to vector<2x8x8xf32>
    %20 = arith.addf %18, %19 : vector<2x8x8xf32>
    %cst_11 = arith.constant dense<0xFF800000> : vector<2x8xf32>
    %21 = vector.multi_reduction <maximumf>, %20, %cst_11 [2] : vector<2x8x8xf32> to vector<2x8xf32>
    %22 = vector.shape_cast %21 : vector<2x8xf32> to vector<2x8x1xf32>
    %23 = vector.broadcast %22 : vector<2x8x1xf32> to vector<2x8x8xf32>
    %24 = arith.subf %20, %23 : vector<2x8x8xf32>
    %25 = math.exp %24 : vector<2x8x8xf32>
    %cst_12 = arith.constant dense<0.000000e+00> : vector<2x8xf32>
    %26 = vector.multi_reduction <add>, %25, %cst_12 [2] : vector<2x8x8xf32> to vector<2x8xf32>
    %27 = vector.shape_cast %26 : vector<2x8xf32> to vector<2x8x1xf32>
    %28 = arith.truncf %25 : vector<2x8x8xf32> to vector<2x8x8xbf16>
    "tpu.trace_start"() <{level = 10 : i32, message = "bqk,bkd->bqd"}> : () -> ()
    %cst_13 = arith.constant dense<0.000000e+00> : vector<2x8x8xf32>
    %29 = tpu.matmul %28, %15, %cst_13 {dimension_numbers = #tpu.dot_dimension_numbers<[2], [1], [1], [2], [0, 0, 0, 1, 1, 2], [0], [0]>} : vector<2x8x8xbf16>, vector<2x8x8xbf16>, vector<2x8x8xf32> -> vector<2x8x8xf32>
    "tpu.trace_stop"() : () -> ()
    %30 = tpu.reciprocal %27 {approx = true} : vector<2x8x1xf32> -> vector<2x8x1xf32>
    %31 = vector.broadcast %30 : vector<2x8x1xf32> to vector<2x8x8xf32>
    %32 = arith.mulf %29, %31 : vector<2x8x8xf32>
    %33 = vector.extract_strided_slice %8 {offsets = [0, 0, 8], sizes = [2, 8, 8], strides = [1, 1, 1]} : vector<2x8x96xf32> to vector<2x8x8xf32>
    %34 = arith.truncf %33 : vector<2x8x8xf32> to vector<2x8x8xbf16>
    %35 = vector.extract_strided_slice %8 {offsets = [0, 0, 40], sizes = [2, 8, 8], strides = [1, 1, 1]} : vector<2x8x96xf32> to vector<2x8x8xf32>
    %36 = arith.truncf %35 : vector<2x8x8xf32> to vector<2x8x8xbf16>
    %37 = vector.extract_strided_slice %8 {offsets = [0, 0, 72], sizes = [2, 8, 8], strides = [1, 1, 1]} : vector<2x8x96xf32> to vector<2x8x8xf32>
    %38 = arith.truncf %37 : vector<2x8x8xf32> to vector<2x8x8xbf16>
    "tpu.trace_start"() <{level = 10 : i32, message = "bqd,bkd->bqk"}> : () -> ()
    %cst_14 = arith.constant dense<0.000000e+00> : vector<2x8x8xf32>
    %39 = tpu.matmul %34, %36, %cst_14 {dimension_numbers = #tpu.dot_dimension_numbers<[2], [2], [1], [1], [0, 0, 0, 1, 1, 1], [0], [0]>} : vector<2x8x8xbf16>, vector<2x8x8xbf16>, vector<2x8x8xf32> -> vector<2x8x8xf32>
    "tpu.trace_stop"() : () -> ()
    %cst_15 = arith.constant 0.353553385 : f32
    %40 = vector.broadcast %cst_15 : f32 to vector<2x8x8xf32>
    %41 = arith.mulf %39, %40 : vector<2x8x8xf32>
    %42 = vector.broadcast %9 : vector<2x1x8xf32> to vector<2x8x8xf32>
    %43 = arith.addf %41, %42 : vector<2x8x8xf32>
    %cst_16 = arith.constant dense<0xFF800000> : vector<2x8xf32>
    %44 = vector.multi_reduction <maximumf>, %43, %cst_16 [2] : vector<2x8x8xf32> to vector<2x8xf32>
    %45 = vector.shape_cast %44 : vector<2x8xf32> to vector<2x8x1xf32>
    %46 = vector.broadcast %45 : vector<2x8x1xf32> to vector<2x8x8xf32>
    %47 = arith.subf %43, %46 : vector<2x8x8xf32>
    %48 = math.exp %47 : vector<2x8x8xf32>
    %cst_17 = arith.constant dense<0.000000e+00> : vector<2x8xf32>
    %49 = vector.multi_reduction <add>, %48, %cst_17 [2] : vector<2x8x8xf32> to vector<2x8xf32>
    %50 = vector.shape_cast %49 : vector<2x8xf32> to vector<2x8x1xf32>
    %51 = arith.truncf %48 : vector<2x8x8xf32> to vector<2x8x8xbf16>
    "tpu.trace_start"() <{level = 10 : i32, message = "bqk,bkd->bqd"}> : () -> ()
    %cst_18 = arith.constant dense<0.000000e+00> : vector<2x8x8xf32>
    %52 = tpu.matmul %51, %38, %cst_18 {dimension_numbers = #tpu.dot_dimension_numbers<[2], [1], [1], [2], [0, 0, 0, 1, 1, 2], [0], [0]>} : vector<2x8x8xbf16>, vector<2x8x8xbf16>, vector<2x8x8xf32> -> vector<2x8x8xf32>
    "tpu.trace_stop"() : () -> ()
    %53 = tpu.reciprocal %50 {approx = true} : vector<2x8x1xf32> -> vector<2x8x1xf32>
    %54 = vector.broadcast %53 : vector<2x8x1xf32> to vector<2x8x8xf32>
    %55 = arith.mulf %52, %54 : vector<2x8x8xf32>
    %56 = vector.extract_strided_slice %8 {offsets = [0, 0, 16], sizes = [2, 8, 8], strides = [1, 1, 1]} : vector<2x8x96xf32> to vector<2x8x8xf32>
    %57 = arith.truncf %56 : vector<2x8x8xf32> to vector<2x8x8xbf16>
    %58 = vector.extract_strided_slice %8 {offsets = [0, 0, 48], sizes = [2, 8, 8], strides = [1, 1, 1]} : vector<2x8x96xf32> to vector<2x8x8xf32>
    %59 = arith.truncf %58 : vector<2x8x8xf32> to vector<2x8x8xbf16>
    %60 = vector.extract_strided_slice %8 {offsets = [0, 0, 80], sizes = [2, 8, 8], strides = [1, 1, 1]} : vector<2x8x96xf32> to vector<2x8x8xf32>
    %61 = arith.truncf %60 : vector<2x8x8xf32> to vector<2x8x8xbf16>
    "tpu.trace_start"() <{level = 10 : i32, message = "bqd,bkd->bqk"}> : () -> ()
    %cst_19 = arith.constant dense<0.000000e+00> : vector<2x8x8xf32>
    %62 = tpu.matmul %57, %59, %cst_19 {dimension_numbers = #tpu.dot_dimension_numbers<[2], [2], [1], [1], [0, 0, 0, 1, 1, 1], [0], [0]>} : vector<2x8x8xbf16>, vector<2x8x8xbf16>, vector<2x8x8xf32> -> vector<2x8x8xf32>
    "tpu.trace_stop"() : () -> ()
    %cst_20 = arith.constant 0.353553385 : f32
    %63 = vector.broadcast %cst_20 : f32 to vector<2x8x8xf32>
    %64 = arith.mulf %62, %63 : vector<2x8x8xf32>
    %65 = vector.broadcast %9 : vector<2x1x8xf32> to vector<2x8x8xf32>
    %66 = arith.addf %64, %65 : vector<2x8x8xf32>
    %cst_21 = arith.constant dense<0xFF800000> : vector<2x8xf32>
    %67 = vector.multi_reduction <maximumf>, %66, %cst_21 [2] : vector<2x8x8xf32> to vector<2x8xf32>
    %68 = vector.shape_cast %67 : vector<2x8xf32> to vector<2x8x1xf32>
    %69 = vector.broadcast %68 : vector<2x8x1xf32> to vector<2x8x8xf32>
    %70 = arith.subf %66, %69 : vector<2x8x8xf32>
    %71 = math.exp %70 : vector<2x8x8xf32>
    %cst_22 = arith.constant dense<0.000000e+00> : vector<2x8xf32>
    %72 = vector.multi_reduction <add>, %71, %cst_22 [2] : vector<2x8x8xf32> to vector<2x8xf32>
    %73 = vector.shape_cast %72 : vector<2x8xf32> to vector<2x8x1xf32>
    %74 = arith.truncf %71 : vector<2x8x8xf32> to vector<2x8x8xbf16>
    "tpu.trace_start"() <{level = 10 : i32, message = "bqk,bkd->bqd"}> : () -> ()
    %cst_23 = arith.constant dense<0.000000e+00> : vector<2x8x8xf32>
    %75 = tpu.matmul %74, %61, %cst_23 {dimension_numbers = #tpu.dot_dimension_numbers<[2], [1], [1], [2], [0, 0, 0, 1, 1, 2], [0], [0]>} : vector<2x8x8xbf16>, vector<2x8x8xbf16>, vector<2x8x8xf32> -> vector<2x8x8xf32>
    "tpu.trace_stop"() : () -> ()
    %76 = tpu.reciprocal %73 {approx = true} : vector<2x8x1xf32> -> vector<2x8x1xf32>
    %77 = vector.broadcast %76 : vector<2x8x1xf32> to vector<2x8x8xf32>
    %78 = arith.mulf %75, %77 : vector<2x8x8xf32>
    %79 = vector.extract_strided_slice %8 {offsets = [0, 0, 24], sizes = [2, 8, 8], strides = [1, 1, 1]} : vector<2x8x96xf32> to vector<2x8x8xf32>
    %80 = arith.truncf %79 : vector<2x8x8xf32> to vector<2x8x8xbf16>
    %81 = vector.extract_strided_slice %8 {offsets = [0, 0, 56], sizes = [2, 8, 8], strides = [1, 1, 1]} : vector<2x8x96xf32> to vector<2x8x8xf32>
    %82 = arith.truncf %81 : vector<2x8x8xf32> to vector<2x8x8xbf16>
    %83 = vector.extract_strided_slice %8 {offsets = [0, 0, 88], sizes = [2, 8, 8], strides = [1, 1, 1]} : vector<2x8x96xf32> to vector<2x8x8xf32>
    %84 = arith.truncf %83 : vector<2x8x8xf32> to vector<2x8x8xbf16>
    "tpu.trace_start"() <{level = 10 : i32, message = "bqd,bkd->bqk"}> : () -> ()
    %cst_24 = arith.constant dense<0.000000e+00> : vector<2x8x8xf32>
    %85 = tpu.matmul %80, %82, %cst_24 {dimension_numbers = #tpu.dot_dimension_numbers<[2], [2], [1], [1], [0, 0, 0, 1, 1, 1], [0], [0]>} : vector<2x8x8xbf16>, vector<2x8x8xbf16>, vector<2x8x8xf32> -> vector<2x8x8xf32>
    "tpu.trace_stop"() : () -> ()
    %cst_25 = arith.constant 0.353553385 : f32
    %86 = vector.broadcast %cst_25 : f32 to vector<2x8x8xf32>
    %87 = arith.mulf %85, %86 : vector<2x8x8xf32>
    %88 = vector.broadcast %9 : vector<2x1x8xf32> to vector<2x8x8xf32>
    %89 = arith.addf %87, %88 : vector<2x8x8xf32>
    %cst_26 = arith.constant dense<0xFF800000> : vector<2x8xf32>
    %90 = vector.multi_reduction <maximumf>, %89, %cst_26 [2] : vector<2x8x8xf32> to vector<2x8xf32>
    %91 = vector.shape_cast %90 : vector<2x8xf32> to vector<2x8x1xf32>
    %92 = vector.broadcast %91 : vector<2x8x1xf32> to vector<2x8x8xf32>
    %93 = arith.subf %89, %92 : vector<2x8x8xf32>
    %94 = math.exp %93 : vector<2x8x8xf32>
    %cst_27 = arith.constant dense<0.000000e+00> : vector<2x8xf32>
    %95 = vector.multi_reduction <add>, %94, %cst_27 [2] : vector<2x8x8xf32> to vector<2x8xf32>
    %96 = vector.shape_cast %95 : vector<2x8xf32> to vector<2x8x1xf32>
    %97 = arith.truncf %94 : vector<2x8x8xf32> to vector<2x8x8xbf16>
    "tpu.trace_start"() <{level = 10 : i32, message = "bqk,bkd->bqd"}> : () -> ()
    %cst_28 = arith.constant dense<0.000000e+00> : vector<2x8x8xf32>
    %98 = tpu.matmul %97, %84, %cst_28 {dimension_numbers = #tpu.dot_dimension_numbers<[2], [1], [1], [2], [0, 0, 0, 1, 1, 2], [0], [0]>} : vector<2x8x8xbf16>, vector<2x8x8xbf16>, vector<2x8x8xf32> -> vector<2x8x8xf32>
    "tpu.trace_stop"() : () -> ()
    %99 = tpu.reciprocal %96 {approx = true} : vector<2x8x1xf32> -> vector<2x8x1xf32>
    %100 = vector.broadcast %99 : vector<2x8x1xf32> to vector<2x8x8xf32>
    %101 = arith.mulf %98, %100 : vector<2x8x8xf32>
    %102 = tpu.concatenate %32, %55, %78, %101 in 2 : vector<2x8x8xf32>, vector<2x8x8xf32>, vector<2x8x8xf32>, vector<2x8x8xf32> -> vector<2x8x32xf32>
    %103 = vector.shape_cast %102 : vector<2x8x32xf32> to vector<16x32xf32>
    %104 = arith.truncf %103 : vector<16x32xf32> to vector<16x32xbf16>
    %c0_29 = arith.constant 0 : index
    %c0_30 = arith.constant 0 : index
    %105 = vector.load %arg5[%c0_29, %c0_30] : memref<32x128xbf16, #tpu.memory_space<vmem>>, vector<32x128xbf16>
    %cst_31 = arith.constant dense<0.000000e+00> : vector<16x128xf32>
    %106 = tpu.matmul %104, %105, %cst_31 {dimension_numbers = #tpu.dot_dimension_numbers<[1], [0], [0], [1], [0, 0, 1, 1], [], []>} : vector<16x32xbf16>, vector<32x128xbf16>, vector<16x128xf32> -> vector<16x128xf32>
    %c0_32 = arith.constant 0 : index
    %c0_33 = arith.constant 0 : index
    %107 = vector.load %arg6[%c0_32, %c0_33] : memref<1x128xf32, #tpu.memory_space<vmem>>, vector<1x128xf32>
    %108 = vector.broadcast %107 : vector<1x128xf32> to vector<16x128xf32>
    %109 = arith.addf %106, %108 : vector<16x128xf32>
    %110 = arith.addf %1, %109 : vector<16x128xf32>
    %cst_34 = arith.constant dense<0.000000e+00> : vector<16xf32>
    %111 = vector.multi_reduction <add>, %110, %cst_34 [1] : vector<16x128xf32> to vector<16xf32>
    %112 = vector.shape_cast %111 : vector<16xf32> to vector<16x1xf32>
    %cst_35 = arith.constant 3.125000e-02 : f32
    %113 = vector.broadcast %cst_35 : f32 to vector<16x1xf32>
    %114 = arith.mulf %112, %113 : vector<16x1xf32>
    %115 = arith.mulf %110, %110 : vector<16x128xf32>
    %cst_36 = arith.constant dense<0.000000e+00> : vector<16xf32>
    %116 = vector.multi_reduction <add>, %115, %cst_36 [1] : vector<16x128xf32> to vector<16xf32>
    %117 = vector.shape_cast %116 : vector<16xf32> to vector<16x1xf32>
    %cst_37 = arith.constant 3.125000e-02 : f32
    %118 = vector.broadcast %cst_37 : f32 to vector<16x1xf32>
    %119 = arith.mulf %117, %118 : vector<16x1xf32>
    %120 = arith.mulf %114, %114 : vector<16x1xf32>
    %121 = arith.subf %119, %120 : vector<16x1xf32>
    %122 = vector.broadcast %114 : vector<16x1xf32> to vector<16x128xf32>
    %123 = arith.subf %110, %122 : vector<16x128xf32>
    %cst_38 = arith.constant 9.99999974E-6 : f32
    %124 = vector.broadcast %cst_38 : f32 to vector<16x1xf32>
    %125 = arith.addf %121, %124 : vector<16x1xf32>
    %126 = math.rsqrt %125 : vector<16x1xf32>
    %127 = vector.broadcast %126 : vector<16x1xf32> to vector<16x128xf32>
    %128 = arith.mulf %123, %127 : vector<16x128xf32>
    %c0_39 = arith.constant 0 : index
    %c0_40 = arith.constant 0 : index
    %129 = vector.load %arg7[%c0_39, %c0_40] : memref<1x128xf32, #tpu.memory_space<vmem>>, vector<1x128xf32>
    %130 = vector.broadcast %129 : vector<1x128xf32> to vector<16x128xf32>
    %131 = arith.mulf %128, %130 : vector<16x128xf32>
    %c0_41 = arith.constant 0 : index
    %c0_42 = arith.constant 0 : index
    %132 = vector.load %arg8[%c0_41, %c0_42] : memref<1x128xf32, #tpu.memory_space<vmem>>, vector<1x128xf32>
    %133 = vector.broadcast %132 : vector<1x128xf32> to vector<16x128xf32>
    %134 = arith.addf %131, %133 : vector<16x128xf32>
    %cst_43 = arith.constant 0.000000e+00 : f32
    %135 = vector.broadcast %cst_43 : f32 to vector<2x1x128xf32>
    %c0_44 = arith.constant 0 : index
    %c0_45 = arith.constant 0 : index
    %c0_46 = arith.constant 0 : index
    %136 = vector.load %arg16[%c0_44, %c0_45, %c0_46] : memref<2x10x128xf32, #tpu.memory_space<vmem>>, vector<2x1x128xf32>
    tpu.vector_store %arg16[%c0_44, %c0_45, %c0_46], %135 {strides = array<i32>} : memref<2x10x128xf32, #tpu.memory_space<vmem>>, vector<2x1x128xf32>,
    %cst_47 = arith.constant 0.000000e+00 : f32
    %137 = vector.broadcast %cst_47 : f32 to vector<2x1x128xf32>
    %c0_48 = arith.constant 0 : index
    %c9 = arith.constant 9 : index
    %c0_49 = arith.constant 0 : index
    %138 = vector.load %arg16[%c0_48, %c9, %c0_49] : memref<2x10x128xf32, #tpu.memory_space<vmem>>, vector<2x1x128xf32>
    tpu.vector_store %arg16[%c0_48, %c9, %c0_49], %137 {strides = array<i32>} : memref<2x10x128xf32, #tpu.memory_space<vmem>>, vector<2x1x128xf32>,
    %139 = vector.shape_cast %134 : vector<16x128xf32> to vector<2x8x128xf32>
    %c0_50 = arith.constant 0 : index
    %c1 = arith.constant 1 : index
    %c0_51 = arith.constant 0 : index
    %140 = vector.load %arg16[%c0_50, %c1, %c0_51] : memref<2x10x128xf32, #tpu.memory_space<vmem>>, vector<2x8x128xf32>
    tpu.vector_store %arg16[%c0_50, %c1, %c0_51], %139 {strides = array<i32>} : memref<2x10x128xf32, #tpu.memory_space<vmem>>, vector<2x8x128xf32>,
    %c0_52 = arith.constant 0 : index
    %c0_53 = arith.constant 0 : index
    %141 = vector.load %arg10[%c0_52, %c0_53] : memref<1x64xf32, #tpu.memory_space<vmem>>, vector<1x64xf32>
    %142 = vector.shape_cast %141 : vector<1x64xf32> to vector<1x64xf32>
    %143 = vector.broadcast %142 : vector<1x64xf32> to vector<16x64xf32>
    %c0_54 = arith.constant 0 : index
    %c0_55 = arith.constant 0 : index
    %c0_56 = arith.constant 0 : index
    %144 = vector.load %arg16[%c0_54, %c0_55, %c0_56] : memref<2x10x128xf32, #tpu.memory_space<vmem>>, vector<2x8x128xf32>
    %145 = vector.shape_cast %144 : vector<2x8x128xf32> to vector<16x128xf32>
    %146 = arith.truncf %145 : vector<16x128xf32> to vector<16x128xbf16>
    %c0_57 = arith.constant 0 : index
    %c0_58 = arith.constant 0 : index
    %c0_59 = arith.constant 0 : index
    %147 = vector.load %arg9[%c0_57, %c0_58, %c0_59] : memref<3x128x64xbf16, #tpu.memory_space<vmem>>, vector<1x128x64xbf16>
    %148 = vector.shape_cast %147 : vector<1x128x64xbf16> to vector<128x64xbf16>
    %cst_60 = arith.constant dense<0.000000e+00> : vector<16x64xf32>
    %149 = tpu.matmul %146, %148, %cst_60 {dimension_numbers = #tpu.dot_dimension_numbers<[1], [0], [0], [1], [0, 0, 1, 1], [], []>} : vector<16x128xbf16>, vector<128x64xbf16>, vector<16x64xf32> -> vector<16x64xf32>
    %150 = arith.addf %143, %149 : vector<16x64xf32>
    %c0_61 = arith.constant 0 : index
    %c1_62 = arith.constant 1 : index
    %c0_63 = arith.constant 0 : index
    %151 = vector.load %arg16[%c0_61, %c1_62, %c0_63] : memref<2x10x128xf32, #tpu.memory_space<vmem>>, vector<2x8x128xf32>
    %152 = vector.shape_cast %151 : vector<2x8x128xf32> to vector<16x128xf32>
    %153 = arith.truncf %152 : vector<16x128xf32> to vector<16x128xbf16>
    %c1_64 = arith.constant 1 : index
    %c0_65 = arith.constant 0 : index
    %c0_66 = arith.constant 0 : index
    %154 = vector.load %arg9[%c1_64, %c0_65, %c0_66] : memref<3x128x64xbf16, #tpu.memory_space<vmem>>, vector<1x128x64xbf16>
    %155 = vector.shape_cast %154 : vector<1x128x64xbf16> to vector<128x64xbf16>
    %cst_67 = arith.constant dense<0.000000e+00> : vector<16x64xf32>
    %156 = tpu.matmul %153, %155, %cst_67 {dimension_numbers = #tpu.dot_dimension_numbers<[1], [0], [0], [1], [0, 0, 1, 1], [], []>} : vector<16x128xbf16>, vector<128x64xbf16>, vector<16x64xf32> -> vector<16x64xf32>
    %157 = arith.addf %150, %156 : vector<16x64xf32>
    %c0_68 = arith.constant 0 : index
    %c2 = arith.constant 2 : index
    %c0_69 = arith.constant 0 : index
    %158 = vector.load %arg16[%c0_68, %c2, %c0_69] : memref<2x10x128xf32, #tpu.memory_space<vmem>>, vector<2x8x128xf32>
    %159 = vector.shape_cast %158 : vector<2x8x128xf32> to vector<16x128xf32>
    %160 = arith.truncf %159 : vector<16x128xf32> to vector<16x128xbf16>
    %c2_70 = arith.constant 2 : index
    %c0_71 = arith.constant 0 : index
    %c0_72 = arith.constant 0 : index
    %161 = vector.load %arg9[%c2_70, %c0_71, %c0_72] : memref<3x128x64xbf16, #tpu.memory_space<vmem>>, vector<1x128x64xbf16>
    %162 = vector.shape_cast %161 : vector<1x128x64xbf16> to vector<128x64xbf16>
    %cst_73 = arith.constant dense<0.000000e+00> : vector<16x64xf32>
    %163 = tpu.matmul %160, %162, %cst_73 {dimension_numbers = #tpu.dot_dimension_numbers<[1], [0], [0], [1], [0, 0, 1, 1], [], []>} : vector<16x128xbf16>, vector<128x64xbf16>, vector<16x64xf32> -> vector<16x64xf32>
    %164 = arith.addf %157, %163 : vector<16x64xf32>
    %cst_74 = arith.constant 0.000000e+00 : f32
    %165 = vector.broadcast %cst_74 : f32 to vector<16x64xf32>
    %166 = arith.maximumf %164, %165 : vector<16x64xf32>
    %167 = arith.truncf %166 : vector<16x64xf32> to vector<16x64xbf16>
    %c0_75 = arith.constant 0 : index
    %c0_76 = arith.constant 0 : index
    %168 = vector.load %arg11[%c0_75, %c0_76] : memref<64x128xbf16, #tpu.memory_space<vmem>>, vector<64x128xbf16>
    %cst_77 = arith.constant dense<0.000000e+00> : vector<16x128xf32>
    %169 = tpu.matmul %167, %168, %cst_77 {dimension_numbers = #tpu.dot_dimension_numbers<[1], [0], [0], [1], [0, 0, 1, 1], [], []>} : vector<16x64xbf16>, vector<64x128xbf16>, vector<16x128xf32> -> vector<16x128xf32>
    %c0_78 = arith.constant 0 : index
    %c0_79 = arith.constant 0 : index
    %170 = vector.load %arg12[%c0_78, %c0_79] : memref<1x128xf32, #tpu.memory_space<vmem>>, vector<1x128xf32>
    %171 = vector.broadcast %170 : vector<1x128xf32> to vector<16x128xf32>
    %172 = arith.addf %169, %171 : vector<16x128xf32>
    %173 = arith.addf %134, %172 : vector<16x128xf32>
    %cst_80 = arith.constant dense<0.000000e+00> : vector<16xf32>
    %174 = vector.multi_reduction <add>, %173, %cst_80 [1] : vector<16x128xf32> to vector<16xf32>
    %175 = vector.shape_cast %174 : vector<16xf32> to vector<16x1xf32>
    %cst_81 = arith.constant 3.125000e-02 : f32
    %176 = vector.broadcast %cst_81 : f32 to vector<16x1xf32>
    %177 = arith.mulf %175, %176 : vector<16x1xf32>
    %178 = arith.mulf %173, %173 : vector<16x128xf32>
    %cst_82 = arith.constant dense<0.000000e+00> : vector<16xf32>
    %179 = vector.multi_reduction <add>, %178, %cst_82 [1] : vector<16x128xf32> to vector<16xf32>
    %180 = vector.shape_cast %179 : vector<16xf32> to vector<16x1xf32>
    %cst_83 = arith.constant 3.125000e-02 : f32
    %181 = vector.broadcast %cst_83 : f32 to vector<16x1xf32>
    %182 = arith.mulf %180, %181 : vector<16x1xf32>
    %183 = arith.mulf %177, %177 : vector<16x1xf32>
    %184 = arith.subf %182, %183 : vector<16x1xf32>
    %185 = vector.broadcast %177 : vector<16x1xf32> to vector<16x128xf32>
    %186 = arith.subf %173, %185 : vector<16x128xf32>
    %cst_84 = arith.constant 9.99999974E-6 : f32
    %187 = vector.broadcast %cst_84 : f32 to vector<16x1xf32>
    %188 = arith.addf %184, %187 : vector<16x1xf32>
    %189 = math.rsqrt %188 : vector<16x1xf32>
    %190 = vector.broadcast %189 : vector<16x1xf32> to vector<16x128xf32>
    %191 = arith.mulf %186, %190 : vector<16x128xf32>
    %c0_85 = arith.constant 0 : index
    %c0_86 = arith.constant 0 : index
    %192 = vector.load %arg13[%c0_85, %c0_86] : memref<1x128xf32, #tpu.memory_space<vmem>>, vector<1x128xf32>
    %193 = vector.broadcast %192 : vector<1x128xf32> to vector<16x128xf32>
    %194 = arith.mulf %191, %193 : vector<16x128xf32>
    %c0_87 = arith.constant 0 : index
    %c0_88 = arith.constant 0 : index
    %195 = vector.load %arg14[%c0_87, %c0_88] : memref<1x128xf32, #tpu.memory_space<vmem>>, vector<1x128xf32>
    %196 = vector.broadcast %195 : vector<1x128xf32> to vector<16x128xf32>
    %197 = arith.addf %194, %196 : vector<16x128xf32>
    %198 = vector.shape_cast %197 : vector<16x128xf32> to vector<2x8x128xf32>
    %c0_89 = arith.constant 0 : index
    %c0_90 = arith.constant 0 : index
    %c0_91 = arith.constant 0 : index
    %199 = vector.load %arg15[%c0_89, %c0_90, %c0_91] : memref<2x8x128xf32, #tpu.memory_space<vmem>>, vector<2x8x128xf32>
    tpu.vector_store %arg15[%c0_89, %c0_90, %c0_91], %198 {strides = array<i32>} : memref<2x8x128xf32, #tpu.memory_space<vmem>>, vector<2x8x128xf32>,
    return
  }
  func.func @transform_0(%arg0: i32) -> (i32, i32, i32) {
    %c0_i32 = arith.constant 0 : i32
    %c0_i32_0 = arith.constant 0 : i32
    %c0_i32_1 = arith.constant 0 : i32
    return %arg0, %c0_i32, %c0_i32_0 : i32, i32, i32
  }
  func.func @transform_1(%arg0: i32) -> (i32, i32, i32) {
    %c0_i32 = arith.constant 0 : i32
    %c0_i32_0 = arith.constant 0 : i32
    %c0_i32_1 = arith.constant 0 : i32
    return %arg0, %c0_i32, %c0_i32_0 : i32, i32, i32
  }
  func.func @transform_2(%arg0: i32) -> (i32, i32) {
    %c0_i32 = arith.constant 0 : i32
    %c0_i32_0 = arith.constant 0 : i32
    %c0_i32_1 = arith.constant 0 : i32
    return %c0_i32, %c0_i32_0 : i32, i32
  }
  func.func @transform_3(%arg0: i32) -> (i32, i32) {
    %c0_i32 = arith.constant 0 : i32
    %c0_i32_0 = arith.constant 0 : i32
    %c0_i32_1 = arith.constant 0 : i32
    return %c0_i32, %c0_i32_0 : i32, i32
  }
  func.func @transform_4(%arg0: i32) -> (i32, i32) {
    %c0_i32 = arith.constant 0 : i32
    %c0_i32_0 = arith.constant 0 : i32
    %c0_i32_1 = arith.constant 0 : i32
    return %c0_i32, %c0_i32_0 : i32, i32
  }
  func.func @transform_5(%arg0: i32) -> (i32, i32) {
    %c0_i32 = arith.constant 0 : i32
    %c0_i32_0 = arith.constant 0 : i32
    %c0_i32_1 = arith.constant 0 : i32
    return %c0_i32, %c0_i32_0 : i32, i32
  }
  func.func @transform_6(%arg0: i32) -> (i32, i32) {
    %c0_i32 = arith.constant 0 : i32
    %c0_i32_0 = arith.constant 0 : i32
    %c0_i32_1 = arith.constant 0 : i32
    return %c0_i32, %c0_i32_0 : i32, i32
  }
  func.func @transform_7(%arg0: i32) -> (i32, i32) {
    %c0_i32 = arith.constant 0 : i32
    %c0_i32_0 = arith.constant 0 : i32
    %c0_i32_1 = arith.constant 0 : i32
    return %c0_i32, %c0_i32_0 : i32, i32
  }
  func.func @transform_8(%arg0: i32) -> (i32, i32, i32) {
    %c0_i32 = arith.constant 0 : i32
    %c0_i32_0 = arith.constant 0 : i32
    %c0_i32_1 = arith.constant 0 : i32
    %c0_i32_2 = arith.constant 0 : i32
    return %c0_i32, %c0_i32_0, %c0_i32_1 : i32, i32, i32
  }
  func.func @transform_9(%arg0: i32) -> (i32, i32) {
    %c0_i32 = arith.constant 0 : i32
    %c0_i32_0 = arith.constant 0 : i32
    %c0_i32_1 = arith.constant 0 : i32
    return %c0_i32, %c0_i32_0 : i32, i32
  }
  func.func @transform_10(%arg0: i32) -> (i32, i32) {
    %c0_i32 = arith.constant 0 : i32
    %c0_i32_0 = arith.constant 0 : i32
    %c0_i32_1 = arith.constant 0 : i32
    return %c0_i32, %c0_i32_0 : i32, i32
  }
  func.func @transform_11(%arg0: i32) -> (i32, i32) {
    %c0_i32 = arith.constant 0 : i32
    %c0_i32_0 = arith.constant 0 : i32
    %c0_i32_1 = arith.constant 0 : i32
    return %c0_i32, %c0_i32_0 : i32, i32
  }
  func.func @transform_12(%arg0: i32) -> (i32, i32) {
    %c0_i32 = arith.constant 0 : i32
    %c0_i32_0 = arith.constant 0 : i32
    %c0_i32_1 = arith.constant 0 : i32
    return %c0_i32, %c0_i32_0 : i32, i32
  }
  func.func @transform_13(%arg0: i32) -> (i32, i32) {
    %c0_i32 = arith.constant 0 : i32
    %c0_i32_0 = arith.constant 0 : i32
    %c0_i32_1 = arith.constant 0 : i32
    return %c0_i32, %c0_i32_0 : i32, i32
  }
  func.func @transform_14(%arg0: i32) -> (i32, i32, i32) {
    %c0_i32 = arith.constant 0 : i32
    %c0_i32_0 = arith.constant 0 : i32
    %c0_i32_1 = arith.constant 0 : i32
    return %arg0, %c0_i32, %c0_i32_0 : i32, i32, i32
  }
}

module attributes {stable_mosaic.version = 11 : i64} {
  func.func @encoder_kernel(%arg0: i32, %arg1: memref<2x8x128xf32, #tpu.memory_space<vmem>>, %arg2: memref<2x1x8xf32, #tpu.memory_space<vmem>>, %arg3: memref<128x96xbf16, #tpu.memory_space<vmem>>, %arg4: memref<1x96xf32, #tpu.memory_space<vmem>>, %arg5: memref<32x128xbf16, #tpu.memory_space<vmem>>, %arg6: memref<1x128xf32, #tpu.memory_space<vmem>>, %arg7: memref<1x128xf32, #tpu.memory_space<vmem>>, %arg8: memref<1x128xf32, #tpu.memory_space<vmem>>, %arg9: memref<3x128x64xbf16, #tpu.memory_space<vmem>>, %arg10: memref<1x64xf32, #tpu.memory_space<vmem>>, %arg11: memref<64x128xbf16, #tpu.memory_space<vmem>>, %arg12: memref<1x128xf32, #tpu.memory_space<vmem>>, %arg13: memref<1x128xf32, #tpu.memory_space<vmem>>, %arg14: memref<1x128xf32, #tpu.memory_space<vmem>>, %arg15: memref<2x8x128xf32, #tpu.memory_space<vmem>>, %arg16: memref<2x10x128xf32, #tpu.memory_space<vmem>>) attributes {dimension_semantics = [#tpu.dimension_semantics<parallel>], iteration_bounds = array<i64: 2>, scalar_prefetch = 0 : i64, scratch_operands = 1 : i64, tpu.core_type = #tpu.core_type<tc>, window_params = [{transform_indices = @transform_0, window_bounds = array<i64: 2, 8, 128>}, {transform_indices = @transform_1, window_bounds = array<i64: 2, 1, 8>}, {pipeline_mode = #tpu.pipeline_mode<synchronous>, transform_indices = @transform_2, window_bounds = array<i64: 128, 96>}, {pipeline_mode = #tpu.pipeline_mode<synchronous>, transform_indices = @transform_3, window_bounds = array<i64: 1, 96>}, {pipeline_mode = #tpu.pipeline_mode<synchronous>, transform_indices = @transform_4, window_bounds = array<i64: 32, 128>}, {pipeline_mode = #tpu.pipeline_mode<synchronous>, transform_indices = @transform_5, window_bounds = array<i64: 1, 128>}, {pipeline_mode = #tpu.pipeline_mode<synchronous>, transform_indices = @transform_6, window_bounds = array<i64: 1, 128>}, {pipeline_mode = #tpu.pipeline_mode<synchronous>, transform_indices = @transform_7, window_bounds = array<i64: 1, 128>}, {pipeline_mode = #tpu.pipeline_mode<synchronous>, transform_indices = @transform_8, window_bounds = array<i64: 3, 128, 64>}, {pipeline_mode = #tpu.pipeline_mode<synchronous>, transform_indices = @transform_9, window_bounds = array<i64: 1, 64>}, {pipeline_mode = #tpu.pipeline_mode<synchronous>, transform_indices = @transform_10, window_bounds = array<i64: 64, 128>}, {pipeline_mode = #tpu.pipeline_mode<synchronous>, transform_indices = @transform_11, window_bounds = array<i64: 1, 128>}, {pipeline_mode = #tpu.pipeline_mode<synchronous>, transform_indices = @transform_12, window_bounds = array<i64: 1, 128>}, {pipeline_mode = #tpu.pipeline_mode<synchronous>, transform_indices = @transform_13, window_bounds = array<i64: 1, 128>}, {transform_indices = @transform_14, window_bounds = array<i64: 2, 8, 128>}]} {
    %c0 = arith.constant 0 : index
    %c0_0 = arith.constant 0 : index
    %c0_1 = arith.constant 0 : index
    %0 = vector.load %arg1[%c0, %c0_0, %c0_1] : memref<2x8x128xf32, #tpu.memory_space<vmem>>, vector<2x8x128xf32>
    %1 = vector.shape_cast %0 : vector<2x8x128xf32> to vector<16x128xf32>
    %2 = arith.truncf %1 : vector<16x128xf32> to vector<16x128xbf16>
    %c0_2 = arith.constant 0 : index
    %c0_3 = arith.constant 0 : index
    %3 = vector.load %arg3[%c0_2, %c0_3] : memref<128x96xbf16, #tpu.memory_space<vmem>>, vector<128x96xbf16>
    %cst = arith.constant dense<0.000000e+00> : vector<16x96xf32>
    %4 = tpu.matmul %2, %3, %cst {dimension_numbers = #tpu.dot_dimension_numbers<[1], [0], [0], [1], [0, 0, 1, 1], [], []>} : vector<16x128xbf16>, vector<128x96xbf16>, vector<16x96xf32> -> vector<16x96xf32>
    %c0_4 = arith.constant 0 : index
    %c0_5 = arith.constant 0 : index
    %5 = vector.load %arg4[%c0_4, %c0_5] : memref<1x96xf32, #tpu.memory_space<vmem>>, vector<1x96xf32>
    %6 = vector.broadcast %5 : vector<1x96xf32> to vector<16x96xf32>
    %7 = arith.addf %4, %6 : vector<16x96xf32>
    %8 = vector.shape_cast %7 : vector<16x96xf32> to vector<2x8x96xf32>
    %c0_6 = arith.constant 0 : index
    %c0_7 = arith.constant 0 : index
    %c0_8 = arith.constant 0 : index
    %9 = vector.load %arg2[%c0_6, %c0_7, %c0_8] : memref<2x1x8xf32, #tpu.memory_space<vmem>>, vector<2x1x8xf32>
    %10 = vector.extract_strided_slice %8 {offsets = [0, 0, 0], sizes = [2, 8, 8], strides = [1, 1, 1]} : vector<2x8x96xf32> to vector<2x8x8xf32>
    %11 = arith.truncf %10 : vector<2x8x8xf32> to vector<2x8x8xbf16>
    %12 = vector.extract_strided_slice %8 {offsets = [0, 0, 32], sizes = [2, 8, 8], strides = [1, 1, 1]} : vector<2x8x96xf32> to vector<2x8x8xf32>
    %13 = arith.truncf %12 : vector<2x8x8xf32> to vector<2x8x8xbf16>
    %14 = vector.extract_strided_slice %8 {offsets = [0, 0, 64], sizes = [2, 8, 8], strides = [1, 1, 1]} : vector<2x8x96xf32> to vector<2x8x8xf32>
    %15 = arith.truncf %14 : vector<2x8x8xf32> to vector<2x8x8xbf16>
    "tpu.trace_start"() <{level = 10 : i32, message = "bqd,bkd->bqk"}> : () -> ()
    %cst_9 = arith.constant dense<0.000000e+00> : vector<2x8x8xf32>
    %16 = tpu.matmul %11, %13, %cst_9 {dimension_numbers = #tpu.dot_dimension_numbers<[2], [2], [1], [1], [0, 0, 0, 1, 1, 1], [0], [0]>} : vector<2x8x8xbf16>, vector<2x8x8xbf16>, vector<2x8x8xf32> -> vector<2x8x8xf32>
    "tpu.trace_stop"() : () -> ()
    %cst_10 = arith.constant 0.353553385 : f32
    %17 = vector.broadcast %cst_10 : f32 to vector<2x8x8xf32>
    %18 = arith.mulf %16, %17 : vector<2x8x8xf32>
    %19 = vector.broadcast %9 : vector<2x1x8xf32> to vector<2x8x8xf32>
    %20 = arith.addf %18, %19 : vector<2x8x8xf32>
    %cst_11 = arith.constant dense<0xFF800000> : vector<2x8xf32>
    %21 = vector.multi_reduction <maximumf>, %20, %cst_11 [2] : vector<2x8x8xf32> to vector<2x8xf32>
    %22 = vector.shape_cast %21 : vector<2x8xf32> to vector<2x8x1xf32>
    %23 = vector.broadcast %22 : vector<2x8x1xf32> to vector<2x8x8xf32>
    %24 = arith.subf %20, %23 : vector<2x8x8xf32>
    %25 = math.exp %24 : vector<2x8x8xf32>
    %cst_12 = arith.constant dense<0.000000e+00> : vector<2x8xf32>
    %26 = vector.multi_reduction <add>, %25, %cst_12 [2] : vector<2x8x8xf32> to vector<2x8xf32>
    %27 = vector.shape_cast %26 : vector<2x8xf32> to vector<2x8x1xf32>
    %28 = arith.truncf %25 : vector<2x8x8xf32> to vector<2x8x8xbf16>
    "tpu.trace_start"() <{level = 10 : i32, message = "bqk,bkd->bqd"}> : () -> ()
    %cst_13 = arith.constant dense<0.000000e+00> : vector<2x8x8xf32>
    %29 = tpu.matmul %28, %15, %cst_13 {dimension_numbers = #tpu.dot_dimension_numbers<[2], [1], [1], [2], [0, 0, 0, 1, 1, 2], [0], [0]>} : vector<2x8x8xbf16>, vector<2x8x8xbf16>, vector<2x8x8xf32> -> vector<2x8x8xf32>
    "tpu.trace_stop"() : () -> ()
    %30 = tpu.reciprocal %27 {approx = true} : vector<2x8x1xf32> -> vector<2x8x1xf32>
    %31 = vector.broadcast %30 : vector<2x8x1xf32> to vector<2x8x8xf32>
    %32 = arith.mulf %29, %31 : vector<2x8x8xf32>
    %33 = vector.extract_strided_slice %8 {offsets = [0, 0, 8], sizes = [2, 8, 8], strides = [1, 1, 1]} : vector<2x8x96xf32> to vector<2x8x8xf32>
    %34 = arith.truncf %33 : vector<2x8x8xf32> to vector<2x8x8xbf16>
    %35 = vector.extract_strided_slice %8 {offsets = [0, 0, 40], sizes = [2, 8, 8], strides = [1, 1, 1]} : vector<2x8x96xf32> to vector<2x8x8xf32>
    %36 = arith.truncf %35 : vector<2x8x8xf32> to vector<2x8x8xbf16>
    %37 = vector.extract_strided_slice %8 {offsets = [0, 0, 72], sizes = [2, 8, 8], strides = [1, 1, 1]} : vector<2x8x96xf32> to vector<2x8x8xf32>
    %38 = arith.truncf %37 : vector<2x8x8xf32> to vector<2x8x8xbf16>
    "tpu.trace_start"() <{level = 10 : i32, message = "bqd,bkd->bqk"}> : () -> ()
    %cst_14 = arith.constant dense<0.000000e+00> : vector<2x8x8xf32>
    %39 = tpu.matmul %34, %36, %cst_14 {dimension_numbers = #tpu.dot_dimension_numbers<[2], [2], [1], [1], [0, 0, 0, 1, 1, 1], [0], [0]>} : vector<2x8x8xbf16>, vector<2x8x8xbf16>, vector<2x8x8xf32> -> vector<2x8x8xf32>
    "tpu.trace_stop"() : () -> ()
    %cst_15 = arith.constant 0.353553385 : f32
    %40 = vector.broadcast %cst_15 : f32 to vector<2x8x8xf32>
    %41 = arith.mulf %39, %40 : vector<2x8x8xf32>
    %42 = vector.broadcast %9 : vector<2x1x8xf32> to vector<2x8x8xf32>
    %43 = arith.addf %41, %42 : vector<2x8x8xf32>
    %cst_16 = arith.constant dense<0xFF800000> : vector<2x8xf32>
    %44 = vector.multi_reduction <maximumf>, %43, %cst_16 [2] : vector<2x8x8xf32> to vector<2x8xf32>
    %45 = vector.shape_cast %44 : vector<2x8xf32> to vector<2x8x1xf32>
    %46 = vector.broadcast %45 : vector<2x8x1xf32> to vector<2x8x8xf32>
    %47 = arith.subf %43, %46 : vector<2x8x8xf32>
    %48 = math.exp %47 : vector<2x8x8xf32>
    %cst_17 = arith.constant dense<0.000000e+00> : vector<2x8xf32>
    %49 = vector.multi_reduction <add>, %48, %cst_17 [2] : vector<2x8x8xf32> to vector<2x8xf32>
    %50 = vector.shape_cast %49 : vector<2x8xf32> to vector<2x8x1xf32>
    %51 = arith.truncf %48 : vector<2x8x8xf32> to vector<2x8x8xbf16>
    "tpu.trace_start"() <{level = 10 : i32, message = "bqk,bkd->bqd"}> : () -> ()
    %cst_18 = arith.constant dense<0.000000e+00> : vector<2x8x8xf32>
    %52 = tpu.matmul %51, %38, %cst_18 {dimension_numbers = #tpu.dot_dimension_numbers<[2], [1], [1], [2], [0, 0, 0, 1, 1, 2], [0], [0]>} : vector<2x8x8xbf16>, vector<2x8x8xbf16>, vector<2x8x8xf32> -> vector<2x8x8xf32>
    "tpu.trace_stop"() : () -> ()
    %53 = tpu.reciprocal %50 {approx = true} : vector<2x8x1xf32> -> vector<2x8x1xf32>
    %54 = vector.broadcast %53 : vector<2x8x1xf32> to vector<2x8x8xf32>
    %55 = arith.mulf %52, %54 : vector<2x8x8xf32>
    %56 = vector.extract_strided_slice %8 {offsets = [0, 0, 16], sizes = [2, 8, 8], strides = [1, 1, 1]} : vector<2x8x96xf32> to vector<2x8x8xf32>
    %57 = arith.truncf %56 : vector<2x8x8xf32> to vector<2x8x8xbf16>
    %58 = vector.extract_strided_slice %8 {offsets = [0, 0, 48], sizes = [2, 8, 8], strides = [1, 1, 1]} : vector<2x8x96xf32> to vector<2x8x8xf32>
    %59 = arith.truncf %58 : vector<2x8x8xf32> to vector<2x8x8xbf16>
    %60 = vector.extract_strided_slice %8 {offsets = [0, 0, 80], sizes = [2, 8, 8], strides = [1, 1, 1]} : vector<2x8x96xf32> to vector<2x8x8xf32>
    %61 = arith.truncf %60 : vector<2x8x8xf32> to vector<2x8x8xbf16>
    "tpu.trace_start"() <{level = 10 : i32, message = "bqd,bkd->bqk"}> : () -> ()
    %cst_19 = arith.constant dense<0.000000e+00> : vector<2x8x8xf32>
    %62 = tpu.matmul %57, %59, %cst_19 {dimension_numbers = #tpu.dot_dimension_numbers<[2], [2], [1], [1], [0, 0, 0, 1, 1, 1], [0], [0]>} : vector<2x8x8xbf16>, vector<2x8x8xbf16>, vector<2x8x8xf32> -> vector<2x8x8xf32>
    "tpu.trace_stop"() : () -> ()
    %cst_20 = arith.constant 0.353553385 : f32
    %63 = vector.broadcast %cst_20 : f32 to vector<2x8x8xf32>
    %64 = arith.mulf %62, %63 : vector<2x8x8xf32>
    %65 = vector.broadcast %9 : vector<2x1x8xf32> to vector<2x8x8xf32>
    %66 = arith.addf %64, %65 : vector<2x8x8xf32>
    %cst_21 = arith.constant dense<0xFF800000> : vector<2x8xf32>
    %67 = vector.multi_reduction <maximumf>, %66, %cst_21 [2] : vector<2x8x8xf32> to vector<2x8xf32>
    %68 = vector.shape_cast %67 : vector<2x8xf32> to vector<2x8x1xf32>
    %69 = vector.broadcast %68 : vector<2x8x1xf32> to vector<2x8x8xf32>
    %70 = arith.subf %66, %69 : vector<2x8x8xf32>
    %71 = math.exp %70 : vector<2x8x8xf32>
    %cst_22 = arith.constant dense<0.000000e+00> : vector<2x8xf32>
    %72 = vector.multi_reduction <add>, %71, %cst_22 [2] : vector<2x8x8xf32> to vector<2x8xf32>
    %73 = vector.shape_cast %72 : vector<2x8xf32> to vector<2x8x1xf32>
    %74 = arith.truncf %71 : vector<2x8x8xf32> to vector<2x8x8xbf16>
    "tpu.trace_start"() <{level = 10 : i32, message = "bqk,bkd->bqd"}> : () -> ()
    %cst_23 = arith.constant dense<0.000000e+00> : vector<2x8x8xf32>
    %75 = tpu.matmul %74, %61, %cst_23 {dimension_numbers = #tpu.dot_dimension_numbers<[2], [1], [1], [2], [0, 0, 0, 1, 1, 2], [0], [0]>} : vector<2x8x8xbf16>, vector<2x8x8xbf16>, vector<2x8x8xf32> -> vector<2x8x8xf32>
    "tpu.trace_stop"() : () -> ()
    %76 = tpu.reciprocal %73 {approx = true} : vector<2x8x1xf32> -> vector<2x8x1xf32>
    %77 = vector.broadcast %76 : vector<2x8x1xf32> to vector<2x8x8xf32>
    %78 = arith.mulf %75, %77 : vector<2x8x8xf32>
    %79 = vector.extract_strided_slice %8 {offsets = [0, 0, 24], sizes = [2, 8, 8], strides = [1, 1, 1]} : vector<2x8x96xf32> to vector<2x8x8xf32>
    %80 = arith.truncf %79 : vector<2x8x8xf32> to vector<2x8x8xbf16>
    %81 = vector.extract_strided_slice %8 {offsets = [0, 0, 56], sizes = [2, 8, 8], strides = [1, 1, 1]} : vector<2x8x96xf32> to vector<2x8x8xf32>
    %82 = arith.truncf %81 : vector<2x8x8xf32> to vector<2x8x8xbf16>
    %83 = vector.extract_strided_slice %8 {offsets = [0, 0, 88], sizes = [2, 8, 8], strides = [1, 1, 1]} : vector<2x8x96xf32> to vector<2x8x8xf32>
    %84 = arith.truncf %83 : vector<2x8x8xf32> to vector<2x8x8xbf16>
    "tpu.trace_start"() <{level = 10 : i32, message = "bqd,bkd->bqk"}> : () -> ()
    %cst_24 = arith.constant dense<0.000000e+00> : vector<2x8x8xf32>
    %85 = tpu.matmul %80, %82, %cst_24 {dimension_numbers = #tpu.dot_dimension_numbers<[2], [2], [1], [1], [0, 0, 0, 1, 1, 1], [0], [0]>} : vector<2x8x8xbf16>, vector<2x8x8xbf16>, vector<2x8x8xf32> -> vector<2x8x8xf32>
    "tpu.trace_stop"() : () -> ()
    %cst_25 = arith.constant 0.353553385 : f32
    %86 = vector.broadcast %cst_25 : f32 to vector<2x8x8xf32>
    %87 = arith.mulf %85, %86 : vector<2x8x8xf32>
    %88 = vector.broadcast %9 : vector<2x1x8xf32> to vector<2x8x8xf32>
    %89 = arith.addf %87, %88 : vector<2x8x8xf32>
    %cst_26 = arith.constant dense<0xFF800000> : vector<2x8xf32>
    %90 = vector.multi_reduction <maximumf>, %89, %cst_26 [2] : vector<2x8x8xf32> to vector<2x8xf32>
    %91 = vector.shape_cast %90 : vector<2x8xf32> to vector<2x8x1xf32>
    %92 = vector.broadcast %91 : vector<2x8x1xf32> to vector<2x8x8xf32>
    %93 = arith.subf %89, %92 : vector<2x8x8xf32>
    %94 = math.exp %93 : vector<2x8x8xf32>
    %cst_27 = arith.constant dense<0.000000e+00> : vector<2x8xf32>
    %95 = vector.multi_reduction <add>, %94, %cst_27 [2] : vector<2x8x8xf32> to vector<2x8xf32>
    %96 = vector.shape_cast %95 : vector<2x8xf32> to vector<2x8x1xf32>
    %97 = arith.truncf %94 : vector<2x8x8xf32> to vector<2x8x8xbf16>
    "tpu.trace_start"() <{level = 10 : i32, message = "bqk,bkd->bqd"}> : () -> ()
    %cst_28 = arith.constant dense<0.000000e+00> : vector<2x8x8xf32>
    %98 = tpu.matmul %97, %84, %cst_28 {dimension_numbers = #tpu.dot_dimension_numbers<[2], [1], [1], [2], [0, 0, 0, 1, 1, 2], [0], [0]>} : vector<2x8x8xbf16>, vector<2x8x8xbf16>, vector<2x8x8xf32> -> vector<2x8x8xf32>
    "tpu.trace_stop"() : () -> ()
    %99 = tpu.reciprocal %96 {approx = true} : vector<2x8x1xf32> -> vector<2x8x1xf32>
    %100 = vector.broadcast %99 : vector<2x8x1xf32> to vector<2x8x8xf32>
    %101 = arith.mulf %98, %100 : vector<2x8x8xf32>
    %102 = tpu.concatenate %32, %55, %78, %101 in 2 : vector<2x8x8xf32>, vector<2x8x8xf32>, vector<2x8x8xf32>, vector<2x8x8xf32> -> vector<2x8x32xf32>
    %103 = vector.shape_cast %102 : vector<2x8x32xf32> to vector<16x32xf32>
    %104 = arith.truncf %103 : vector<16x32xf32> to vector<16x32xbf16>
    %c0_29 = arith.constant 0 : index
    %c0_30 = arith.constant 0 : index
    %105 = vector.load %arg5[%c0_29, %c0_30] : memref<32x128xbf16, #tpu.memory_space<vmem>>, vector<32x128xbf16>
    %cst_31 = arith.constant dense<0.000000e+00> : vector<16x128xf32>
    %106 = tpu.matmul %104, %105, %cst_31 {dimension_numbers = #tpu.dot_dimension_numbers<[1], [0], [0], [1], [0, 0, 1, 1], [], []>} : vector<16x32xbf16>, vector<32x128xbf16>, vector<16x128xf32> -> vector<16x128xf32>
    %c0_32 = arith.constant 0 : index
    %c0_33 = arith.constant 0 : index
    %107 = vector.load %arg6[%c0_32, %c0_33] : memref<1x128xf32, #tpu.memory_space<vmem>>, vector<1x128xf32>
    %108 = vector.broadcast %107 : vector<1x128xf32> to vector<16x128xf32>
    %109 = arith.addf %106, %108 : vector<16x128xf32>
    %110 = arith.addf %1, %109 : vector<16x128xf32>
    %cst_34 = arith.constant dense<0.000000e+00> : vector<16xf32>
    %111 = vector.multi_reduction <add>, %110, %cst_34 [1] : vector<16x128xf32> to vector<16xf32>
    %112 = vector.shape_cast %111 : vector<16xf32> to vector<16x1xf32>
    %cst_35 = arith.constant 3.125000e-02 : f32
    %113 = vector.broadcast %cst_35 : f32 to vector<16x1xf32>
    %114 = arith.mulf %112, %113 : vector<16x1xf32>
    %115 = arith.mulf %110, %110 : vector<16x128xf32>
    %cst_36 = arith.constant dense<0.000000e+00> : vector<16xf32>
    %116 = vector.multi_reduction <add>, %115, %cst_36 [1] : vector<16x128xf32> to vector<16xf32>
    %117 = vector.shape_cast %116 : vector<16xf32> to vector<16x1xf32>
    %cst_37 = arith.constant 3.125000e-02 : f32
    %118 = vector.broadcast %cst_37 : f32 to vector<16x1xf32>
    %119 = arith.mulf %117, %118 : vector<16x1xf32>
    %120 = arith.mulf %114, %114 : vector<16x1xf32>
    %121 = arith.subf %119, %120 : vector<16x1xf32>
    %122 = vector.broadcast %114 : vector<16x1xf32> to vector<16x128xf32>
    %123 = arith.subf %110, %122 : vector<16x128xf32>
    %cst_38 = arith.constant 9.99999974E-6 : f32
    %124 = vector.broadcast %cst_38 : f32 to vector<16x1xf32>
    %125 = arith.addf %121, %124 : vector<16x1xf32>
    %126 = math.rsqrt %125 : vector<16x1xf32>
    %127 = vector.broadcast %126 : vector<16x1xf32> to vector<16x128xf32>
    %128 = arith.mulf %123, %127 : vector<16x128xf32>
    %c0_39 = arith.constant 0 : index
    %c0_40 = arith.constant 0 : index
    %129 = vector.load %arg7[%c0_39, %c0_40] : memref<1x128xf32, #tpu.memory_space<vmem>>, vector<1x128xf32>
    %130 = vector.broadcast %129 : vector<1x128xf32> to vector<16x128xf32>
    %131 = arith.mulf %128, %130 : vector<16x128xf32>
    %c0_41 = arith.constant 0 : index
    %c0_42 = arith.constant 0 : index
    %132 = vector.load %arg8[%c0_41, %c0_42] : memref<1x128xf32, #tpu.memory_space<vmem>>, vector<1x128xf32>
    %133 = vector.broadcast %132 : vector<1x128xf32> to vector<16x128xf32>
    %134 = arith.addf %131, %133 : vector<16x128xf32>
    %cst_43 = arith.constant 0.000000e+00 : f32
    %135 = vector.broadcast %cst_43 : f32 to vector<2x1x128xf32>
    %c0_44 = arith.constant 0 : index
    %c0_45 = arith.constant 0 : index
    %c0_46 = arith.constant 0 : index
    %136 = vector.load %arg16[%c0_44, %c0_45, %c0_46] : memref<2x10x128xf32, #tpu.memory_space<vmem>>, vector<2x1x128xf32>
    tpu.vector_store %arg16[%c0_44, %c0_45, %c0_46], %135 {strides = array<i32>} : memref<2x10x128xf32, #tpu.memory_space<vmem>>, vector<2x1x128xf32>,
    %cst_47 = arith.constant 0.000000e+00 : f32
    %137 = vector.broadcast %cst_47 : f32 to vector<2x1x128xf32>
    %c0_48 = arith.constant 0 : index
    %c9 = arith.constant 9 : index
    %c0_49 = arith.constant 0 : index
    %138 = vector.load %arg16[%c0_48, %c9, %c0_49] : memref<2x10x128xf32, #tpu.memory_space<vmem>>, vector<2x1x128xf32>
    tpu.vector_store %arg16[%c0_48, %c9, %c0_49], %137 {strides = array<i32>} : memref<2x10x128xf32, #tpu.memory_space<vmem>>, vector<2x1x128xf32>,
    %139 = vector.shape_cast %134 : vector<16x128xf32> to vector<2x8x128xf32>
    %c0_50 = arith.constant 0 : index
    %c1 = arith.constant 1 : index
    %c0_51 = arith.constant 0 : index
    %140 = vector.load %arg16[%c0_50, %c1, %c0_51] : memref<2x10x128xf32, #tpu.memory_space<vmem>>, vector<2x8x128xf32>
    tpu.vector_store %arg16[%c0_50, %c1, %c0_51], %139 {strides = array<i32>} : memref<2x10x128xf32, #tpu.memory_space<vmem>>, vector<2x8x128xf32>,
    %c0_52 = arith.constant 0 : index
    %c0_53 = arith.constant 0 : index
    %141 = vector.load %arg10[%c0_52, %c0_53] : memref<1x64xf32, #tpu.memory_space<vmem>>, vector<1x64xf32>
    %142 = vector.shape_cast %141 : vector<1x64xf32> to vector<1x64xf32>
    %143 = vector.broadcast %142 : vector<1x64xf32> to vector<16x64xf32>
    %c0_54 = arith.constant 0 : index
    %c0_55 = arith.constant 0 : index
    %c0_56 = arith.constant 0 : index
    %144 = vector.load %arg16[%c0_54, %c0_55, %c0_56] : memref<2x10x128xf32, #tpu.memory_space<vmem>>, vector<2x8x128xf32>
    %145 = vector.shape_cast %144 : vector<2x8x128xf32> to vector<16x128xf32>
    %146 = arith.truncf %145 : vector<16x128xf32> to vector<16x128xbf16>
    %c0_57 = arith.constant 0 : index
    %c0_58 = arith.constant 0 : index
    %c0_59 = arith.constant 0 : index
    %147 = vector.load %arg9[%c0_57, %c0_58, %c0_59] : memref<3x128x64xbf16, #tpu.memory_space<vmem>>, vector<1x128x64xbf16>
    %148 = vector.shape_cast %147 : vector<1x128x64xbf16> to vector<128x64xbf16>
    %cst_60 = arith.constant dense<0.000000e+00> : vector<16x64xf32>
    %149 = tpu.matmul %146, %148, %cst_60 {dimension_numbers = #tpu.dot_dimension_numbers<[1], [0], [0], [1], [0, 0, 1, 1], [], []>} : vector<16x128xbf16>, vector<128x64xbf16>, vector<16x64xf32> -> vector<16x64xf32>
    %150 = arith.addf %143, %149 : vector<16x64xf32>
    %c0_61 = arith.constant 0 : index
    %c1_62 = arith.constant 1 : index
    %c0_63 = arith.constant 0 : index
    %151 = vector.load %arg16[%c0_61, %c1_62, %c0_63] : memref<2x10x128xf32, #tpu.memory_space<vmem>>, vector<2x8x128xf32>
    %152 = vector.shape_cast %151 : vector<2x8x128xf32> to vector<16x128xf32>
    %153 = arith.truncf %152 : vector<16x128xf32> to vector<16x128xbf16>
    %c1_64 = arith.constant 1 : index
    %c0_65 = arith.constant 0 : index
    %c0_66 = arith.constant 0 : index
    %154 = vector.load %arg9[%c1_64, %c0_65, %c0_66] : memref<3x128x64xbf16, #tpu.memory_space<vmem>>, vector<1x128x64xbf16>
    %155 = vector.shape_cast %154 : vector<1x128x64xbf16> to vector<128x64xbf16>
    %cst_67 = arith.constant dense<0.000000e+00> : vector<16x64xf32>
    %156 = tpu.matmul %153, %155, %cst_67 {dimension_numbers = #tpu.dot_dimension_numbers<[1], [0], [0], [1], [0, 0, 1, 1], [], []>} : vector<16x128xbf16>, vector<128x64xbf16>, vector<16x64xf32> -> vector<16x64xf32>
    %157 = arith.addf %150, %156 : vector<16x64xf32>
    %c0_68 = arith.constant 0 : index
    %c2 = arith.constant 2 : index
    %c0_69 = arith.constant 0 : index
    %158 = vector.load %arg16[%c0_68, %c2, %c0_69] : memref<2x10x128xf32, #tpu.memory_space<vmem>>, vector<2x8x128xf32>
    %159 = vector.shape_cast %158 : vector<2x8x128xf32> to vector<16x128xf32>
    %160 = arith.truncf %159 : vector<16x128xf32> to vector<16x128xbf16>
    %c2_70 = arith.constant 2 : index
    %c0_71 = arith.constant 0 : index
    %c0_72 = arith.constant 0 : index
    %161 = vector.load %arg9[%c2_70, %c0_71, %c0_72] : memref<3x128x64xbf16, #tpu.memory_space<vmem>>, vector<1x128x64xbf16>
    %162 = vector.shape_cast %161 : vector<1x128x64xbf16> to vector<128x64xbf16>
    %cst_73 = arith.constant dense<0.000000e+00> : vector<16x64xf32>
    %163 = tpu.matmul %160, %162, %cst_73 {dimension_numbers = #tpu.dot_dimension_numbers<[1], [0], [0], [1], [0, 0, 1, 1], [], []>} : vector<16x128xbf16>, vector<128x64xbf16>, vector<16x64xf32> -> vector<16x64xf32>
    %164 = arith.addf %157, %163 : vector<16x64xf32>
    %cst_74 = arith.constant 0.000000e+00 : f32
    %165 = vector.broadcast %cst_74 : f32 to vector<16x64xf32>
    %166 = arith.maximumf %164, %165 : vector<16x64xf32>
    %167 = arith.truncf %166 : vector<16x64xf32> to vector<16x64xbf16>
    %c0_75 = arith.constant 0 : index
    %c0_76 = arith.constant 0 : index
    %168 = vector.load %arg11[%c0_75, %c0_76] : memref<64x128xbf16, #tpu.memory_space<vmem>>, vector<64x128xbf16>
    %cst_77 = arith.constant dense<0.000000e+00> : vector<16x128xf32>
    %169 = tpu.matmul %167, %168, %cst_77 {dimension_numbers = #tpu.dot_dimension_numbers<[1], [0], [0], [1], [0, 0, 1, 1], [], []>} : vector<16x64xbf16>, vector<64x128xbf16>, vector<16x128xf32> -> vector<16x128xf32>
    %c0_78 = arith.constant 0 : index
    %c0_79 = arith.constant 0 : index
    %170 = vector.load %arg12[%c0_78, %c0_79] : memref<1x128xf32, #tpu.memory_space<vmem>>, vector<1x128xf32>
    %171 = vector.broadcast %170 : vector<1x128xf32> to vector<16x128xf32>
    %172 = arith.addf %169, %171 : vector<16x128xf32>
    %173 = arith.addf %134, %172 : vector<16x128xf32>
    %cst_80 = arith.constant dense<0.000000e+00> : vector<16xf32>
    %174 = vector.multi_reduction <add>, %173, %cst_80 [1] : vector<16x128xf32> to vector<16xf32>
    %175 = vector.shape_cast %174 : vector<16xf32> to vector<16x1xf32>
    %cst_81 = arith.constant 3.125000e-02 : f32
    %176 = vector.broadcast %cst_81 : f32 to vector<16x1xf32>
    %177 = arith.mulf %175, %176 : vector<16x1xf32>
    %178 = arith.mulf %173, %173 : vector<16x128xf32>
    %cst_82 = arith.constant dense<0.000000e+00> : vector<16xf32>
    %179 = vector.multi_reduction <add>, %178, %cst_82 [1] : vector<16x128xf32> to vector<16xf32>
    %180 = vector.shape_cast %179 : vector<16xf32> to vector<16x1xf32>
    %cst_83 = arith.constant 3.125000e-02 : f32
    %181 = vector.broadcast %cst_83 : f32 to vector<16x1xf32>
    %182 = arith.mulf %180, %181 : vector<16x1xf32>
    %183 = arith.mulf %177, %177 : vector<16x1xf32>
    %184 = arith.subf %182, %183 : vector<16x1xf32>
    %185 = vector.broadcast %177 : vector<16x1xf32> to vector<16x128xf32>
    %186 = arith.subf %173, %185 : vector<16x128xf32>
    %cst_84 = arith.constant 9.99999974E-6 : f32
    %187 = vector.broadcast %cst_84 : f32 to vector<16x1xf32>
    %188 = arith.addf %184, %187 : vector<16x1xf32>
    %189 = math.rsqrt %188 : vector<16x1xf32>
    %190 = vector.broadcast %189 : vector<16x1xf32> to vector<16x128xf32>
    %191 = arith.mulf %186, %190 : vector<16x128xf32>
    %c0_85 = arith.constant 0 : index
    %c0_86 = arith.constant 0 : index
    %192 = vector.load %arg13[%c0_85, %c0_86] : memref<1x128xf32, #tpu.memory_space<vmem>>, vector<1x128xf32>
    %193 = vector.broadcast %192 : vector<1x128xf32> to vector<16x128xf32>
    %194 = arith.mulf %191, %193 : vector<16x128xf32>
    %c0_87 = arith.constant 0 : index
    %c0_88 = arith.constant 0 : index
    %195 = vector.load %arg14[%c0_87, %c0_88] : memref<1x128xf32, #tpu.memory_space<vmem>>, vector<1x128xf32>
    %196 = vector.broadcast %195 : vector<1x128xf32> to vector<16x128xf32>
    %197 = arith.addf %194, %196 : vector<16x128xf32>
    %198 = vector.shape_cast %197 : vector<16x128xf32> to vector<2x8x128xf32>
    %c0_89 = arith.constant 0 : index
    %c0_90 = arith.constant 0 : index
    %c0_91 = arith.constant 0 : index
    %199 = vector.load %arg15[%c0_89, %c0_90, %c0_91] : memref<2x8x128xf32, #tpu.memory_space<vmem>>, vector<2x8x128xf32>
    tpu.vector_store %arg15[%c0_89, %c0_90, %c0_91], %198 {strides = array<i32>} : memref<2x8x128xf32, #tpu.memory_space<vmem>>, vector<2x8x128xf32>,
    return
  }
  func.func @transform_0(%arg0: i32) -> (i32, i32, i32) {
    %c0_i32 = arith.constant 0 : i32
    %c0_i32_0 = arith.constant 0 : i32
    %c0_i32_1 = arith.constant 0 : i32
    return %arg0, %c0_i32, %c0_i32_0 : i32, i32, i32
  }
  func.func @transform_1(%arg0: i32) -> (i32, i32, i32) {
    %c0_i32 = arith.constant 0 : i32
    %c0_i32_0 = arith.constant 0 : i32
    %c0_i32_1 = arith.constant 0 : i32
    return %arg0, %c0_i32, %c0_i32_0 : i32, i32, i32
  }
  func.func @transform_2(%arg0: i32) -> (i32, i32) {
    %c0_i32 = arith.constant 0 : i32
    %c0_i32_0 = arith.constant 0 : i32
    %c0_i32_1 = arith.constant 0 : i32
    return %c0_i32, %c0_i32_0 : i32, i32
  }
  func.func @transform_3(%arg0: i32) -> (i32, i32) {
    %c0_i32 = arith.constant 0 : i32
    %c0_i32_0 = arith.constant 0 : i32
    %c0_i32_1 = arith.constant 0 : i32
    return %c0_i32, %c0_i32_0 : i32, i32
  }
  func.func @transform_4(%arg0: i32) -> (i32, i32) {
    %c0_i32 = arith.constant 0 : i32
    %c0_i32_0 = arith.constant 0 : i32
    %c0_i32_1 = arith.constant 0 : i32
    return %c0_i32, %c0_i32_0 : i32, i32
  }
  func.func @transform_5(%arg0: i32) -> (i32, i32) {
    %c0_i32 = arith.constant 0 : i32
    %c0_i32_0 = arith.constant 0 : i32
    %c0_i32_1 = arith.constant 0 : i32
    return %c0_i32, %c0_i32_0 : i32, i32
  }
  func.func @transform_6(%arg0: i32) -> (i32, i32) {
    %c0_i32 = arith.constant 0 : i32
    %c0_i32_0 = arith.constant 0 : i32
    %c0_i32_1 = arith.constant 0 : i32
    return %c0_i32, %c0_i32_0 : i32, i32
  }
  func.func @transform_7(%arg0: i32) -> (i32, i32) {
    %c0_i32 = arith.constant 0 : i32
    %c0_i32_0 = arith.constant 0 : i32
    %c0_i32_1 = arith.constant 0 : i32
    return %c0_i32, %c0_i32_0 : i32, i32
  }
  func.func @transform_8(%arg0: i32) -> (i32, i32, i32) {
    %c0_i32 = arith.constant 0 : i32
    %c0_i32_0 = arith.constant 0 : i32
    %c0_i32_1 = arith.constant 0 : i32
    %c0_i32_2 = arith.constant 0 : i32
    return %c0_i32, %c0_i32_0, %c0_i32_1 : i32, i32, i32
  }
  func.func @transform_9(%arg0: i32) -> (i32, i32) {
    %c0_i32 = arith.constant 0 : i32
    %c0_i32_0 = arith.constant 0 : i32
    %c0_i32_1 = arith.constant 0 : i32
    return %c0_i32, %c0_i32_0 : i32, i32
  }
  func.func @transform_10(%arg0: i32) -> (i32, i32) {
    %c0_i32 = arith.constant 0 : i32
    %c0_i32_0 = arith.constant 0 : i32
    %c0_i32_1 = arith.constant 0 : i32
    return %c0_i32, %c0_i32_0 : i32, i32
  }
  func.func @transform_11(%arg0: i32) -> (i32, i32) {
    %c0_i32 = arith.constant 0 : i32
    %c0_i32_0 = arith.constant 0 : i32
    %c0_i32_1 = arith.constant 0 : i32
    return %c0_i32, %c0_i32_0 : i32, i32
  }
  func.func @transform_12(%arg0: i32) -> (i32, i32) {
    %c0_i32 = arith.constant 0 : i32
    %c0_i32_0 = arith.constant 0 : i32
    %c0_i32_1 = arith.constant 0 : i32
    return %c0_i32, %c0_i32_0 : i32, i32
  }
  func.func @transform_13(%arg0: i32) -> (i32, i32) {
    %c0_i32 = arith.constant 0 : i32
    %c0_i32_0 = arith.constant 0 : i32
    %c0_i32_1 = arith.constant 0 : i32
    return %c0_i32, %c0_i32_0 : i32, i32
  }
  func.func @transform_14(%arg0: i32) -> (i32, i32, i32) {
    %c0_i32 = arith.constant 0 : i32
    %c0_i32_0 = arith.constant 0 : i32
    %c0_i32_1 = arith.constant 0 : i32
    return %arg0, %c0_i32, %c0_i32_0 : i32, i32, i32
  }
}

</mosaic_0001>

<llo_original>
// kernel: tpu_custom_call.1
$region0: #{tpu_custom_call.1}
  #allocation0 [shape = 'u32[]', space=smem, size = 0x4, offset = 0x4, fixed_abs, tag = 'smem constant byte address 0x4 - core index']
  #allocation1 [shape = 'u32[72,128]{1,0:T(1,128)}', space=vmem, size = 0x9000, scoped, tag = 'internal scratch']
  #allocation2 [shape = 'f32[2,10,128]{2,1,0:T(8,128)}', space=vmem, size = 0x4000, scoped, tag = 'scratch operand']
  %s0 = inlined_call_operand.vmem [shape: f32[4,8,128], index: 0, kind: input, shape index: {}]
  %s1 = inlined_call_operand.vmem [shape: f32[4,1,8], index: 1, kind: input, shape index: {}]
  %s2 = inlined_call_operand.vmem [shape: bf16[128,96], index: 2, kind: input, shape index: {}]
  %s3 = inlined_call_operand.vmem [shape: f32[1,96], index: 3, kind: input, shape index: {}]
  %s4 = inlined_call_operand.vmem [shape: bf16[32,128], index: 4, kind: input, shape index: {}]
  %s5 = inlined_call_operand.vmem [shape: f32[1,128], index: 5, kind: input, shape index: {}]
  %s6 = inlined_call_operand.vmem [shape: f32[1,128], index: 6, kind: input, shape index: {}]
  %s7 = inlined_call_operand.vmem [shape: f32[1,128], index: 7, kind: input, shape index: {}]
  %s8 = inlined_call_operand.vmem [shape: bf16[3,128,64], index: 8, kind: input, shape index: {}]
  %s9 = inlined_call_operand.vmem [shape: f32[1,64], index: 9, kind: input, shape index: {}]
  %s10 = inlined_call_operand.vmem [shape: bf16[64,128], index: 10, kind: input, shape index: {}]
  %s11 = inlined_call_operand.vmem [shape: f32[1,128], index: 11, kind: input, shape index: {}]
  %s12 = inlined_call_operand.vmem [shape: f32[1,128], index: 12, kind: input, shape index: {}]
  %s13 = inlined_call_operand.vmem [shape: f32[1,128], index: 13, kind: input, shape index: {}]
  %s14 = inlined_call_operand.hbm [shape: f32[4,8,128], index: 14, kind: output, shape index: {}]
  %s15 = sld [smem:[#allocation0]]
  $region89: #{tpu_custom_call.1} parent=0
    _
  %s17 = ssub.s32 1, %s15
  %s18 = scalar_select 0, %s17, %s15
  $region1: #{tpu_custom_call.1} parent=0
    #allocation3 [shape = 'u8[16384]{0}', space=vmem, size = 0x4000, scoped, tag = 'output window, operand 0']
    #allocation4 [shape = 's32[2]{0}', space=sflag, size = 0x8, scoped, tag = 'scoped memory for tpu_custom_call.1']
    %19 = vsyncpa [#allocation4], 0
    %s20 = scalar_lea.sflag [#allocation4], 1
    %21 = vsyncpa %s20, 0
    loop: start=0, step=1, limit=4
    $region2: #{tpu_custom_call.1} parent=1 // loop_pre_header
      _
    $region3: #{tpu_custom_call.1} parent=1 // loop_header
      %s23 = sphi 0, %s27
      %p24 = scmp.ge.s32.totalorder %s23, 4
      %s33 = sphi 0, %s35
      %s36 = sphi 0, %s33
      %s37 = sphi 0, %s36
      %s53 = sphi 0, %s37
      %s59 = sphi 0, %s61
      %s62 = sphi 0, %s59
      %s63 = sphi 0, %s62
      %s79 = sphi 0, %s63
      %s83 = sphi 0, %s83
      %s85 = sphi 0, %s83
      %s86 = sphi 0, %s85
      %s100 = sphi 0, %s86
      %s104 = sphi 0, %s104
      %s106 = sphi 0, %s104
      %s107 = sphi 0, %s106
      %s121 = sphi 0, %s107
      %s125 = sphi 0, %s125
      %s127 = sphi 0, %s125
      %s128 = sphi 0, %s127
      %s142 = sphi 0, %s128
      %s146 = sphi 0, %s146
      %s148 = sphi 0, %s146
      %s149 = sphi 0, %s148
      %s163 = sphi 0, %s149
      %s167 = sphi 0, %s167
      %s169 = sphi 0, %s167
      %s170 = sphi 0, %s169
      %s184 = sphi 0, %s170
      %s188 = sphi 0, %s188
      %s190 = sphi 0, %s188
      %s191 = sphi 0, %s190
      %s205 = sphi 0, %s191
      %s209 = sphi 0, %s209
      %s211 = sphi 0, %s209
      %s212 = sphi 0, %s211
      %s226 = sphi 0, %s212
      %s230 = sphi 0, %s230
      %s232 = sphi 0, %s230
      %s233 = sphi 0, %s232
      %s247 = sphi 0, %s233
      %s251 = sphi 0, %s251
      %s253 = sphi 0, %s251
      %s254 = sphi 0, %s253
      %s268 = sphi 0, %s254
      %s272 = sphi 0, %s272
      %s274 = sphi 0, %s272
      %s275 = sphi 0, %s274
      %s289 = sphi 0, %s275
      %s293 = sphi 0, %s293
      %s295 = sphi 0, %s293
      %s296 = sphi 0, %s295
      %s310 = sphi 0, %s296
      %s314 = sphi 0, %s314
      %s316 = sphi 0, %s314
      %s317 = sphi 0, %s316
      %s331 = sphi 0, %s317
      %s337 = sphi 0, %s339
      %s340 = sphi 0, %s337
      %s341 = sphi 0, %s340
      %s357 = sphi 0, %s341
    $region4: #{tpu_custom_call.1} parent=1 // loop_header_branch
      %26 = sbr.rel (%p24) target = $region8
    $region5: #{tpu_custom_call.1} parent=1 // loop_body
      %s28 = ssub.s32 %s23, 1
      %s29 = ssub.s32 %s23, 2
      %s30 = sadd.s32 %s23, 1
      %s31 = ssub.s32 %s23, %s30
      %p32 = scmp.eq.s32.totalorder %s31, 0
      %s34 = sadd.s32 %s33, 1
      %s35 = scalar_select %p32, %s33, %s34
      %p38 = pneg %p32
      %p39 = scmp.eq.s32.totalorder %s23, 1
      %p40 = por %p38, %p39
      %p41 = scmp.ne.s32.totalorder %s33, %s36
      %p42 = scmp.eq.s32.totalorder %s23, 0
      %p43 = por %p41, %p42
      %p44 = scmp.ne.s32.totalorder %s33, %s36
      %p45 = scmp.eq.s32.totalorder %s28, 1
      %p46 = por %p44, %p45
      %p47 = scmp.ne.s32.totalorder %s36, %s37
      %p48 = scmp.eq.s32.totalorder %s28, 0
      %p49 = por %p47, %p48
      %p50 = scmp.ne.s32.totalorder %s36, %s37
      %p51 = scmp.eq.s32.totalorder %s29, 1
      %p52 = por %p50, %p51
      %p54 = scmp.ne.s32.totalorder %s37, %s53
      %p55 = scmp.eq.s32.totalorder %s29, 0
      %p56 = por %p54, %p55
      %s57 = ssub.s32 %s23, %s30
      %p58 = scmp.eq.s32.totalorder %s57, 0
      %s60 = sadd.s32 %s59, 1
      %s61 = scalar_select %p58, %s59, %s60
      %p64 = pneg %p58
      %p65 = scmp.eq.s32.totalorder %s23, 1
      %p66 = por %p64, %p65
      %p67 = scmp.ne.s32.totalorder %s59, %s62
      %p68 = scmp.eq.s32.totalorder %s23, 0
      %p69 = por %p67, %p68
      %p70 = scmp.ne.s32.totalorder %s59, %s62
      %p71 = scmp.eq.s32.totalorder %s28, 1
      %p72 = por %p70, %p71
      %p73 = scmp.ne.s32.totalorder %s62, %s63
      %p74 = scmp.eq.s32.totalorder %s28, 0
      %p75 = por %p73, %p74
      %p76 = scmp.ne.s32.totalorder %s62, %s63
      %p77 = scmp.eq.s32.totalorder %s29, 1
      %p78 = por %p76, %p77
      %p80 = scmp.ne.s32.totalorder %s63, %s79
      %p81 = scmp.eq.s32.totalorder %s29, 0
      %p82 = por %p80, %p81
      %s84 = sadd.s32 %s83, 1
      %p87 = scmp.eq.s32.totalorder %s23, 1
      %p88 = scmp.ne.s32.totalorder %s83, %s85
      %p89 = scmp.eq.s32.totalorder %s23, 0
      %p90 = por %p88, %p89
      %p91 = scmp.ne.s32.totalorder %s83, %s85
      %p92 = scmp.eq.s32.totalorder %s28, 1
      %p93 = por %p91, %p92
      %p94 = scmp.ne.s32.totalorder %s85, %s86
      %p95 = scmp.eq.s32.totalorder %s28, 0
      %p96 = por %p94, %p95
      %p97 = scmp.ne.s32.totalorder %s85, %s86
      %p98 = scmp.eq.s32.totalorder %s29, 1
      %p99 = por %p97, %p98
      %p101 = scmp.ne.s32.totalorder %s86, %s100
      %p102 = scmp.eq.s32.totalorder %s29, 0
      %p103 = por %p101, %p102
      %s105 = sadd.s32 %s104, 1
      %p108 = scmp.eq.s32.totalorder %s23, 1
      %p109 = scmp.ne.s32.totalorder %s104, %s106
      %p110 = scmp.eq.s32.totalorder %s23, 0
      %p111 = por %p109, %p110
      %p112 = scmp.ne.s32.totalorder %s104, %s106
      %p113 = scmp.eq.s32.totalorder %s28, 1
      %p114 = por %p112, %p113
      %p115 = scmp.ne.s32.totalorder %s106, %s107
      %p116 = scmp.eq.s32.totalorder %s28, 0
      %p117 = por %p115, %p116
      %p118 = scmp.ne.s32.totalorder %s106, %s107
      %p119 = scmp.eq.s32.totalorder %s29, 1
      %p120 = por %p118, %p119
      %p122 = scmp.ne.s32.totalorder %s107, %s121
      %p123 = scmp.eq.s32.totalorder %s29, 0
      %p124 = por %p122, %p123
      %s126 = sadd.s32 %s125, 1
      %p129 = scmp.eq.s32.totalorder %s23, 1
      %p130 = scmp.ne.s32.totalorder %s125, %s127
      %p131 = scmp.eq.s32.totalorder %s23, 0
      %p132 = por %p130, %p131
      %p133 = scmp.ne.s32.totalorder %s125, %s127
      %p134 = scmp.eq.s32.totalorder %s28, 1
      %p135 = por %p133, %p134
      %p136 = scmp.ne.s32.totalorder %s127, %s128
      %p137 = scmp.eq.s32.totalorder %s28, 0
      %p138 = por %p136, %p137
      %p139 = scmp.ne.s32.totalorder %s127, %s128
      %p140 = scmp.eq.s32.totalorder %s29, 1
      %p141 = por %p139, %p140
      %p143 = scmp.ne.s32.totalorder %s128, %s142
      %p144 = scmp.eq.s32.totalorder %s29, 0
      %p145 = por %p143, %p144
      %s147 = sadd.s32 %s146, 1
      %p150 = scmp.eq.s32.totalorder %s23, 1
      %p151 = scmp.ne.s32.totalorder %s146, %s148
      %p152 = scmp.eq.s32.totalorder %s23, 0
      %p153 = por %p151, %p152
      %p154 = scmp.ne.s32.totalorder %s146, %s148
      %p155 = scmp.eq.s32.totalorder %s28, 1
      %p156 = por %p154, %p155
      %p157 = scmp.ne.s32.totalorder %s148, %s149
      %p158 = scmp.eq.s32.totalorder %s28, 0
      %p159 = por %p157, %p158
      %p160 = scmp.ne.s32.totalorder %s148, %s149
      %p161 = scmp.eq.s32.totalorder %s29, 1
      %p162 = por %p160, %p161
      %p164 = scmp.ne.s32.totalorder %s149, %s163
      %p165 = scmp.eq.s32.totalorder %s29, 0
      %p166 = por %p164, %p165
      %s168 = sadd.s32 %s167, 1
      %p171 = scmp.eq.s32.totalorder %s23, 1
      %p172 = scmp.ne.s32.totalorder %s167, %s169
      %p173 = scmp.eq.s32.totalorder %s23, 0
      %p174 = por %p172, %p173
      %p175 = scmp.ne.s32.totalorder %s167, %s169
      %p176 = scmp.eq.s32.totalorder %s28, 1
      %p177 = por %p175, %p176
      %p178 = scmp.ne.s32.totalorder %s169, %s170
      %p179 = scmp.eq.s32.totalorder %s28, 0
      %p180 = por %p178, %p179
      %p181 = scmp.ne.s32.totalorder %s169, %s170
      %p182 = scmp.eq.s32.totalorder %s29, 1
      %p183 = por %p181, %p182
      %p185 = scmp.ne.s32.totalorder %s170, %s184
      %p186 = scmp.eq.s32.totalorder %s29, 0
      %p187 = por %p185, %p186
      %s189 = sadd.s32 %s188, 1
      %p192 = scmp.eq.s32.totalorder %s23, 1
      %p193 = scmp.ne.s32.totalorder %s188, %s190
      %p194 = scmp.eq.s32.totalorder %s23, 0
      %p195 = por %p193, %p194
      %p196 = scmp.ne.s32.totalorder %s188, %s190
      %p197 = scmp.eq.s32.totalorder %s28, 1
      %p198 = por %p196, %p197
      %p199 = scmp.ne.s32.totalorder %s190, %s191
      %p200 = scmp.eq.s32.totalorder %s28, 0
      %p201 = por %p199, %p200
      %p202 = scmp.ne.s32.totalorder %s190, %s191
      %p203 = scmp.eq.s32.totalorder %s29, 1
      %p204 = por %p202, %p203
      %p206 = scmp.ne.s32.totalorder %s191, %s205
      %p207 = scmp.eq.s32.totalorder %s29, 0
      %p208 = por %p206, %p207
      %s210 = sadd.s32 %s209, 1
      %p213 = scmp.eq.s32.totalorder %s23, 1
      %p214 = scmp.ne.s32.totalorder %s209, %s211
      %p215 = scmp.eq.s32.totalorder %s23, 0
      %p216 = por %p214, %p215
      %p217 = scmp.ne.s32.totalorder %s209, %s211
      %p218 = scmp.eq.s32.totalorder %s28, 1
      %p219 = por %p217, %p218
      %p220 = scmp.ne.s32.totalorder %s211, %s212
      %p221 = scmp.eq.s32.totalorder %s28, 0
      %p222 = por %p220, %p221
      %p223 = scmp.ne.s32.totalorder %s211, %s212
      %p224 = scmp.eq.s32.totalorder %s29, 1
      %p225 = por %p223, %p224
      %p227 = scmp.ne.s32.totalorder %s212, %s226
      %p228 = scmp.eq.s32.totalorder %s29, 0
      %p229 = por %p227, %p228
      %s231 = sadd.s32 %s230, 1
      %p234 = scmp.eq.s32.totalorder %s23, 1
      %p235 = scmp.ne.s32.totalorder %s230, %s232
      %p236 = scmp.eq.s32.totalorder %s23, 0
      %p237 = por %p235, %p236
      %p238 = scmp.ne.s32.totalorder %s230, %s232
      %p239 = scmp.eq.s32.totalorder %s28, 1
      %p240 = por %p238, %p239
      %p241 = scmp.ne.s32.totalorder %s232, %s233
      %p242 = scmp.eq.s32.totalorder %s28, 0
      %p243 = por %p241, %p242
      %p244 = scmp.ne.s32.totalorder %s232, %s233
      %p245 = scmp.eq.s32.totalorder %s29, 1
      %p246 = por %p244, %p245
      %p248 = scmp.ne.s32.totalorder %s233, %s247
      %p249 = scmp.eq.s32.totalorder %s29, 0
      %p250 = por %p248, %p249
      %s252 = sadd.s32 %s251, 1
      %p255 = scmp.eq.s32.totalorder %s23, 1
      %p256 = scmp.ne.s32.totalorder %s251, %s253
      %p257 = scmp.eq.s32.totalorder %s23, 0
      %p258 = por %p256, %p257
      %p259 = scmp.ne.s32.totalorder %s251, %s253
      %p260 = scmp.eq.s32.totalorder %s28, 1
      %p261 = por %p259, %p260
      %p262 = scmp.ne.s32.totalorder %s253, %s254
      %p263 = scmp.eq.s32.totalorder %s28, 0
      %p264 = por %p262, %p263
      %p265 = scmp.ne.s32.totalorder %s253, %s254
      %p266 = scmp.eq.s32.totalorder %s29, 1
      %p267 = por %p265, %p266
      %p269 = scmp.ne.s32.totalorder %s254, %s268
      %p270 = scmp.eq.s32.totalorder %s29, 0
      %p271 = por %p269, %p270
      %s273 = sadd.s32 %s272, 1
      %p276 = scmp.eq.s32.totalorder %s23, 1
      %p277 = scmp.ne.s32.totalorder %s272, %s274
      %p278 = scmp.eq.s32.totalorder %s23, 0
      %p279 = por %p277, %p278
      %p280 = scmp.ne.s32.totalorder %s272, %s274
      %p281 = scmp.eq.s32.totalorder %s28, 1
      %p282 = por %p280, %p281
      %p283 = scmp.ne.s32.totalorder %s274, %s275
      %p284 = scmp.eq.s32.totalorder %s28, 0
      %p285 = por %p283, %p284
      %p286 = scmp.ne.s32.totalorder %s274, %s275
      %p287 = scmp.eq.s32.totalorder %s29, 1
      %p288 = por %p286, %p287
      %p290 = scmp.ne.s32.totalorder %s275, %s289
      %p291 = scmp.eq.s32.totalorder %s29, 0
      %p292 = por %p290, %p291
      %s294 = sadd.s32 %s293, 1
      %p297 = scmp.eq.s32.totalorder %s23, 1
      %p298 = scmp.ne.s32.totalorder %s293, %s295
      %p299 = scmp.eq.s32.totalorder %s23, 0
      %p300 = por %p298, %p299
      %p301 = scmp.ne.s32.totalorder %s293, %s295
      %p302 = scmp.eq.s32.totalorder %s28, 1
      %p303 = por %p301, %p302
      %p304 = scmp.ne.s32.totalorder %s295, %s296
      %p305 = scmp.eq.s32.totalorder %s28, 0
      %p306 = por %p304, %p305
      %p307 = scmp.ne.s32.totalorder %s295, %s296
      %p308 = scmp.eq.s32.totalorder %s29, 1
      %p309 = por %p307, %p308
      %p311 = scmp.ne.s32.totalorder %s296, %s310
      %p312 = scmp.eq.s32.totalorder %s29, 0
      %p313 = por %p311, %p312
      %s315 = sadd.s32 %s314, 1
      %p318 = scmp.eq.s32.totalorder %s23, 1
      %p319 = scmp.ne.s32.totalorder %s314, %s316
      %p320 = scmp.eq.s32.totalorder %s23, 0
      %p321 = por %p319, %p320
      %p322 = scmp.ne.s32.totalorder %s314, %s316
      %p323 = scmp.eq.s32.totalorder %s28, 1
      %p324 = por %p322, %p323
      %p325 = scmp.ne.s32.totalorder %s316, %s317
      %p326 = scmp.eq.s32.totalorder %s28, 0
      %p327 = por %p325, %p326
      %p328 = scmp.ne.s32.totalorder %s316, %s317
      %p329 = scmp.eq.s32.totalorder %s29, 1
      %p330 = por %p328, %p329
      %p332 = scmp.ne.s32.totalorder %s317, %s331
      %p333 = scmp.eq.s32.totalorder %s29, 0
      %p334 = por %p332, %p333
      %s335 = ssub.s32 %s23, %s30
      %p336 = scmp.eq.s32.totalorder %s335, 0
      %s338 = sadd.s32 %s337, 1
      %s339 = scalar_select %p336, %s337, %s338
      %p342 = pneg %p336
      %p343 = scmp.eq.s32.totalorder %s23, 1
      %p344 = por %p342, %p343
      %p345 = scmp.ne.s32.totalorder %s337, %s340
      %p346 = scmp.eq.s32.totalorder %s23, 0
      %p347 = por %p345, %p346
      %p348 = scmp.ne.s32.totalorder %s337, %s340
      %p349 = scmp.eq.s32.totalorder %s28, 1
      %p350 = por %p348, %p349
      %p351 = scmp.ne.s32.totalorder %s340, %s341
      %p352 = scmp.eq.s32.totalorder %s28, 0
      %p353 = por %p351, %p352
      %p354 = scmp.ne.s32.totalorder %s340, %s341
      %p355 = scmp.eq.s32.totalorder %s29, 1
      %p356 = por %p354, %p355
      %p358 = scmp.ne.s32.totalorder %s341, %s357
      %p359 = scmp.eq.s32.totalorder %s29, 0
      %p360 = por %p358, %p359
      %p361 = scmp.le.s32.totalorder 1, %s23
      %p362 = scmp.lt.s32.totalorder %s23, 3
      %p363 = pnand %p361, %p362
      %p364 = pneg %p363
      // Predicated region
      $region9: #{tpu_custom_call.1} parent=5 // pred_check
        _
      $region10: #{tpu_custom_call.1} parent=5 // pred_check_branch
        %366 = sbr.rel (%p363) target = $region12
      $region11: #{tpu_custom_call.1} parent=5 // pred_region
        %s367 = ssub.s32 %s23, 1
        // Predicated region
        $region13: #{tpu_custom_call.1} parent=11 // pred_check
          %p368 = pneg %p96
        $region14: #{tpu_custom_call.1} parent=11 // pred_check_branch
          %370 = sbr.rel (%p368) target = $region16
        $region15: #{tpu_custom_call.1} parent=11 // pred_region
          _
        $region16: #{tpu_custom_call.1} parent=11 // pred_fallthru
          _
        // Predicated region
        $region17: #{tpu_custom_call.1} parent=11 // pred_check
          %p371 = pneg %p117
        $region18: #{tpu_custom_call.1} parent=11 // pred_check_branch
          %373 = sbr.rel (%p371) target = $region20
        $region19: #{tpu_custom_call.1} parent=11 // pred_region
          _
        $region20: #{tpu_custom_call.1} parent=11 // pred_fallthru
          _
        // Predicated region
        $region21: #{tpu_custom_call.1} parent=11 // pred_check
          %p374 = pneg %p138
        $region22: #{tpu_custom_call.1} parent=11 // pred_check_branch
          %376 = sbr.rel (%p374) target = $region24
        $region23: #{tpu_custom_call.1} parent=11 // pred_region
          _
        $region24: #{tpu_custom_call.1} parent=11 // pred_fallthru
          _
        // Predicated region
        $region25: #{tpu_custom_call.1} parent=11 // pred_check
          %p377 = pneg %p159
        $region26: #{tpu_custom_call.1} parent=11 // pred_check_branch
          %379 = sbr.rel (%p377) target = $region28
        $region27: #{tpu_custom_call.1} parent=11 // pred_region
          _
        $region28: #{tpu_custom_call.1} parent=11 // pred_fallthru
          _
        // Predicated region
        $region29: #{tpu_custom_call.1} parent=11 // pred_check
          %p380 = pneg %p180
        $region30: #{tpu_custom_call.1} parent=11 // pred_check_branch
          %382 = sbr.rel (%p380) target = $region32
        $region31: #{tpu_custom_call.1} parent=11 // pred_region
          _
        $region32: #{tpu_custom_call.1} parent=11 // pred_fallthru
          _
        // Predicated region
        $region33: #{tpu_custom_call.1} parent=11 // pred_check
          %p383 = pneg %p201
        $region34: #{tpu_custom_call.1} parent=11 // pred_check_branch
          %385 = sbr.rel (%p383) target = $region36
        $region35: #{tpu_custom_call.1} parent=11 // pred_region
          _
        $region36: #{tpu_custom_call.1} parent=11 // pred_fallthru
          _
        // Predicated region
        $region37: #{tpu_custom_call.1} parent=11 // pred_check
          %p386 = pneg %p222
        $region38: #{tpu_custom_call.1} parent=11 // pred_check_branch
          %388 = sbr.rel (%p386) target = $region40
        $region39: #{tpu_custom_call.1} parent=11 // pred_region
          _
        $region40: #{tpu_custom_call.1} parent=11 // pred_fallthru
          _
        // Predicated region
        $region41: #{tpu_custom_call.1} parent=11 // pred_check
          %p389 = pneg %p243
        $region42: #{tpu_custom_call.1} parent=11 // pred_check_branch
          %391 = sbr.rel (%p389) target = $region44
        $region43: #{tpu_custom_call.1} parent=11 // pred_region
          _
        $region44: #{tpu_custom_call.1} parent=11 // pred_fallthru
          _
        // Predicated region
        $region45: #{tpu_custom_call.1} parent=11 // pred_check
          %p392 = pneg %p264
        $region46: #{tpu_custom_call.1} parent=11 // pred_check_branch
          %394 = sbr.rel (%p392) target = $region48
        $region47: #{tpu_custom_call.1} parent=11 // pred_region
          _
        $region48: #{tpu_custom_call.1} parent=11 // pred_fallthru
          _
        // Predicated region
        $region49: #{tpu_custom_call.1} parent=11 // pred_check
          %p395 = pneg %p285
        $region50: #{tpu_custom_call.1} parent=11 // pred_check_branch
          %397 = sbr.rel (%p395) target = $region52
        $region51: #{tpu_custom_call.1} parent=11 // pred_region
          _
        $region52: #{tpu_custom_call.1} parent=11 // pred_fallthru
          _
        // Predicated region
        $region53: #{tpu_custom_call.1} parent=11 // pred_check
          %p398 = pneg %p306
        $region54: #{tpu_custom_call.1} parent=11 // pred_check_branch
          %400 = sbr.rel (%p398) target = $region56
        $region55: #{tpu_custom_call.1} parent=11 // pred_region
          _
        $region56: #{tpu_custom_call.1} parent=11 // pred_fallthru
          _
        // Predicated region
        $region57: #{tpu_custom_call.1} parent=11 // pred_check
          %p401 = pneg %p327
        $region58: #{tpu_custom_call.1} parent=11 // pred_check_branch
          %403 = sbr.rel (%p401) target = $region60
        $region59: #{tpu_custom_call.1} parent=11 // pred_region
          _
        $region60: #{tpu_custom_call.1} parent=11 // pred_fallthru
          _
      $region12: #{tpu_custom_call.1} parent=5 // pred_fallthru
        _
      %p404 = scmp.lt.s32.totalorder %s23, 2
      // Predicated region
      $region61: #{tpu_custom_call.1} parent=5 // pred_check
        %p405 = pneg %p404
      $region62: #{tpu_custom_call.1} parent=5 // pred_check_branch
        %407 = sbr.rel (%p405) target = $region64
      $region63: #{tpu_custom_call.1} parent=5 // pred_region
        // Predicated region
        $region65: #{tpu_custom_call.1} parent=63 // pred_check
          %p408 = pneg %p43
        $region66: #{tpu_custom_call.1} parent=63 // pred_check_branch
          %410 = sbr.rel (%p408) target = $region68
        $region67: #{tpu_custom_call.1} parent=63 // pred_region
          %s411 = smul.u32 2, %s23
          %p412 = scmp.lt.s32.totalorder %s411, 3
          %s413 = scalar_select %p412, %s411, 3
          %s414 = smul.addr %s413, 8
          %s415 = scalar_lea.vmem %s0, %s414
          %s416 = smul.u32 2, %s23
        $region68: #{tpu_custom_call.1} parent=63 // pred_fallthru
          _
        // Predicated region
        $region69: #{tpu_custom_call.1} parent=63 // pred_check
          %p417 = pneg %p69
        $region70: #{tpu_custom_call.1} parent=63 // pred_check_branch
          %419 = sbr.rel (%p417) target = $region72
        $region71: #{tpu_custom_call.1} parent=63 // pred_region
          %s420 = smul.u32 2, %s23
          %p421 = scmp.lt.s32.totalorder %s420, 3
          %s422 = scalar_select %p421, %s420, 3
          %s423 = scalar_lea.vmem %s1, %s422
          %s424 = smul.u32 2, %s23
        $region72: #{tpu_custom_call.1} parent=63 // pred_fallthru
          _
      $region64: #{tpu_custom_call.1} parent=5 // pred_fallthru
        _
      %p425 = scmp.le.s32.totalorder 1, %s23
      %p426 = scmp.lt.s32.totalorder %s23, 3
      %p427 = pnand %p425, %p426
      %p428 = pneg %p427
      // Predicated region
      $region73: #{tpu_custom_call.1} parent=5 // pred_check
        _
      $region74: #{tpu_custom_call.1} parent=5 // pred_check_branch
        %430 = sbr.rel (%p427) target = $region76
      $region75: #{tpu_custom_call.1} parent=5 // pred_region
        %s431 = ssub.s32 %s23, 1
        %s432 = smul.u32 2, %s28
        %p433 = scmp.lt.s32.totalorder %s432, 3
        %s434 = scalar_select %p433, %s432, 3
        %s435 = smul.addr %s434, 8
        %s436 = scalar_lea.vmem %s0, %s435
        %p437 = pneg %p49
        %p438 = pneg %p46
        %s439 = smul.u32 2, %s28
        %p440 = scmp.lt.s32.totalorder %s439, 3
        %s441 = scalar_select %p440, %s439, 3
        %s442 = scalar_lea.vmem %s1, %s441
        %p443 = pneg %p75
        %p444 = pneg %p72
        %p445 = pneg %p96
        %p446 = pneg %p93
        %p447 = pneg %p117
        %p448 = pneg %p114
        %p449 = pneg %p138
        %p450 = pneg %p135
        %p451 = pneg %p159
        %p452 = pneg %p156
        %p453 = pneg %p180
        %p454 = pneg %p177
        %p455 = pneg %p201
        %p456 = pneg %p198
        %p457 = pneg %p222
        %p458 = pneg %p219
        %p459 = pneg %p243
        %p460 = pneg %p240
        %p461 = pneg %p264
        %p462 = pneg %p261
        %p463 = pneg %p285
        %p464 = pneg %p282
        %p465 = pneg %p306
        %p466 = pneg %p303
        %p467 = pneg %p327
        %p468 = pneg %p324
        %p469 = pneg %p353
        %p470 = pneg %p350
        %s471 = sand.u32 %s340, 1
        %s472 = scalar_lea.sflag [#allocation4], %s471
        %s473 = sand.u32 %s340, 1
        %s474 = smul.addr %s473, 16
        %s475 = scalar_lea.vmem [#allocation3], %s474
        %s476 = smul.u32 2, %s28
        %p477 = scmp.lt.s32.totalorder %s476, 3
        %s478 = scalar_select %p477, %s476, 3
        %s479 = smul.addr %s478, 8
        %s480 = scalar_lea.vmem %s0, %s479
        %s481 = smul.u32 2, %s28
        %s482 = smul.u32 2, %s28
        %p483 = scmp.lt.s32.totalorder %s482, 3
        %s484 = scalar_select %p483, %s482, 3
        %s485 = scalar_lea.vmem %s1, %s484
        %s486 = smul.u32 2, %s28
        %s487 = smul.u32 2, %s28
        %v489 = vld [vmem:[%s480] sm:$0xff]
        %v490 = vld [vmem:[%s480 + $0x8] sm:$0xff]
        %v491 = vpack.c.bf16 %v490, %v489
        %v492 = vld [vmem:[%s2] sm:$0xf]
        %v493 = vld [vmem:[%s2 + $0x4] sm:$0xf]
        %v494 = vld [vmem:[%s2 + $0x8] sm:$0xf]
        %v495 = vld [vmem:[%s2 + $0xc] sm:$0xf]
        %v496 = vld [vmem:[%s2 + $0x10] sm:$0xf]
        %v497 = vld [vmem:[%s2 + $0x14] sm:$0xf]
        %v498 = vld [vmem:[%s2 + $0x18] sm:$0xf]
        %v499 = vld [vmem:[%s2 + $0x1c] sm:$0xf]
        %v500 = vld [vmem:[%s2 + $0x20] sm:$0xf]
        %v501 = vld [vmem:[%s2 + $0x24] sm:$0xf]
        %v502 = vld [vmem:[%s2 + $0x28] sm:$0xf]
        %v503 = vld [vmem:[%s2 + $0x2c] sm:$0xf]
        %v504 = vld [vmem:[%s2 + $0x30] sm:$0xf]
        %v505 = vld [vmem:[%s2 + $0x34] sm:$0xf]
        %v506 = vld [vmem:[%s2 + $0x38] sm:$0xf]
        %v507 = vld [vmem:[%s2 + $0x3c] sm:$0xf]
        %v508 = vld [vmem:[%s3] sm:$0x1]
        %v510 = vperm.slane %v508, 0
        %v528 = vunpack.c.l.b16 %v492
        %v529 = vunpack.c.l.b16 %v493
        %v530 = vunpack.c.l.b16 %v494
        %v531 = vunpack.c.l.b16 %v495
        %v532 = vunpack.c.l.b16 %v496
        %v533 = vunpack.c.l.b16 %v497
        %v534 = vunpack.c.l.b16 %v498
        %v535 = vunpack.c.l.b16 %v499
        %v536 = vunpack.c.l.b16 %v500
        %v537 = vunpack.c.l.b16 %v501
        %v538 = vunpack.c.l.b16 %v502
        %v539 = vunpack.c.l.b16 %v503
        %v540 = vunpack.c.l.b16 %v504
        %v541 = vunpack.c.l.b16 %v505
        %v542 = vunpack.c.l.b16 %v506
        %v543 = vunpack.c.l.b16 %v507
        %v544 = vpack.c.b16 %v529, %v528
        %v545 = vpack.c.b16 %v531, %v530
        %v546 = vpack.c.b16 %v533, %v532
        %v547 = vpack.c.b16 %v535, %v534
        %v548 = vpack.c.b16 %v537, %v536
        %v549 = vpack.c.b16 %v539, %v538
        %v550 = vpack.c.b16 %v541, %v540
        %v551 = vpack.c.b16 %v543, %v542
        %560 = vmatpush.bf16.msra.mxu0 %v551
        %561 = vmatpush.bf16.msra.mxu0 %v550
        %562 = vmatpush.bf16.msra.mxu0 %v549
        %563 = vmatpush.bf16.msra.mxu0 %v548
        %564 = vmatpush.bf16.msra.mxu0 %v547
        %565 = vmatpush.bf16.msra.mxu0 %v546
        %566 = vmatpush.bf16.msra.mxu0 %v545
        %567 = vmatpush.bf16.msra.mxu0 %v544
        %568 = vmatmul.bf16.gmra.mxu0 %v491
        %v569 = vpop.f32.mrf.mxu0
        %v570 = vadd.f32 %v510, %v569
        %v571 = vpop.f32.mrf.mxu0
        %v572 = vadd.f32 %v510, %v571
        %573 = vdwg.mxu0
        %v574 = vld [vmem:[%s485] sm:$0x1]
        %v575 = vld [vmem:[%s485 + $0x1] sm:$0x1]
        %v576 = vpack.c.bf16 %v570, %v570
        %v577 = vpack.c.bf16 %v572, %v572
        %v579 = vunpack.c.l.b16 %v576
        %v580 = vpack.c.b16 %v579, %v579
        %581 = vrot.lane.b32.xlu0 %v580, 96
        %v582 = vpop.permute.xlu0 %581
        %vm583 = vcmask 64512
        %v585 = vsel %vm583, %v576, 0
        %v588 = vsel %vm583, %v582, 0
        %590 = vmatpush.bf16.xpose.msra.mxu0 0
        %591 = vmatpush.bf16.xpose.msra.mxu0 0
        %592 = vmatpush.bf16.xpose.msra.mxu0 0
        %593 = vmatpush.bf16.xpose.msra.mxu0 0
        %594 = vmatpush.bf16.xpose.msra.mxu0 0
        %595 = vmatpush.bf16.xpose.msra.mxu0 0
        %596 = vmatpush.bf16.xpose.msra.mxu0 0
        %597 = vmatpush.bf16.xpose.msra.mxu0 %v588
        %598 = vmatmul.bf16.gmra.mxu0 %v585
        %v599 = vpop.f32.mrf.mxu0
        %v600 = vadd.f32 0.0, %v599
        %v601 = vpop.f32.mrf.mxu0
        %602 = vdwg.mxu0
        %v604 = vunpack.c.l.b16 %v577
        %v605 = vpack.c.b16 %v604, %v604
        %606 = vrot.lane.b32.xlu0 %v605, 96
        %v607 = vpop.permute.xlu0 %606
        %v609 = vsel %vm583, %v577, 0
        %v612 = vsel %vm583, %v607, 0
        %614 = vmatpush.bf16.xpose.msra.mxu0 0
        %615 = vmatpush.bf16.xpose.msra.mxu0 0
        %616 = vmatpush.bf16.xpose.msra.mxu0 0
        %617 = vmatpush.bf16.xpose.msra.mxu0 0
        %618 = vmatpush.bf16.xpose.msra.mxu0 0
        %619 = vmatpush.bf16.xpose.msra.mxu0 0
        %620 = vmatpush.bf16.xpose.msra.mxu0 0
        %621 = vmatpush.bf16.xpose.msra.mxu0 %v612
        %622 = vmatmul.bf16.gmra.mxu0 %v609
        %v623 = vpop.f32.mrf.mxu0
        %v624 = vadd.f32 0.0, %v623
        %v625 = vpop.f32.mrf.mxu0
        %626 = vdwg.mxu0
        %v627 = vmul.f32 %v600, 0.35355338
        %v628 = vmul.f32 %v624, 0.35355338
        %v631 = vperm.slane %v574, 0
        %v632 = vperm.slane %v575, 0
        %v635 = vadd.f32 %v627, %v631
        %v636 = vadd.f32 %v628, %v632
        %v637 = vsel %vm583, %v635, -inf
        %638 = vmax.xlane.f32.xlu0 %v637
        %v639 = vpop.xlane.xlu0 %638
        %v640 = vsel %vm583, %v636, -inf
        %641 = vmax.xlane.f32.xlu0 %v640
        %v642 = vpop.xlane.xlu0 %641
        %v643 = vsub.f32 %v635, %v639
        %v644 = vsub.f32 %v636, %v642
        %v645 = vmul.f32 %v643, 1.442695
        %v646 = vpow.pop %v645
        %v647 = vmul.f32 %v644, 1.442695
        %v648 = vpow.pop %v647
        %v649 = vsel %vm583, %v646, 0.0
        %650 = vadd.xlane.f32.xlu0 %v649
        %v651 = vpop.xlane.xlu0 %650
        %v652 = vsel %vm583, %v648, 0.0
        %653 = vadd.xlane.f32.xlu0 %v652
        %v654 = vpop.xlane.xlu0 %653
        %v655 = vpack.c.bf16 %v646, %v646
        %v656 = vpack.c.bf16 %v648, %v648
        %657 = vrot.lane.b32.xlu0 %v580, 64
        %v658 = vpop.permute.xlu0 %657
        %v660 = vsel %vm583, %v655, 0
        %vm662 = vcmask 1043456
        %v664 = vsel %vm662, %v658, 0
        %666 = vmatpush.bf16.msra.mxu0 0
        %667 = vmatpush.bf16.msra.mxu0 0
        %668 = vmatpush.bf16.msra.mxu0 0
        %669 = vmatpush.bf16.msra.mxu0 0
        %670 = vmatpush.bf16.msra.mxu0 0
        %671 = vmatpush.bf16.msra.mxu0 0
        %672 = vmatpush.bf16.msra.mxu0 0
        %673 = vmatpush.bf16.msra.mxu0 %v664
        %674 = vmatmul.bf16.gmra.mxu0 %v660
        %v675 = vpop.f32.mrf.mxu0
        %v676 = vadd.f32 0.0, %v675
        %v677 = vpop.f32.mrf.mxu0
        %678 = vdwg.mxu0
        %679 = vrot.lane.b32.xlu0 %v605, 64
        %v680 = vpop.permute.xlu0 %679
        %v682 = vsel %vm583, %v656, 0
        %v685 = vsel %vm662, %v680, 0
        %687 = vmatpush.bf16.msra.mxu0 0
        %688 = vmatpush.bf16.msra.mxu0 0
        %689 = vmatpush.bf16.msra.mxu0 0
        %690 = vmatpush.bf16.msra.mxu0 0
        %691 = vmatpush.bf16.msra.mxu0 0
        %692 = vmatpush.bf16.msra.mxu0 0
        %693 = vmatpush.bf16.msra.mxu0 0
        %694 = vmatpush.bf16.msra.mxu0 %v685
        %695 = vmatmul.bf16.gmra.mxu0 %v682
        %v696 = vpop.f32.mrf.mxu0
        %v697 = vadd.f32 0.0, %v696
        %v698 = vpop.f32.mrf.mxu0
        %699 = vdwg.mxu0
        %v700 = vrcp.pop %v651
        %v701 = vrcp.pop %v654
        %v702 = vmul.f32 %v676, %v700
        %v703 = vmul.f32 %v697, %v701
        %704 = vrot.lane.b32.xlu0 %v580, 120
        %v705 = vpop.permute.xlu0 %704
        %706 = vrot.lane.b32.xlu0 %v580, 88
        %v707 = vpop.permute.xlu0 %706
        %v709 = vsel %vm583, %v705, 0
        %v712 = vsel %vm583, %v707, 0
        %714 = vmatpush.bf16.xpose.msra.mxu0 0
        %715 = vmatpush.bf16.xpose.msra.mxu0 0
        %716 = vmatpush.bf16.xpose.msra.mxu0 0
        %717 = vmatpush.bf16.xpose.msra.mxu0 0
        %718 = vmatpush.bf16.xpose.msra.mxu0 0
        %719 = vmatpush.bf16.xpose.msra.mxu0 0
        %720 = vmatpush.bf16.xpose.msra.mxu0 0
        %721 = vmatpush.bf16.xpose.msra.mxu0 %v712
        %722 = vmatmul.bf16.gmra.mxu0 %v709
        %v723 = vpop.f32.mrf.mxu0
        %v724 = vadd.f32 0.0, %v723
        %v725 = vpop.f32.mrf.mxu0
        %726 = vdwg.mxu0
        %727 = vrot.lane.b32.xlu0 %v605, 120
        %v728 = vpop.permute.xlu0 %727
        %729 = vrot.lane.b32.xlu0 %v605, 88
        %v730 = vpop.permute.xlu0 %729
        %v732 = vsel %vm583, %v728, 0
        %v735 = vsel %vm583, %v730, 0
        %737 = vmatpush.bf16.xpose.msra.mxu0 0
        %738 = vmatpush.bf16.xpose.msra.mxu0 0
        %739 = vmatpush.bf16.xpose.msra.mxu0 0
        %740 = vmatpush.bf16.xpose.msra.mxu0 0
        %741 = vmatpush.bf16.xpose.msra.mxu0 0
        %742 = vmatpush.bf16.xpose.msra.mxu0 0
        %743 = vmatpush.bf16.xpose.msra.mxu0 0
        %744 = vmatpush.bf16.xpose.msra.mxu0 %v735
        %745 = vmatmul.bf16.gmra.mxu0 %v732
        %v746 = vpop.f32.mrf.mxu0
        %v747 = vadd.f32 0.0, %v746
        %v748 = vpop.f32.mrf.mxu0
        %749 = vdwg.mxu0
        %v750 = vmul.f32 %v724, 0.35355338
        %v751 = vmul.f32 %v747, 0.35355338
        %v752 = vadd.f32 %v750, %v631
        %v753 = vadd.f32 %v751, %v632
        %v754 = vsel %vm583, %v752, -inf
        %755 = vmax.xlane.f32.xlu0 %v754
        %v756 = vpop.xlane.xlu0 %755
        %v757 = vsel %vm583, %v753, -inf
        %758 = vmax.xlane.f32.xlu0 %v757
        %v759 = vpop.xlane.xlu0 %758
        %v760 = vsub.f32 %v752, %v756
        %v761 = vsub.f32 %v753, %v759
        %v762 = vmul.f32 %v760, 1.442695
        %v763 = vpow.pop %v762
        %v764 = vmul.f32 %v761, 1.442695
        %v765 = vpow.pop %v764
        %v766 = vsel %vm583, %v763, 0.0
        %767 = vadd.xlane.f32.xlu0 %v766
        %v768 = vpop.xlane.xlu0 %767
        %v769 = vsel %vm583, %v765, 0.0
        %770 = vadd.xlane.f32.xlu0 %v769
        %v771 = vpop.xlane.xlu0 %770
        %v772 = vpack.c.bf16 %v763, %v763
        %v773 = vpack.c.bf16 %v765, %v765
        %774 = vrot.lane.b32.xlu0 %v580, 56
        %v775 = vpop.permute.xlu0 %774
        %v777 = vsel %vm583, %v772, 0
        %v780 = vsel %vm662, %v775, 0
        %782 = vmatpush.bf16.msra.mxu0 0
        %783 = vmatpush.bf16.msra.mxu0 0
        %784 = vmatpush.bf16.msra.mxu0 0
        %785 = vmatpush.bf16.msra.mxu0 0
        %786 = vmatpush.bf16.msra.mxu0 0
        %787 = vmatpush.bf16.msra.mxu0 0
        %788 = vmatpush.bf16.msra.mxu0 0
        %789 = vmatpush.bf16.msra.mxu0 %v780
        %790 = vmatmul.bf16.gmra.mxu0 %v777
        %v791 = vpop.f32.mrf.mxu0
        %v792 = vadd.f32 0.0, %v791
        %v793 = vpop.f32.mrf.mxu0
        %794 = vdwg.mxu0
        %795 = vrot.lane.b32.xlu0 %v605, 56
        %v796 = vpop.permute.xlu0 %795
        %v798 = vsel %vm583, %v773, 0
        %v801 = vsel %vm662, %v796, 0
        %803 = vmatpush.bf16.msra.mxu0 0
        %804 = vmatpush.bf16.msra.mxu0 0
        %805 = vmatpush.bf16.msra.mxu0 0
        %806 = vmatpush.bf16.msra.mxu0 0
        %807 = vmatpush.bf16.msra.mxu0 0
        %808 = vmatpush.bf16.msra.mxu0 0
        %809 = vmatpush.bf16.msra.mxu0 0
        %810 = vmatpush.bf16.msra.mxu0 %v801
        %811 = vmatmul.bf16.gmra.mxu0 %v798
        %v812 = vpop.f32.mrf.mxu0
        %v813 = vadd.f32 0.0, %v812
        %v814 = vpop.f32.mrf.mxu0
        %815 = vdwg.mxu0
        %v816 = vrcp.pop %v768
        %v817 = vrcp.pop %v771
        %v818 = vmul.f32 %v792, %v816
        %v819 = vmul.f32 %v813, %v817
        %820 = vrot.lane.b32.xlu0 %v580, 112
        %v821 = vpop.permute.xlu0 %820
        %822 = vrot.lane.b32.xlu0 %v580, 80
        %v823 = vpop.permute.xlu0 %822
        %v825 = vsel %vm583, %v821, 0
        %v828 = vsel %vm583, %v823, 0
        %830 = vmatpush.bf16.xpose.msra.mxu0 0
        %831 = vmatpush.bf16.xpose.msra.mxu0 0
        %832 = vmatpush.bf16.xpose.msra.mxu0 0
        %833 = vmatpush.bf16.xpose.msra.mxu0 0
        %834 = vmatpush.bf16.xpose.msra.mxu0 0
        %835 = vmatpush.bf16.xpose.msra.mxu0 0
        %836 = vmatpush.bf16.xpose.msra.mxu0 0
        %837 = vmatpush.bf16.xpose.msra.mxu0 %v828
        %838 = vmatmul.bf16.gmra.mxu0 %v825
        %v839 = vpop.f32.mrf.mxu0
        %v840 = vadd.f32 0.0, %v839
        %v841 = vpop.f32.mrf.mxu0
        %842 = vdwg.mxu0
        %843 = vrot.lane.b32.xlu0 %v605, 112
        %v844 = vpop.permute.xlu0 %843
        %845 = vrot.lane.b32.xlu0 %v605, 80
        %v846 = vpop.permute.xlu0 %845
        %v848 = vsel %vm583, %v844, 0
        %v851 = vsel %vm583, %v846, 0
        %853 = vmatpush.bf16.xpose.msra.mxu0 0
        %854 = vmatpush.bf16.xpose.msra.mxu0 0
        %855 = vmatpush.bf16.xpose.msra.mxu0 0
        %856 = vmatpush.bf16.xpose.msra.mxu0 0
        %857 = vmatpush.bf16.xpose.msra.mxu0 0
        %858 = vmatpush.bf16.xpose.msra.mxu0 0
        %859 = vmatpush.bf16.xpose.msra.mxu0 0
        %860 = vmatpush.bf16.xpose.msra.mxu0 %v851
        %861 = vmatmul.bf16.gmra.mxu0 %v848
        %v862 = vpop.f32.mrf.mxu0
        %v863 = vadd.f32 0.0, %v862
        %v864 = vpop.f32.mrf.mxu0
        %865 = vdwg.mxu0
        %v866 = vmul.f32 %v840, 0.35355338
        %v867 = vmul.f32 %v863, 0.35355338
        %v868 = vadd.f32 %v866, %v631
        %v869 = vadd.f32 %v867, %v632
        %v870 = vsel %vm583, %v868, -inf
        %871 = vmax.xlane.f32.xlu0 %v870
        %v872 = vpop.xlane.xlu0 %871
        %v873 = vsel %vm583, %v869, -inf
        %874 = vmax.xlane.f32.xlu0 %v873
        %v875 = vpop.xlane.xlu0 %874
        %v876 = vsub.f32 %v868, %v872
        %v877 = vsub.f32 %v869, %v875
        %v878 = vmul.f32 %v876, 1.442695
        %v879 = vpow.pop %v878
        %v880 = vmul.f32 %v877, 1.442695
        %v881 = vpow.pop %v880
        %v882 = vsel %vm583, %v879, 0.0
        %883 = vadd.xlane.f32.xlu0 %v882
        %v884 = vpop.xlane.xlu0 %883
        %v885 = vsel %vm583, %v881, 0.0
        %886 = vadd.xlane.f32.xlu0 %v885
        %v887 = vpop.xlane.xlu0 %886
        %v888 = vpack.c.bf16 %v879, %v879
        %v889 = vpack.c.bf16 %v881, %v881
        %890 = vrot.lane.b32.xlu0 %v580, 48
        %v891 = vpop.permute.xlu0 %890
        %v893 = vsel %vm583, %v888, 0
        %v896 = vsel %vm662, %v891, 0
        %898 = vmatpush.bf16.msra.mxu0 0
        %899 = vmatpush.bf16.msra.mxu0 0
        %900 = vmatpush.bf16.msra.mxu0 0
        %901 = vmatpush.bf16.msra.mxu0 0
        %902 = vmatpush.bf16.msra.mxu0 0
        %903 = vmatpush.bf16.msra.mxu0 0
        %904 = vmatpush.bf16.msra.mxu0 0
        %905 = vmatpush.bf16.msra.mxu0 %v896
        %906 = vmatmul.bf16.gmra.mxu0 %v893
        %v907 = vpop.f32.mrf.mxu0
        %v908 = vadd.f32 0.0, %v907
        %v909 = vpop.f32.mrf.mxu0
        %910 = vdwg.mxu0
        %911 = vrot.lane.b32.xlu0 %v605, 48
        %v912 = vpop.permute.xlu0 %911
        %v914 = vsel %vm583, %v889, 0
        %v917 = vsel %vm662, %v912, 0
        %919 = vmatpush.bf16.msra.mxu0 0
        %920 = vmatpush.bf16.msra.mxu0 0
        %921 = vmatpush.bf16.msra.mxu0 0
        %922 = vmatpush.bf16.msra.mxu0 0
        %923 = vmatpush.bf16.msra.mxu0 0
        %924 = vmatpush.bf16.msra.mxu0 0
        %925 = vmatpush.bf16.msra.mxu0 0
        %926 = vmatpush.bf16.msra.mxu0 %v917
        %927 = vmatmul.bf16.gmra.mxu0 %v914
        %v928 = vpop.f32.mrf.mxu0
        %v929 = vadd.f32 0.0, %v928
        %v930 = vpop.f32.mrf.mxu0
        %931 = vdwg.mxu0
        %v932 = vrcp.pop %v884
        %v933 = vrcp.pop %v887
        %v934 = vmul.f32 %v908, %v932
        %v935 = vmul.f32 %v929, %v933
        %936 = vrot.lane.b32.xlu0 %v580, 104
        %v937 = vpop.permute.xlu0 %936
        %938 = vrot.lane.b32.xlu0 %v580, 72
        %v939 = vpop.permute.xlu0 %938
        %v941 = vsel %vm583, %v937, 0
        %v944 = vsel %vm583, %v939, 0
        %946 = vmatpush.bf16.xpose.msra.mxu0 0
        %947 = vmatpush.bf16.xpose.msra.mxu0 0
        %948 = vmatpush.bf16.xpose.msra.mxu0 0
        %949 = vmatpush.bf16.xpose.msra.mxu0 0
        %950 = vmatpush.bf16.xpose.msra.mxu0 0
        %951 = vmatpush.bf16.xpose.msra.mxu0 0
        %952 = vmatpush.bf16.xpose.msra.mxu0 0
        %953 = vmatpush.bf16.xpose.msra.mxu0 %v944
        %954 = vmatmul.bf16.gmra.mxu0 %v941
        %v955 = vpop.f32.mrf.mxu0
        %v956 = vadd.f32 0.0, %v955
        %v957 = vpop.f32.mrf.mxu0
        %958 = vdwg.mxu0
        %959 = vrot.lane.b32.xlu0 %v605, 104
        %v960 = vpop.permute.xlu0 %959
        %961 = vrot.lane.b32.xlu0 %v605, 72
        %v962 = vpop.permute.xlu0 %961
        %v964 = vsel %vm583, %v960, 0
        %v967 = vsel %vm583, %v962, 0
        %969 = vmatpush.bf16.xpose.msra.mxu0 0
        %970 = vmatpush.bf16.xpose.msra.mxu0 0
        %971 = vmatpush.bf16.xpose.msra.mxu0 0
        %972 = vmatpush.bf16.xpose.msra.mxu0 0
        %973 = vmatpush.bf16.xpose.msra.mxu0 0
        %974 = vmatpush.bf16.xpose.msra.mxu0 0
        %975 = vmatpush.bf16.xpose.msra.mxu0 0
        %976 = vmatpush.bf16.xpose.msra.mxu0 %v967
        %977 = vmatmul.bf16.gmra.mxu0 %v964
        %v978 = vpop.f32.mrf.mxu0
        %v979 = vadd.f32 0.0, %v978
        %v980 = vpop.f32.mrf.mxu0
        %981 = vdwg.mxu0
        %v982 = vmul.f32 %v956, 0.35355338
        %v983 = vmul.f32 %v979, 0.35355338
        %v984 = vadd.f32 %v982, %v631
        %v985 = vadd.f32 %v983, %v632
        %v986 = vsel %vm583, %v984, -inf
        %987 = vmax.xlane.f32.xlu0 %v986
        %v988 = vpop.xlane.xlu0 %987
        %v989 = vsel %vm583, %v985, -inf
        %990 = vmax.xlane.f32.xlu0 %v989
        %v991 = vpop.xlane.xlu0 %990
        %v992 = vsub.f32 %v984, %v988
        %v993 = vsub.f32 %v985, %v991
        %v994 = vmul.f32 %v992, 1.442695
        %v995 = vpow.pop %v994
        %v996 = vmul.f32 %v993, 1.442695
        %v997 = vpow.pop %v996
        %v998 = vsel %vm583, %v995, 0.0
        %999 = vadd.xlane.f32.xlu0 %v998
        %v1000 = vpop.xlane.xlu0 %999
        %v1001 = vsel %vm583, %v997, 0.0
        %1002 = vadd.xlane.f32.xlu0 %v1001
        %v1003 = vpop.xlane.xlu0 %1002
        %v1004 = vpack.c.bf16 %v995, %v995
        %v1005 = vpack.c.bf16 %v997, %v997
        %1006 = vrot.lane.b32.xlu0 %v580, 40
        %v1007 = vpop.permute.xlu0 %1006
        %v1009 = vsel %vm583, %v1004, 0
        %v1012 = vsel %vm662, %v1007, 0
        %1014 = vmatpush.bf16.msra.mxu0 0
        %1015 = vmatpush.bf16.msra.mxu0 0
        %1016 = vmatpush.bf16.msra.mxu0 0
        %1017 = vmatpush.bf16.msra.mxu0 0
        %1018 = vmatpush.bf16.msra.mxu0 0
        %1019 = vmatpush.bf16.msra.mxu0 0
        %1020 = vmatpush.bf16.msra.mxu0 0
        %1021 = vmatpush.bf16.msra.mxu0 %v1012
        %1022 = vmatmul.bf16.gmra.mxu0 %v1009
        %v1023 = vpop.f32.mrf.mxu0
        %v1024 = vadd.f32 0.0, %v1023
        %v1025 = vpop.f32.mrf.mxu0
        %1026 = vdwg.mxu0
        %1027 = vrot.lane.b32.xlu0 %v605, 40
        %v1028 = vpop.permute.xlu0 %1027
        %v1030 = vsel %vm583, %v1005, 0
        %v1033 = vsel %vm662, %v1028, 0
        %1035 = vmatpush.bf16.msra.mxu0 0
        %1036 = vmatpush.bf16.msra.mxu0 0
        %1037 = vmatpush.bf16.msra.mxu0 0
        %1038 = vmatpush.bf16.msra.mxu0 0
        %1039 = vmatpush.bf16.msra.mxu0 0
        %1040 = vmatpush.bf16.msra.mxu0 0
        %1041 = vmatpush.bf16.msra.mxu0 0
        %1042 = vmatpush.bf16.msra.mxu0 %v1033
        %1043 = vmatmul.bf16.gmra.mxu0 %v1030
        %v1044 = vpop.f32.mrf.mxu0
        %v1045 = vadd.f32 0.0, %v1044
        %v1046 = vpop.f32.mrf.mxu0
        %1047 = vdwg.mxu0
        %v1048 = vrcp.pop %v1000
        %v1049 = vrcp.pop %v1003
        %v1050 = vmul.f32 %v1024, %v1048
        %v1051 = vmul.f32 %v1045, %v1049
        %1054 = vrot.lane.b32.xlu0 %v818, 8
        %v1055 = vpop.permute.xlu0 %1054
        %1056 = vrot.lane.b32.xlu0 %v819, 8
        %v1057 = vpop.permute.xlu0 %1056
        %1062 = vrot.lane.b32.xlu0 %v934, 16
        %v1063 = vpop.permute.xlu0 %1062
        %1064 = vrot.lane.b32.xlu0 %v935, 16
        %v1065 = vpop.permute.xlu0 %1064
        %1070 = vrot.lane.b32.xlu0 %v1050, 24
        %v1071 = vpop.permute.xlu0 %1070
        %1072 = vrot.lane.b32.xlu0 %v1051, 24
        %v1073 = vpop.permute.xlu0 %1072
        %v1076 = vsel %vm583, %v702, %v1055
        %v1077 = vsel %vm583, %v703, %v1057
        %vm1078 = vcmask 130048
        %v1079 = vsel %vm1078, %v1076, %v1063
        %v1080 = vsel %vm1078, %v1077, %v1065
        %vm1081 = vcmask 195584
        %v1082 = vsel %vm1081, %v1079, %v1071
        %v1083 = vsel %vm1081, %v1080, %v1073
        %v1084 = vpack.c.bf16 %v1083, %v1082
        %v1085 = vld [vmem:[%s4] sm:$0xf]
        %v1086 = vld [vmem:[%s4 + $0x4] sm:$0xf]
        %v1087 = vld [vmem:[%s4 + $0x8] sm:$0xf]
        %v1088 = vld [vmem:[%s4 + $0xc] sm:$0xf]
        %v1089 = vld [vmem:[%s5] sm:$0x1]
        %v1091 = vperm.slane %v1089, 0
        %v1097 = vunpack.c.l.b16 %v1085
        %v1098 = vunpack.c.l.b16 %v1086
        %v1099 = vunpack.c.l.b16 %v1087
        %v1100 = vunpack.c.l.b16 %v1088
        %v1101 = vpack.c.b16 %v1098, %v1097
        %v1102 = vpack.c.b16 %v1100, %v1099
        %vm1105 = vcmask 261120
        %v1107 = vsel %vm1105, %v1084, 0
        %1109 = vmatpush.bf16.msra.mxu0 0
        %1110 = vmatpush.bf16.msra.mxu0 0
        %1111 = vmatpush.bf16.msra.mxu0 0
        %1112 = vmatpush.bf16.msra.mxu0 0
        %1113 = vmatpush.bf16.msra.mxu0 0
        %1114 = vmatpush.bf16.msra.mxu0 0
        %1115 = vmatpush.bf16.msra.mxu0 %v1102
        %1116 = vmatpush.bf16.msra.mxu0 %v1101
        %1117 = vmatmul.bf16.gmra.mxu0 %v1107
        %v1118 = vpop.f32.mrf.mxu0
        %v1119 = vadd.f32 %v1091, %v1118
        %v1120 = vpop.f32.mrf.mxu0
        %v1121 = vadd.f32 %v1091, %v1120
        %1122 = vdwg.mxu0
        %v1123 = vadd.f32 %v489, %v1119
        %v1124 = vadd.f32 %v490, %v1121
        %1125 = vadd.xlane.f32.xlu0 %v1123
        %v1126 = vpop.xlane.xlu0 %1125
        %1127 = vadd.xlane.f32.xlu0 %v1124
        %v1128 = vpop.xlane.xlu0 %1127
        %v1129 = vmul.f32 %v1126, 0.03125
        %v1130 = vmul.f32 %v1128, 0.03125
        %v1131 = vmul.f32 %v1123, %v1123
        %v1132 = vmul.f32 %v1124, %v1124
        %1133 = vadd.xlane.f32.xlu0 %v1131
        %v1134 = vpop.xlane.xlu0 %1133
        %1135 = vadd.xlane.f32.xlu0 %v1132
        %v1136 = vpop.xlane.xlu0 %1135
        %v1137 = vmul.f32 %v1134, 0.03125
        %v1138 = vmul.f32 %v1136, 0.03125
        %v1139 = vmul.f32 %v1129, %v1129
        %v1140 = vmul.f32 %v1130, %v1130
        %v1141 = vsub.f32 %v1137, %v1139
        %v1142 = vsub.f32 %v1138, %v1140
        %v1143 = vsub.f32 %v1123, %v1129
        %v1144 = vsub.f32 %v1124, %v1130
        %v1145 = vadd.f32 %v1141, 1e-05
        %v1146 = vadd.f32 %v1142, 1e-05
        %v1147 = vrsqrt.pop %v1145
        %v1148 = vmul.f32 %v1147, %v1145
        %v1149 = vmul.f32 %v1148, %v1147
        %v1150 = vmul.f32 0.5, %v1149
        %v1151 = vsub.f32 1.5, %v1150
        %v1152 = vmul.f32 %v1147, %v1151
        %vm1153 = vweird.f32 %v1145
        %vm1154 = vweird.f32 %v1147
        %vm1155 = vmor %vm1153, %vm1154
        %v1156 = vsel %vm1155, %v1147, %v1152
        %v1157 = vrsqrt.pop %v1146
        %v1158 = vmul.f32 %v1157, %v1146
        %v1159 = vmul.f32 %v1158, %v1157
        %v1160 = vmul.f32 0.5, %v1159
        %v1161 = vsub.f32 1.5, %v1160
        %v1162 = vmul.f32 %v1157, %v1161
        %vm1163 = vweird.f32 %v1146
        %vm1164 = vweird.f32 %v1157
        %vm1165 = vmor %vm1163, %vm1164
        %v1166 = vsel %vm1165, %v1157, %v1162
        %v1167 = vmul.f32 %v1143, %v1156
        %v1168 = vmul.f32 %v1144, %v1166
        %v1169 = vld [vmem:[%s6] sm:$0x1]
        %v1171 = vperm.slane %v1169, 0
        %v1173 = vmul.f32 %v1167, %v1171
        %v1174 = vmul.f32 %v1168, %v1171
        %v1175 = vld [vmem:[%s7] sm:$0x1]
        %v1177 = vperm.slane %v1175, 0
        %v1179 = vadd.f32 %v1173, %v1177
        %v1180 = vadd.f32 %v1174, %v1177
        %1181 = vst [vmem:[#allocation2] sm:$0x1] 0.0
        %1182 = vst [vmem:[#allocation2 + $0x10] sm:$0x1] 0.0
        %1183 = vst [vmem:[#allocation2 + $0x9] sm:$0x1] 0.0
        %1184 = vst [vmem:[#allocation2 + $0x19] sm:$0x1] 0.0
        %1185 = vst [vmem:[#allocation2 + $0x1] sm:$0xff] %v1179
        %1186 = vst [vmem:[#allocation2 + $0x11] sm:$0xff] %v1180
        %v1187 = vld [vmem:[%s9] sm:$0x1]
        %v1189 = vperm.slane %v1187, 0
        %v1191 = vld [vmem:[#allocation2] sm:$0xff]
        %v1192 = vld [vmem:[#allocation2 + $0x10] sm:$0xff]
        %v1193 = vpack.c.bf16 %v1192, %v1191
        %v1194 = vld [vmem:[%s8] sm:$0xf]
        %v1195 = vld [vmem:[%s8 + $0x4] sm:$0xf]
        %v1196 = vld [vmem:[%s8 + $0x8] sm:$0xf]
        %v1197 = vld [vmem:[%s8 + $0xc] sm:$0xf]
        %v1198 = vld [vmem:[%s8 + $0x10] sm:$0xf]
        %v1199 = vld [vmem:[%s8 + $0x14] sm:$0xf]
        %v1200 = vld [vmem:[%s8 + $0x18] sm:$0xf]
        %v1201 = vld [vmem:[%s8 + $0x1c] sm:$0xf]
        %v1202 = vld [vmem:[%s8 + $0x20] sm:$0xf]
        %v1203 = vld [vmem:[%s8 + $0x24] sm:$0xf]
        %v1204 = vld [vmem:[%s8 + $0x28] sm:$0xf]
        %v1205 = vld [vmem:[%s8 + $0x2c] sm:$0xf]
        %v1206 = vld [vmem:[%s8 + $0x30] sm:$0xf]
        %v1207 = vld [vmem:[%s8 + $0x34] sm:$0xf]
        %v1208 = vld [vmem:[%s8 + $0x38] sm:$0xf]
        %v1209 = vld [vmem:[%s8 + $0x3c] sm:$0xf]
        %v1226 = vunpack.c.l.b16 %v1194
        %v1227 = vunpack.c.l.b16 %v1195
        %v1228 = vunpack.c.l.b16 %v1196
        %v1229 = vunpack.c.l.b16 %v1197
        %v1230 = vunpack.c.l.b16 %v1198
        %v1231 = vunpack.c.l.b16 %v1199
        %v1232 = vunpack.c.l.b16 %v1200
        %v1233 = vunpack.c.l.b16 %v1201
        %v1234 = vunpack.c.l.b16 %v1202
        %v1235 = vunpack.c.l.b16 %v1203
        %v1236 = vunpack.c.l.b16 %v1204
        %v1237 = vunpack.c.l.b16 %v1205
        %v1238 = vunpack.c.l.b16 %v1206
        %v1239 = vunpack.c.l.b16 %v1207
        %v1240 = vunpack.c.l.b16 %v1208
        %v1241 = vunpack.c.l.b16 %v1209
        %v1242 = vpack.c.b16 %v1227, %v1226
        %v1243 = vpack.c.b16 %v1229, %v1228
        %v1244 = vpack.c.b16 %v1231, %v1230
        %v1245 = vpack.c.b16 %v1233, %v1232
        %v1246 = vpack.c.b16 %v1235, %v1234
        %v1247 = vpack.c.b16 %v1237, %v1236
        %v1248 = vpack.c.b16 %v1239, %v1238
        %v1249 = vpack.c.b16 %v1241, %v1240
        %1258 = vmatpush.bf16.msra.mxu0 %v1249
        %1259 = vmatpush.bf16.msra.mxu0 %v1248
        %1260 = vmatpush.bf16.msra.mxu0 %v1247
        %1261 = vmatpush.bf16.msra.mxu0 %v1246
        %1262 = vmatpush.bf16.msra.mxu0 %v1245
        %1263 = vmatpush.bf16.msra.mxu0 %v1244
        %1264 = vmatpush.bf16.msra.mxu0 %v1243
        %1265 = vmatpush.bf16.msra.mxu0 %v1242
        %1266 = vmatmul.bf16.gmra.mxu0 %v1193
        %v1267 = vpop.f32.mrf.mxu0
        %v1268 = vadd.f32 0.0, %v1267
        %v1269 = vpop.f32.mrf.mxu0
        %v1270 = vadd.f32 0.0, %v1269
        %1271 = vdwg.mxu0
        %v1272 = vadd.f32 %v1189, %v1268
        %v1273 = vadd.f32 %v1189, %v1270
        %v1274 = vld [vmem:[#allocation2 + $0x1] sm:$0xff]
        %v1275 = vld [vmem:[#allocation2 + $0x11] sm:$0xff]
        %v1276 = vpack.c.bf16 %v1275, %v1274
        %s1277 = scalar_lea.vmem %s8, 64
        %v1278 = vld [vmem:[%s1277] sm:$0xf]
        %v1279 = vld [vmem:[%s1277 + $0x4] sm:$0xf]
        %v1280 = vld [vmem:[%s1277 + $0x8] sm:$0xf]
        %v1281 = vld [vmem:[%s1277 + $0xc] sm:$0xf]
        %v1282 = vld [vmem:[%s1277 + $0x10] sm:$0xf]
        %v1283 = vld [vmem:[%s1277 + $0x14] sm:$0xf]
        %v1284 = vld [vmem:[%s1277 + $0x18] sm:$0xf]
        %v1285 = vld [vmem:[%s1277 + $0x1c] sm:$0xf]
        %v1286 = vld [vmem:[%s1277 + $0x20] sm:$0xf]
        %v1287 = vld [vmem:[%s1277 + $0x24] sm:$0xf]
        %v1288 = vld [vmem:[%s1277 + $0x28] sm:$0xf]
        %v1289 = vld [vmem:[%s1277 + $0x2c] sm:$0xf]
        %v1290 = vld [vmem:[%s1277 + $0x30] sm:$0xf]
        %v1291 = vld [vmem:[%s1277 + $0x34] sm:$0xf]
        %v1292 = vld [vmem:[%s1277 + $0x38] sm:$0xf]
        %v1293 = vld [vmem:[%s1277 + $0x3c] sm:$0xf]
        %v1310 = vunpack.c.l.b16 %v1278
        %v1311 = vunpack.c.l.b16 %v1279
        %v1312 = vunpack.c.l.b16 %v1280
        %v1313 = vunpack.c.l.b16 %v1281
        %v1314 = vunpack.c.l.b16 %v1282
        %v1315 = vunpack.c.l.b16 %v1283
        %v1316 = vunpack.c.l.b16 %v1284
        %v1317 = vunpack.c.l.b16 %v1285
        %v1318 = vunpack.c.l.b16 %v1286
        %v1319 = vunpack.c.l.b16 %v1287
        %v1320 = vunpack.c.l.b16 %v1288
        %v1321 = vunpack.c.l.b16 %v1289
        %v1322 = vunpack.c.l.b16 %v1290
        %v1323 = vunpack.c.l.b16 %v1291
        %v1324 = vunpack.c.l.b16 %v1292
        %v1325 = vunpack.c.l.b16 %v1293
        %v1326 = vpack.c.b16 %v1311, %v1310
        %v1327 = vpack.c.b16 %v1313, %v1312
        %v1328 = vpack.c.b16 %v1315, %v1314
        %v1329 = vpack.c.b16 %v1317, %v1316
        %v1330 = vpack.c.b16 %v1319, %v1318
        %v1331 = vpack.c.b16 %v1321, %v1320
        %v1332 = vpack.c.b16 %v1323, %v1322
        %v1333 = vpack.c.b16 %v1325, %v1324
        %1342 = vmatpush.bf16.msra.mxu0 %v1333
        %1343 = vmatpush.bf16.msra.mxu0 %v1332
        %1344 = vmatpush.bf16.msra.mxu0 %v1331
        %1345 = vmatpush.bf16.msra.mxu0 %v1330
        %1346 = vmatpush.bf16.msra.mxu0 %v1329
        %1347 = vmatpush.bf16.msra.mxu0 %v1328
        %1348 = vmatpush.bf16.msra.mxu0 %v1327
        %1349 = vmatpush.bf16.msra.mxu0 %v1326
        %1350 = vmatmul.bf16.gmra.mxu0 %v1276
        %v1351 = vpop.f32.mrf.mxu0
        %v1352 = vadd.f32 0.0, %v1351
        %v1353 = vpop.f32.mrf.mxu0
        %v1354 = vadd.f32 0.0, %v1353
        %1355 = vdwg.mxu0
        %v1356 = vadd.f32 %v1272, %v1352
        %v1357 = vadd.f32 %v1273, %v1354
        %v1358 = vld [vmem:[#allocation2 + $0x2] sm:$0xff]
        %v1359 = vld [vmem:[#allocation2 + $0x12] sm:$0xff]
        %v1360 = vpack.c.bf16 %v1359, %v1358
        %s1361 = scalar_lea.vmem %s8, 128
        %v1362 = vld [vmem:[%s1361] sm:$0xf]
        %v1363 = vld [vmem:[%s1361 + $0x4] sm:$0xf]
        %v1364 = vld [vmem:[%s1361 + $0x8] sm:$0xf]
        %v1365 = vld [vmem:[%s1361 + $0xc] sm:$0xf]
        %v1366 = vld [vmem:[%s1361 + $0x10] sm:$0xf]
        %v1367 = vld [vmem:[%s1361 + $0x14] sm:$0xf]
        %v1368 = vld [vmem:[%s1361 + $0x18] sm:$0xf]
        %v1369 = vld [vmem:[%s1361 + $0x1c] sm:$0xf]
        %v1370 = vld [vmem:[%s1361 + $0x20] sm:$0xf]
        %v1371 = vld [vmem:[%s1361 + $0x24] sm:$0xf]
        %v1372 = vld [vmem:[%s1361 + $0x28] sm:$0xf]
        %v1373 = vld [vmem:[%s1361 + $0x2c] sm:$0xf]
        %v1374 = vld [vmem:[%s1361 + $0x30] sm:$0xf]
        %v1375 = vld [vmem:[%s1361 + $0x34] sm:$0xf]
        %v1376 = vld [vmem:[%s1361 + $0x38] sm:$0xf]
        %v1377 = vld [vmem:[%s1361 + $0x3c] sm:$0xf]
        %v1394 = vunpack.c.l.b16 %v1362
        %v1395 = vunpack.c.l.b16 %v1363
        %v1396 = vunpack.c.l.b16 %v1364
        %v1397 = vunpack.c.l.b16 %v1365
        %v1398 = vunpack.c.l.b16 %v1366
        %v1399 = vunpack.c.l.b16 %v1367
        %v1400 = vunpack.c.l.b16 %v1368
        %v1401 = vunpack.c.l.b16 %v1369
        %v1402 = vunpack.c.l.b16 %v1370
        %v1403 = vunpack.c.l.b16 %v1371
        %v1404 = vunpack.c.l.b16 %v1372
        %v1405 = vunpack.c.l.b16 %v1373
        %v1406 = vunpack.c.l.b16 %v1374
        %v1407 = vunpack.c.l.b16 %v1375
        %v1408 = vunpack.c.l.b16 %v1376
        %v1409 = vunpack.c.l.b16 %v1377
        %v1410 = vpack.c.b16 %v1395, %v1394
        %v1411 = vpack.c.b16 %v1397, %v1396
        %v1412 = vpack.c.b16 %v1399, %v1398
        %v1413 = vpack.c.b16 %v1401, %v1400
        %v1414 = vpack.c.b16 %v1403, %v1402
        %v1415 = vpack.c.b16 %v1405, %v1404
        %v1416 = vpack.c.b16 %v1407, %v1406
        %v1417 = vpack.c.b16 %v1409, %v1408
        %1426 = vmatpush.bf16.msra.mxu0 %v1417
        %1427 = vmatpush.bf16.msra.mxu0 %v1416
        %1428 = vmatpush.bf16.msra.mxu0 %v1415
        %1429 = vmatpush.bf16.msra.mxu0 %v1414
        %1430 = vmatpush.bf16.msra.mxu0 %v1413
        %1431 = vmatpush.bf16.msra.mxu0 %v1412
        %1432 = vmatpush.bf16.msra.mxu0 %v1411
        %1433 = vmatpush.bf16.msra.mxu0 %v1410
        %1434 = vmatmul.bf16.gmra.mxu0 %v1360
        %v1435 = vpop.f32.mrf.mxu0
        %v1436 = vadd.f32 0.0, %v1435
        %v1437 = vpop.f32.mrf.mxu0
        %v1438 = vadd.f32 0.0, %v1437
        %1439 = vdwg.mxu0
        %v1440 = vadd.f32 %v1356, %v1436
        %v1441 = vadd.f32 %v1357, %v1438
        %v1442 = vmax.f32 %v1440, 0.0
        %v1443 = vmax.f32 %v1441, 0.0
        %v1444 = vpack.c.bf16 %v1443, %v1442
        %v1445 = vld [vmem:[%s10] sm:$0xf]
        %v1446 = vld [vmem:[%s10 + $0x4] sm:$0xf]
        %v1447 = vld [vmem:[%s10 + $0x8] sm:$0xf]
        %v1448 = vld [vmem:[%s10 + $0xc] sm:$0xf]
        %v1449 = vld [vmem:[%s10 + $0x10] sm:$0xf]
        %v1450 = vld [vmem:[%s10 + $0x14] sm:$0xf]
        %v1451 = vld [vmem:[%s10 + $0x18] sm:$0xf]
        %v1452 = vld [vmem:[%s10 + $0x1c] sm:$0xf]
        %v1453 = vld [vmem:[%s11] sm:$0x1]
        %v1455 = vperm.slane %v1453, 0
        %v1465 = vunpack.c.l.b16 %v1445
        %v1466 = vunpack.c.l.b16 %v1446
        %v1467 = vunpack.c.l.b16 %v1447
        %v1468 = vunpack.c.l.b16 %v1448
        %v1469 = vunpack.c.l.b16 %v1449
        %v1470 = vunpack.c.l.b16 %v1450
        %v1471 = vunpack.c.l.b16 %v1451
        %v1472 = vunpack.c.l.b16 %v1452
        %v1473 = vpack.c.b16 %v1466, %v1465
        %v1474 = vpack.c.b16 %v1468, %v1467
        %v1475 = vpack.c.b16 %v1470, %v1469
        %v1476 = vpack.c.b16 %v1472, %v1471
        %vm1481 = vcmask 523264
        %v1483 = vsel %vm1481, %v1444, 0
        %1485 = vmatpush.bf16.msra.mxu0 0
        %1486 = vmatpush.bf16.msra.mxu0 0
        %1487 = vmatpush.bf16.msra.mxu0 0
        %1488 = vmatpush.bf16.msra.mxu0 0
        %1489 = vmatpush.bf16.msra.mxu0 %v1476
        %1490 = vmatpush.bf16.msra.mxu0 %v1475
        %1491 = vmatpush.bf16.msra.mxu0 %v1474
        %1492 = vmatpush.bf16.msra.mxu0 %v1473
        %1493 = vmatmul.bf16.gmra.mxu0 %v1483
        %v1494 = vpop.f32.mrf.mxu0
        %v1495 = vadd.f32 %v1455, %v1494
        %v1496 = vpop.f32.mrf.mxu0
        %v1497 = vadd.f32 %v1455, %v1496
        %1498 = vdwg.mxu0
        %v1499 = vadd.f32 %v1179, %v1495
        %v1500 = vadd.f32 %v1180, %v1497
        %1501 = vadd.xlane.f32.xlu0 %v1499
        %v1502 = vpop.xlane.xlu0 %1501
        %1503 = vadd.xlane.f32.xlu0 %v1500
        %v1504 = vpop.xlane.xlu0 %1503
        %v1505 = vmul.f32 %v1502, 0.03125
        %v1506 = vmul.f32 %v1504, 0.03125
        %v1507 = vmul.f32 %v1499, %v1499
        %v1508 = vmul.f32 %v1500, %v1500
        %1509 = vadd.xlane.f32.xlu0 %v1507
        %v1510 = vpop.xlane.xlu0 %1509
        %1511 = vadd.xlane.f32.xlu0 %v1508
        %v1512 = vpop.xlane.xlu0 %1511
        %v1513 = vmul.f32 %v1510, 0.03125
        %v1514 = vmul.f32 %v1512, 0.03125
        %v1515 = vmul.f32 %v1505, %v1505
        %v1516 = vmul.f32 %v1506, %v1506
        %v1517 = vsub.f32 %v1513, %v1515
        %v1518 = vsub.f32 %v1514, %v1516
        %v1519 = vsub.f32 %v1499, %v1505
        %v1520 = vsub.f32 %v1500, %v1506
        %v1521 = vadd.f32 %v1517, 1e-05
        %v1522 = vadd.f32 %v1518, 1e-05
        %v1523 = vrsqrt.pop %v1521
        %v1524 = vmul.f32 %v1523, %v1521
        %v1525 = vmul.f32 %v1524, %v1523
        %v1526 = vmul.f32 0.5, %v1525
        %v1527 = vsub.f32 1.5, %v1526
        %v1528 = vmul.f32 %v1523, %v1527
        %vm1529 = vweird.f32 %v1521
        %vm1530 = vweird.f32 %v1523
        %vm1531 = vmor %vm1529, %vm1530
        %v1532 = vsel %vm1531, %v1523, %v1528
        %v1533 = vrsqrt.pop %v1522
        %v1534 = vmul.f32 %v1533, %v1522
        %v1535 = vmul.f32 %v1534, %v1533
        %v1536 = vmul.f32 0.5, %v1535
        %v1537 = vsub.f32 1.5, %v1536
        %v1538 = vmul.f32 %v1533, %v1537
        %vm1539 = vweird.f32 %v1522
        %vm1540 = vweird.f32 %v1533
        %vm1541 = vmor %vm1539, %vm1540
        %v1542 = vsel %vm1541, %v1533, %v1538
        %v1543 = vmul.f32 %v1519, %v1532
        %v1544 = vmul.f32 %v1520, %v1542
        %v1545 = vld [vmem:[%s12] sm:$0x1]
        %v1547 = vperm.slane %v1545, 0
        %v1549 = vmul.f32 %v1543, %v1547
        %v1550 = vmul.f32 %v1544, %v1547
        %v1551 = vld [vmem:[%s13] sm:$0x1]
        %v1553 = vperm.slane %v1551, 0
        %v1555 = vadd.f32 %v1549, %v1553
        %v1556 = vadd.f32 %v1550, %v1553
        %1557 = vst [vmem:[%s475] sm:$0xff] %v1555
        %1558 = vst [vmem:[%s475 + $0x8] sm:$0xff] %v1556
        %s1559 = sand.u32 %s340, 1
        %s1560 = scalar_lea.sflag [#allocation4], %s1559
        %s1561 = sand.u32 %s340, 1
        %s1562 = smul.addr %s1561, 16
        %s1563 = scalar_lea.vmem [#allocation3], %s1562
        // Predicated region
        $region77: #{tpu_custom_call.1} parent=75 // pred_check
          %p1564 = pneg %p350
        $region78: #{tpu_custom_call.1} parent=75 // pred_check_branch
          %1566 = sbr.rel (%p1564) target = $region80
        $region79: #{tpu_custom_call.1} parent=75 // pred_region
          %s1567 = smul.u32 2, %s28
          %1569 = vsyncadd %s1560, 0
          %s1570 = smul.addr %s1567, 8
          %s1571 = scalar_lea.hbm %s14, %s1570
          %s1572 = sshll.u32 %s1563, 4
          %s1573 = int_to_ptr.vmem [resolvable:$true] %s1572
          %s1574 = sshll.u32 %s1571, 4
          %s1575 = int_to_ptr.hbm [resolvable:$true] %s1574
          %1580 = dma.vmem_to_hbm [thread:$0]  %s1573, 256, %s1575, %s1560, 128, 128, 8
        $region80: #{tpu_custom_call.1} parent=75 // pred_fallthru
          _
      $region76: #{tpu_custom_call.1} parent=5 // pred_fallthru
        _
      %p1581 = scmp.le.s32.totalorder 2, %s23
      // Predicated region
      $region81: #{tpu_custom_call.1} parent=5 // pred_check
        %p1582 = pneg %p1581
      $region82: #{tpu_custom_call.1} parent=5 // pred_check_branch
        %1584 = sbr.rel (%p1582) target = $region84
      $region83: #{tpu_custom_call.1} parent=5 // pred_region
        %s1585 = ssub.s32 %s23, 2
        // Predicated region
        $region85: #{tpu_custom_call.1} parent=83 // pred_check
          %p1586 = pneg %p356
        $region86: #{tpu_custom_call.1} parent=83 // pred_check_branch
          %1588 = sbr.rel (%p1586) target = $region88
        $region87: #{tpu_custom_call.1} parent=83 // pred_region
          %s1589 = sand.u32 %s341, 1
          %s1590 = scalar_lea.sflag [#allocation4], %s1589
          %s1591 = sand.u32 %s341, 1
          %s1592 = smul.addr %s1591, 16
          %s1593 = scalar_lea.vmem [#allocation3], %s1592
          %1595 = dma.done %s1590, 256
        $region88: #{tpu_custom_call.1} parent=83 // pred_fallthru
          _
      $region84: #{tpu_custom_call.1} parent=5 // pred_fallthru
        _
    $region6: #{tpu_custom_call.1} parent=1 // loop_footer
      %s27 = sadd.s32 1, %s23
    $region7: #{tpu_custom_call.1} parent=1 // loop_footer_branch
      %22 = sbr.rel target = $region3
    $region8: #{tpu_custom_call.1} parent=1 // loop_exit
      _
    %1596 = vsyncpa [#allocation4], 1
    %s1597 = scalar_lea.sflag [#allocation4], 1
    %1598 = vsyncpa %s1597, 1

// kernel: tpu_custom_call.1
$region0: #{tpu_custom_call.1}
  #allocation0 [shape = 'u32[]', space=smem, size = 0x4, offset = 0x4, fixed_abs, tag = 'smem constant byte address 0x4 - core index']
  #allocation1 [shape = 'u32[72,128]{1,0:T(1,128)}', space=vmem, size = 0x9000, scoped, tag = 'internal scratch']
  #allocation2 [shape = 'f32[2,10,128]{2,1,0:T(8,128)}', space=vmem, size = 0x4000, scoped, tag = 'scratch operand']
  %s0 = inlined_call_operand.vmem [shape: f32[4,8,128], index: 0, kind: input, shape index: {}]
  %s1 = inlined_call_operand.vmem [shape: f32[4,1,8], index: 1, kind: input, shape index: {}]
  %s2 = inlined_call_operand.vmem [shape: bf16[128,96], index: 2, kind: input, shape index: {}]
  %s3 = inlined_call_operand.vmem [shape: f32[1,96], index: 3, kind: input, shape index: {}]
  %s4 = inlined_call_operand.vmem [shape: bf16[32,128], index: 4, kind: input, shape index: {}]
  %s5 = inlined_call_operand.vmem [shape: f32[1,128], index: 5, kind: input, shape index: {}]
  %s6 = inlined_call_operand.vmem [shape: f32[1,128], index: 6, kind: input, shape index: {}]
  %s7 = inlined_call_operand.vmem [shape: f32[1,128], index: 7, kind: input, shape index: {}]
  %s8 = inlined_call_operand.vmem [shape: bf16[3,128,64], index: 8, kind: input, shape index: {}]
  %s9 = inlined_call_operand.vmem [shape: f32[1,64], index: 9, kind: input, shape index: {}]
  %s10 = inlined_call_operand.vmem [shape: bf16[64,128], index: 10, kind: input, shape index: {}]
  %s11 = inlined_call_operand.vmem [shape: f32[1,128], index: 11, kind: input, shape index: {}]
  %s12 = inlined_call_operand.vmem [shape: f32[1,128], index: 12, kind: input, shape index: {}]
  %s13 = inlined_call_operand.vmem [shape: f32[1,128], index: 13, kind: input, shape index: {}]
  %s14 = inlined_call_operand.hbm [shape: f32[4,8,128], index: 14, kind: output, shape index: {}]
  %s15 = sld [smem:[#allocation0]]
  $region89: #{tpu_custom_call.1} parent=0
    _
  %s17 = ssub.s32 1, %s15
  %s18 = scalar_select 0, %s17, %s15
  $region1: #{tpu_custom_call.1} parent=0
    #allocation3 [shape = 'u8[16384]{0}', space=vmem, size = 0x4000, scoped, tag = 'output window, operand 0']
    #allocation4 [shape = 's32[2]{0}', space=sflag, size = 0x8, scoped, tag = 'scoped memory for tpu_custom_call.1']
    %19 = vsyncpa [#allocation4], 0
    %s20 = scalar_lea.sflag [#allocation4], 1
    %21 = vsyncpa %s20, 0
    loop: start=0, step=1, limit=4
    $region2: #{tpu_custom_call.1} parent=1 // loop_pre_header
      _
    $region3: #{tpu_custom_call.1} parent=1 // loop_header
      %s23 = sphi 0, %s27
      %p24 = scmp.ge.s32.totalorder %s23, 4
      %s33 = sphi 0, %s35
      %s36 = sphi 0, %s33
      %s37 = sphi 0, %s36
      %s53 = sphi 0, %s37
      %s59 = sphi 0, %s61
      %s62 = sphi 0, %s59
      %s63 = sphi 0, %s62
      %s79 = sphi 0, %s63
      %s83 = sphi 0, %s83
      %s85 = sphi 0, %s83
      %s86 = sphi 0, %s85
      %s100 = sphi 0, %s86
      %s104 = sphi 0, %s104
      %s106 = sphi 0, %s104
      %s107 = sphi 0, %s106
      %s121 = sphi 0, %s107
      %s125 = sphi 0, %s125
      %s127 = sphi 0, %s125
      %s128 = sphi 0, %s127
      %s142 = sphi 0, %s128
      %s146 = sphi 0, %s146
      %s148 = sphi 0, %s146
      %s149 = sphi 0, %s148
      %s163 = sphi 0, %s149
      %s167 = sphi 0, %s167
      %s169 = sphi 0, %s167
      %s170 = sphi 0, %s169
      %s184 = sphi 0, %s170
      %s188 = sphi 0, %s188
      %s190 = sphi 0, %s188
      %s191 = sphi 0, %s190
      %s205 = sphi 0, %s191
      %s209 = sphi 0, %s209
      %s211 = sphi 0, %s209
      %s212 = sphi 0, %s211
      %s226 = sphi 0, %s212
      %s230 = sphi 0, %s230
      %s232 = sphi 0, %s230
      %s233 = sphi 0, %s232
      %s247 = sphi 0, %s233
      %s251 = sphi 0, %s251
      %s253 = sphi 0, %s251
      %s254 = sphi 0, %s253
      %s268 = sphi 0, %s254
      %s272 = sphi 0, %s272
      %s274 = sphi 0, %s272
      %s275 = sphi 0, %s274
      %s289 = sphi 0, %s275
      %s293 = sphi 0, %s293
      %s295 = sphi 0, %s293
      %s296 = sphi 0, %s295
      %s310 = sphi 0, %s296
      %s314 = sphi 0, %s314
      %s316 = sphi 0, %s314
      %s317 = sphi 0, %s316
      %s331 = sphi 0, %s317
      %s337 = sphi 0, %s339
      %s340 = sphi 0, %s337
      %s341 = sphi 0, %s340
      %s357 = sphi 0, %s341
    $region4: #{tpu_custom_call.1} parent=1 // loop_header_branch
      %26 = sbr.rel (%p24) target = $region8
    $region5: #{tpu_custom_call.1} parent=1 // loop_body
      %s28 = ssub.s32 %s23, 1
      %s29 = ssub.s32 %s23, 2
      %s30 = sadd.s32 %s23, 1
      %s31 = ssub.s32 %s23, %s30
      %p32 = scmp.eq.s32.totalorder %s31, 0
      %s34 = sadd.s32 %s33, 1
      %s35 = scalar_select %p32, %s33, %s34
      %p38 = pneg %p32
      %p39 = scmp.eq.s32.totalorder %s23, 1
      %p40 = por %p38, %p39
      %p41 = scmp.ne.s32.totalorder %s33, %s36
      %p42 = scmp.eq.s32.totalorder %s23, 0
      %p43 = por %p41, %p42
      %p44 = scmp.ne.s32.totalorder %s33, %s36
      %p45 = scmp.eq.s32.totalorder %s28, 1
      %p46 = por %p44, %p45
      %p47 = scmp.ne.s32.totalorder %s36, %s37
      %p48 = scmp.eq.s32.totalorder %s28, 0
      %p49 = por %p47, %p48
      %p50 = scmp.ne.s32.totalorder %s36, %s37
      %p51 = scmp.eq.s32.totalorder %s29, 1
      %p52 = por %p50, %p51
      %p54 = scmp.ne.s32.totalorder %s37, %s53
      %p55 = scmp.eq.s32.totalorder %s29, 0
      %p56 = por %p54, %p55
      %s57 = ssub.s32 %s23, %s30
      %p58 = scmp.eq.s32.totalorder %s57, 0
      %s60 = sadd.s32 %s59, 1
      %s61 = scalar_select %p58, %s59, %s60
      %p64 = pneg %p58
      %p65 = scmp.eq.s32.totalorder %s23, 1
      %p66 = por %p64, %p65
      %p67 = scmp.ne.s32.totalorder %s59, %s62
      %p68 = scmp.eq.s32.totalorder %s23, 0
      %p69 = por %p67, %p68
      %p70 = scmp.ne.s32.totalorder %s59, %s62
      %p71 = scmp.eq.s32.totalorder %s28, 1
      %p72 = por %p70, %p71
      %p73 = scmp.ne.s32.totalorder %s62, %s63
      %p74 = scmp.eq.s32.totalorder %s28, 0
      %p75 = por %p73, %p74
      %p76 = scmp.ne.s32.totalorder %s62, %s63
      %p77 = scmp.eq.s32.totalorder %s29, 1
      %p78 = por %p76, %p77
      %p80 = scmp.ne.s32.totalorder %s63, %s79
      %p81 = scmp.eq.s32.totalorder %s29, 0
      %p82 = por %p80, %p81
      %s84 = sadd.s32 %s83, 1
      %p87 = scmp.eq.s32.totalorder %s23, 1
      %p88 = scmp.ne.s32.totalorder %s83, %s85
      %p89 = scmp.eq.s32.totalorder %s23, 0
      %p90 = por %p88, %p89
      %p91 = scmp.ne.s32.totalorder %s83, %s85
      %p92 = scmp.eq.s32.totalorder %s28, 1
      %p93 = por %p91, %p92
      %p94 = scmp.ne.s32.totalorder %s85, %s86
      %p95 = scmp.eq.s32.totalorder %s28, 0
      %p96 = por %p94, %p95
      %p97 = scmp.ne.s32.totalorder %s85, %s86
      %p98 = scmp.eq.s32.totalorder %s29, 1
      %p99 = por %p97, %p98
      %p101 = scmp.ne.s32.totalorder %s86, %s100
      %p102 = scmp.eq.s32.totalorder %s29, 0
      %p103 = por %p101, %p102
      %s105 = sadd.s32 %s104, 1
      %p108 = scmp.eq.s32.totalorder %s23, 1
      %p109 = scmp.ne.s32.totalorder %s104, %s106
      %p110 = scmp.eq.s32.totalorder %s23, 0
      %p111 = por %p109, %p110
      %p112 = scmp.ne.s32.totalorder %s104, %s106
      %p113 = scmp.eq.s32.totalorder %s28, 1
      %p114 = por %p112, %p113
      %p115 = scmp.ne.s32.totalorder %s106, %s107
      %p116 = scmp.eq.s32.totalorder %s28, 0
      %p117 = por %p115, %p116
      %p118 = scmp.ne.s32.totalorder %s106, %s107
      %p119 = scmp.eq.s32.totalorder %s29, 1
      %p120 = por %p118, %p119
      %p122 = scmp.ne.s32.totalorder %s107, %s121
      %p123 = scmp.eq.s32.totalorder %s29, 0
      %p124 = por %p122, %p123
      %s126 = sadd.s32 %s125, 1
      %p129 = scmp.eq.s32.totalorder %s23, 1
      %p130 = scmp.ne.s32.totalorder %s125, %s127
      %p131 = scmp.eq.s32.totalorder %s23, 0
      %p132 = por %p130, %p131
      %p133 = scmp.ne.s32.totalorder %s125, %s127
      %p134 = scmp.eq.s32.totalorder %s28, 1
      %p135 = por %p133, %p134
      %p136 = scmp.ne.s32.totalorder %s127, %s128
      %p137 = scmp.eq.s32.totalorder %s28, 0
      %p138 = por %p136, %p137
      %p139 = scmp.ne.s32.totalorder %s127, %s128
      %p140 = scmp.eq.s32.totalorder %s29, 1
      %p141 = por %p139, %p140
      %p143 = scmp.ne.s32.totalorder %s128, %s142
      %p144 = scmp.eq.s32.totalorder %s29, 0
      %p145 = por %p143, %p144
      %s147 = sadd.s32 %s146, 1
      %p150 = scmp.eq.s32.totalorder %s23, 1
      %p151 = scmp.ne.s32.totalorder %s146, %s148
      %p152 = scmp.eq.s32.totalorder %s23, 0
      %p153 = por %p151, %p152
      %p154 = scmp.ne.s32.totalorder %s146, %s148
      %p155 = scmp.eq.s32.totalorder %s28, 1
      %p156 = por %p154, %p155
      %p157 = scmp.ne.s32.totalorder %s148, %s149
      %p158 = scmp.eq.s32.totalorder %s28, 0
      %p159 = por %p157, %p158
      %p160 = scmp.ne.s32.totalorder %s148, %s149
      %p161 = scmp.eq.s32.totalorder %s29, 1
      %p162 = por %p160, %p161
      %p164 = scmp.ne.s32.totalorder %s149, %s163
      %p165 = scmp.eq.s32.totalorder %s29, 0
      %p166 = por %p164, %p165
      %s168 = sadd.s32 %s167, 1
      %p171 = scmp.eq.s32.totalorder %s23, 1
      %p172 = scmp.ne.s32.totalorder %s167, %s169
      %p173 = scmp.eq.s32.totalorder %s23, 0
      %p174 = por %p172, %p173
      %p175 = scmp.ne.s32.totalorder %s167, %s169
      %p176 = scmp.eq.s32.totalorder %s28, 1
      %p177 = por %p175, %p176
      %p178 = scmp.ne.s32.totalorder %s169, %s170
      %p179 = scmp.eq.s32.totalorder %s28, 0
      %p180 = por %p178, %p179
      %p181 = scmp.ne.s32.totalorder %s169, %s170
      %p182 = scmp.eq.s32.totalorder %s29, 1
      %p183 = por %p181, %p182
      %p185 = scmp.ne.s32.totalorder %s170, %s184
      %p186 = scmp.eq.s32.totalorder %s29, 0
      %p187 = por %p185, %p186
      %s189 = sadd.s32 %s188, 1
      %p192 = scmp.eq.s32.totalorder %s23, 1
      %p193 = scmp.ne.s32.totalorder %s188, %s190
      %p194 = scmp.eq.s32.totalorder %s23, 0
      %p195 = por %p193, %p194
      %p196 = scmp.ne.s32.totalorder %s188, %s190
      %p197 = scmp.eq.s32.totalorder %s28, 1
      %p198 = por %p196, %p197
      %p199 = scmp.ne.s32.totalorder %s190, %s191
      %p200 = scmp.eq.s32.totalorder %s28, 0
      %p201 = por %p199, %p200
      %p202 = scmp.ne.s32.totalorder %s190, %s191
      %p203 = scmp.eq.s32.totalorder %s29, 1
      %p204 = por %p202, %p203
      %p206 = scmp.ne.s32.totalorder %s191, %s205
      %p207 = scmp.eq.s32.totalorder %s29, 0
      %p208 = por %p206, %p207
      %s210 = sadd.s32 %s209, 1
      %p213 = scmp.eq.s32.totalorder %s23, 1
      %p214 = scmp.ne.s32.totalorder %s209, %s211
      %p215 = scmp.eq.s32.totalorder %s23, 0
      %p216 = por %p214, %p215
      %p217 = scmp.ne.s32.totalorder %s209, %s211
      %p218 = scmp.eq.s32.totalorder %s28, 1
      %p219 = por %p217, %p218
      %p220 = scmp.ne.s32.totalorder %s211, %s212
      %p221 = scmp.eq.s32.totalorder %s28, 0
      %p222 = por %p220, %p221
      %p223 = scmp.ne.s32.totalorder %s211, %s212
      %p224 = scmp.eq.s32.totalorder %s29, 1
      %p225 = por %p223, %p224
      %p227 = scmp.ne.s32.totalorder %s212, %s226
      %p228 = scmp.eq.s32.totalorder %s29, 0
      %p229 = por %p227, %p228
      %s231 = sadd.s32 %s230, 1
      %p234 = scmp.eq.s32.totalorder %s23, 1
      %p235 = scmp.ne.s32.totalorder %s230, %s232
      %p236 = scmp.eq.s32.totalorder %s23, 0
      %p237 = por %p235, %p236
      %p238 = scmp.ne.s32.totalorder %s230, %s232
      %p239 = scmp.eq.s32.totalorder %s28, 1
      %p240 = por %p238, %p239
      %p241 = scmp.ne.s32.totalorder %s232, %s233
      %p242 = scmp.eq.s32.totalorder %s28, 0
      %p243 = por %p241, %p242
      %p244 = scmp.ne.s32.totalorder %s232, %s233
      %p245 = scmp.eq.s32.totalorder %s29, 1
      %p246 = por %p244, %p245
      %p248 = scmp.ne.s32.totalorder %s233, %s247
      %p249 = scmp.eq.s32.totalorder %s29, 0
      %p250 = por %p248, %p249
      %s252 = sadd.s32 %s251, 1
      %p255 = scmp.eq.s32.totalorder %s23, 1
      %p256 = scmp.ne.s32.totalorder %s251, %s253
      %p257 = scmp.eq.s32.totalorder %s23, 0
      %p258 = por %p256, %p257
      %p259 = scmp.ne.s32.totalorder %s251, %s253
      %p260 = scmp.eq.s32.totalorder %s28, 1
      %p261 = por %p259, %p260
      %p262 = scmp.ne.s32.totalorder %s253, %s254
      %p263 = scmp.eq.s32.totalorder %s28, 0
      %p264 = por %p262, %p263
      %p265 = scmp.ne.s32.totalorder %s253, %s254
      %p266 = scmp.eq.s32.totalorder %s29, 1
      %p267 = por %p265, %p266
      %p269 = scmp.ne.s32.totalorder %s254, %s268
      %p270 = scmp.eq.s32.totalorder %s29, 0
      %p271 = por %p269, %p270
      %s273 = sadd.s32 %s272, 1
      %p276 = scmp.eq.s32.totalorder %s23, 1
      %p277 = scmp.ne.s32.totalorder %s272, %s274
      %p278 = scmp.eq.s32.totalorder %s23, 0
      %p279 = por %p277, %p278
      %p280 = scmp.ne.s32.totalorder %s272, %s274
      %p281 = scmp.eq.s32.totalorder %s28, 1
      %p282 = por %p280, %p281
      %p283 = scmp.ne.s32.totalorder %s274, %s275
      %p284 = scmp.eq.s32.totalorder %s28, 0
      %p285 = por %p283, %p284
      %p286 = scmp.ne.s32.totalorder %s274, %s275
      %p287 = scmp.eq.s32.totalorder %s29, 1
      %p288 = por %p286, %p287
      %p290 = scmp.ne.s32.totalorder %s275, %s289
      %p291 = scmp.eq.s32.totalorder %s29, 0
      %p292 = por %p290, %p291
      %s294 = sadd.s32 %s293, 1
      %p297 = scmp.eq.s32.totalorder %s23, 1
      %p298 = scmp.ne.s32.totalorder %s293, %s295
      %p299 = scmp.eq.s32.totalorder %s23, 0
      %p300 = por %p298, %p299
      %p301 = scmp.ne.s32.totalorder %s293, %s295
      %p302 = scmp.eq.s32.totalorder %s28, 1
      %p303 = por %p301, %p302
      %p304 = scmp.ne.s32.totalorder %s295, %s296
      %p305 = scmp.eq.s32.totalorder %s28, 0
      %p306 = por %p304, %p305
      %p307 = scmp.ne.s32.totalorder %s295, %s296
      %p308 = scmp.eq.s32.totalorder %s29, 1
      %p309 = por %p307, %p308
      %p311 = scmp.ne.s32.totalorder %s296, %s310
      %p312 = scmp.eq.s32.totalorder %s29, 0
      %p313 = por %p311, %p312
      %s315 = sadd.s32 %s314, 1
      %p318 = scmp.eq.s32.totalorder %s23, 1
      %p319 = scmp.ne.s32.totalorder %s314, %s316
      %p320 = scmp.eq.s32.totalorder %s23, 0
      %p321 = por %p319, %p320
      %p322 = scmp.ne.s32.totalorder %s314, %s316
      %p323 = scmp.eq.s32.totalorder %s28, 1
      %p324 = por %p322, %p323
      %p325 = scmp.ne.s32.totalorder %s316, %s317
      %p326 = scmp.eq.s32.totalorder %s28, 0
      %p327 = por %p325, %p326
      %p328 = scmp.ne.s32.totalorder %s316, %s317
      %p329 = scmp.eq.s32.totalorder %s29, 1
      %p330 = por %p328, %p329
      %p332 = scmp.ne.s32.totalorder %s317, %s331
      %p333 = scmp.eq.s32.totalorder %s29, 0
      %p334 = por %p332, %p333
      %s335 = ssub.s32 %s23, %s30
      %p336 = scmp.eq.s32.totalorder %s335, 0
      %s338 = sadd.s32 %s337, 1
      %s339 = scalar_select %p336, %s337, %s338
      %p342 = pneg %p336
      %p343 = scmp.eq.s32.totalorder %s23, 1
      %p344 = por %p342, %p343
      %p345 = scmp.ne.s32.totalorder %s337, %s340
      %p346 = scmp.eq.s32.totalorder %s23, 0
      %p347 = por %p345, %p346
      %p348 = scmp.ne.s32.totalorder %s337, %s340
      %p349 = scmp.eq.s32.totalorder %s28, 1
      %p350 = por %p348, %p349
      %p351 = scmp.ne.s32.totalorder %s340, %s341
      %p352 = scmp.eq.s32.totalorder %s28, 0
      %p353 = por %p351, %p352
      %p354 = scmp.ne.s32.totalorder %s340, %s341
      %p355 = scmp.eq.s32.totalorder %s29, 1
      %p356 = por %p354, %p355
      %p358 = scmp.ne.s32.totalorder %s341, %s357
      %p359 = scmp.eq.s32.totalorder %s29, 0
      %p360 = por %p358, %p359
      %p361 = scmp.le.s32.totalorder 1, %s23
      %p362 = scmp.lt.s32.totalorder %s23, 3
      %p363 = pnand %p361, %p362
      %p364 = pneg %p363
      // Predicated region
      $region9: #{tpu_custom_call.1} parent=5 // pred_check
        _
      $region10: #{tpu_custom_call.1} parent=5 // pred_check_branch
        %366 = sbr.rel (%p363) target = $region12
      $region11: #{tpu_custom_call.1} parent=5 // pred_region
        %s367 = ssub.s32 %s23, 1
        // Predicated region
        $region13: #{tpu_custom_call.1} parent=11 // pred_check
          %p368 = pneg %p96
        $region14: #{tpu_custom_call.1} parent=11 // pred_check_branch
          %370 = sbr.rel (%p368) target = $region16
        $region15: #{tpu_custom_call.1} parent=11 // pred_region
          _
        $region16: #{tpu_custom_call.1} parent=11 // pred_fallthru
          _
        // Predicated region
        $region17: #{tpu_custom_call.1} parent=11 // pred_check
          %p371 = pneg %p117
        $region18: #{tpu_custom_call.1} parent=11 // pred_check_branch
          %373 = sbr.rel (%p371) target = $region20
        $region19: #{tpu_custom_call.1} parent=11 // pred_region
          _
        $region20: #{tpu_custom_call.1} parent=11 // pred_fallthru
          _
        // Predicated region
        $region21: #{tpu_custom_call.1} parent=11 // pred_check
          %p374 = pneg %p138
        $region22: #{tpu_custom_call.1} parent=11 // pred_check_branch
          %376 = sbr.rel (%p374) target = $region24
        $region23: #{tpu_custom_call.1} parent=11 // pred_region
          _
        $region24: #{tpu_custom_call.1} parent=11 // pred_fallthru
          _
        // Predicated region
        $region25: #{tpu_custom_call.1} parent=11 // pred_check
          %p377 = pneg %p159
        $region26: #{tpu_custom_call.1} parent=11 // pred_check_branch
          %379 = sbr.rel (%p377) target = $region28
        $region27: #{tpu_custom_call.1} parent=11 // pred_region
          _
        $region28: #{tpu_custom_call.1} parent=11 // pred_fallthru
          _
        // Predicated region
        $region29: #{tpu_custom_call.1} parent=11 // pred_check
          %p380 = pneg %p180
        $region30: #{tpu_custom_call.1} parent=11 // pred_check_branch
          %382 = sbr.rel (%p380) target = $region32
        $region31: #{tpu_custom_call.1} parent=11 // pred_region
          _
        $region32: #{tpu_custom_call.1} parent=11 // pred_fallthru
          _
        // Predicated region
        $region33: #{tpu_custom_call.1} parent=11 // pred_check
          %p383 = pneg %p201
        $region34: #{tpu_custom_call.1} parent=11 // pred_check_branch
          %385 = sbr.rel (%p383) target = $region36
        $region35: #{tpu_custom_call.1} parent=11 // pred_region
          _
        $region36: #{tpu_custom_call.1} parent=11 // pred_fallthru
          _
        // Predicated region
        $region37: #{tpu_custom_call.1} parent=11 // pred_check
          %p386 = pneg %p222
        $region38: #{tpu_custom_call.1} parent=11 // pred_check_branch
          %388 = sbr.rel (%p386) target = $region40
        $region39: #{tpu_custom_call.1} parent=11 // pred_region
          _
        $region40: #{tpu_custom_call.1} parent=11 // pred_fallthru
          _
        // Predicated region
        $region41: #{tpu_custom_call.1} parent=11 // pred_check
          %p389 = pneg %p243
        $region42: #{tpu_custom_call.1} parent=11 // pred_check_branch
          %391 = sbr.rel (%p389) target = $region44
        $region43: #{tpu_custom_call.1} parent=11 // pred_region
          _
        $region44: #{tpu_custom_call.1} parent=11 // pred_fallthru
          _
        // Predicated region
        $region45: #{tpu_custom_call.1} parent=11 // pred_check
          %p392 = pneg %p264
        $region46: #{tpu_custom_call.1} parent=11 // pred_check_branch
          %394 = sbr.rel (%p392) target = $region48
        $region47: #{tpu_custom_call.1} parent=11 // pred_region
          _
        $region48: #{tpu_custom_call.1} parent=11 // pred_fallthru
          _
        // Predicated region
        $region49: #{tpu_custom_call.1} parent=11 // pred_check
          %p395 = pneg %p285
        $region50: #{tpu_custom_call.1} parent=11 // pred_check_branch
          %397 = sbr.rel (%p395) target = $region52
        $region51: #{tpu_custom_call.1} parent=11 // pred_region
          _
        $region52: #{tpu_custom_call.1} parent=11 // pred_fallthru
          _
        // Predicated region
        $region53: #{tpu_custom_call.1} parent=11 // pred_check
          %p398 = pneg %p306
        $region54: #{tpu_custom_call.1} parent=11 // pred_check_branch
          %400 = sbr.rel (%p398) target = $region56
        $region55: #{tpu_custom_call.1} parent=11 // pred_region
          _
        $region56: #{tpu_custom_call.1} parent=11 // pred_fallthru
          _
        // Predicated region
        $region57: #{tpu_custom_call.1} parent=11 // pred_check
          %p401 = pneg %p327
        $region58: #{tpu_custom_call.1} parent=11 // pred_check_branch
          %403 = sbr.rel (%p401) target = $region60
        $region59: #{tpu_custom_call.1} parent=11 // pred_region
          _
        $region60: #{tpu_custom_call.1} parent=11 // pred_fallthru
          _
      $region12: #{tpu_custom_call.1} parent=5 // pred_fallthru
        _
      %p404 = scmp.lt.s32.totalorder %s23, 2
      // Predicated region
      $region61: #{tpu_custom_call.1} parent=5 // pred_check
        %p405 = pneg %p404
      $region62: #{tpu_custom_call.1} parent=5 // pred_check_branch
        %407 = sbr.rel (%p405) target = $region64
      $region63: #{tpu_custom_call.1} parent=5 // pred_region
        // Predicated region
        $region65: #{tpu_custom_call.1} parent=63 // pred_check
          %p408 = pneg %p43
        $region66: #{tpu_custom_call.1} parent=63 // pred_check_branch
          %410 = sbr.rel (%p408) target = $region68
        $region67: #{tpu_custom_call.1} parent=63 // pred_region
          %s411 = smul.u32 2, %s23
          %p412 = scmp.lt.s32.totalorder %s411, 3
          %s413 = scalar_select %p412, %s411, 3
          %s414 = smul.addr %s413, 8
          %s415 = scalar_lea.vmem %s0, %s414
          %s416 = smul.u32 2, %s23
        $region68: #{tpu_custom_call.1} parent=63 // pred_fallthru
          _
        // Predicated region
        $region69: #{tpu_custom_call.1} parent=63 // pred_check
          %p417 = pneg %p69
        $region70: #{tpu_custom_call.1} parent=63 // pred_check_branch
          %419 = sbr.rel (%p417) target = $region72
        $region71: #{tpu_custom_call.1} parent=63 // pred_region
          %s420 = smul.u32 2, %s23
          %p421 = scmp.lt.s32.totalorder %s420, 3
          %s422 = scalar_select %p421, %s420, 3
          %s423 = scalar_lea.vmem %s1, %s422
          %s424 = smul.u32 2, %s23
        $region72: #{tpu_custom_call.1} parent=63 // pred_fallthru
          _
      $region64: #{tpu_custom_call.1} parent=5 // pred_fallthru
        _
      %p425 = scmp.le.s32.totalorder 1, %s23
      %p426 = scmp.lt.s32.totalorder %s23, 3
      %p427 = pnand %p425, %p426
      %p428 = pneg %p427
      // Predicated region
      $region73: #{tpu_custom_call.1} parent=5 // pred_check
        _
      $region74: #{tpu_custom_call.1} parent=5 // pred_check_branch
        %430 = sbr.rel (%p427) target = $region76
      $region75: #{tpu_custom_call.1} parent=5 // pred_region
        %s431 = ssub.s32 %s23, 1
        %s432 = smul.u32 2, %s28
        %p433 = scmp.lt.s32.totalorder %s432, 3
        %s434 = scalar_select %p433, %s432, 3
        %s435 = smul.addr %s434, 8
        %s436 = scalar_lea.vmem %s0, %s435
        %p437 = pneg %p49
        %p438 = pneg %p46
        %s439 = smul.u32 2, %s28
        %p440 = scmp.lt.s32.totalorder %s439, 3
        %s441 = scalar_select %p440, %s439, 3
        %s442 = scalar_lea.vmem %s1, %s441
        %p443 = pneg %p75
        %p444 = pneg %p72
        %p445 = pneg %p96
        %p446 = pneg %p93
        %p447 = pneg %p117
        %p448 = pneg %p114
        %p449 = pneg %p138
        %p450 = pneg %p135
        %p451 = pneg %p159
        %p452 = pneg %p156
        %p453 = pneg %p180
        %p454 = pneg %p177
        %p455 = pneg %p201
        %p456 = pneg %p198
        %p457 = pneg %p222
        %p458 = pneg %p219
        %p459 = pneg %p243
        %p460 = pneg %p240
        %p461 = pneg %p264
        %p462 = pneg %p261
        %p463 = pneg %p285
        %p464 = pneg %p282
        %p465 = pneg %p306
        %p466 = pneg %p303
        %p467 = pneg %p327
        %p468 = pneg %p324
        %p469 = pneg %p353
        %p470 = pneg %p350
        %s471 = sand.u32 %s340, 1
        %s472 = scalar_lea.sflag [#allocation4], %s471
        %s473 = sand.u32 %s340, 1
        %s474 = smul.addr %s473, 16
        %s475 = scalar_lea.vmem [#allocation3], %s474
        %s476 = smul.u32 2, %s28
        %p477 = scmp.lt.s32.totalorder %s476, 3
        %s478 = scalar_select %p477, %s476, 3
        %s479 = smul.addr %s478, 8
        %s480 = scalar_lea.vmem %s0, %s479
        %s481 = smul.u32 2, %s28
        %s482 = smul.u32 2, %s28
        %p483 = scmp.lt.s32.totalorder %s482, 3
        %s484 = scalar_select %p483, %s482, 3
        %s485 = scalar_lea.vmem %s1, %s484
        %s486 = smul.u32 2, %s28
        %s487 = smul.u32 2, %s28
        %v489 = vld [vmem:[%s480] sm:$0xff]
        %v490 = vld [vmem:[%s480 + $0x8] sm:$0xff]
        %v491 = vpack.c.bf16 %v490, %v489
        %v492 = vld [vmem:[%s2] sm:$0xf]
        %v493 = vld [vmem:[%s2 + $0x4] sm:$0xf]
        %v494 = vld [vmem:[%s2 + $0x8] sm:$0xf]
        %v495 = vld [vmem:[%s2 + $0xc] sm:$0xf]
        %v496 = vld [vmem:[%s2 + $0x10] sm:$0xf]
        %v497 = vld [vmem:[%s2 + $0x14] sm:$0xf]
        %v498 = vld [vmem:[%s2 + $0x18] sm:$0xf]
        %v499 = vld [vmem:[%s2 + $0x1c] sm:$0xf]
        %v500 = vld [vmem:[%s2 + $0x20] sm:$0xf]
        %v501 = vld [vmem:[%s2 + $0x24] sm:$0xf]
        %v502 = vld [vmem:[%s2 + $0x28] sm:$0xf]
        %v503 = vld [vmem:[%s2 + $0x2c] sm:$0xf]
        %v504 = vld [vmem:[%s2 + $0x30] sm:$0xf]
        %v505 = vld [vmem:[%s2 + $0x34] sm:$0xf]
        %v506 = vld [vmem:[%s2 + $0x38] sm:$0xf]
        %v507 = vld [vmem:[%s2 + $0x3c] sm:$0xf]
        %v508 = vld [vmem:[%s3] sm:$0x1]
        %v510 = vperm.slane %v508, 0
        %v528 = vunpack.c.l.b16 %v492
        %v529 = vunpack.c.l.b16 %v493
        %v530 = vunpack.c.l.b16 %v494
        %v531 = vunpack.c.l.b16 %v495
        %v532 = vunpack.c.l.b16 %v496
        %v533 = vunpack.c.l.b16 %v497
        %v534 = vunpack.c.l.b16 %v498
        %v535 = vunpack.c.l.b16 %v499
        %v536 = vunpack.c.l.b16 %v500
        %v537 = vunpack.c.l.b16 %v501
        %v538 = vunpack.c.l.b16 %v502
        %v539 = vunpack.c.l.b16 %v503
        %v540 = vunpack.c.l.b16 %v504
        %v541 = vunpack.c.l.b16 %v505
        %v542 = vunpack.c.l.b16 %v506
        %v543 = vunpack.c.l.b16 %v507
        %v544 = vpack.c.b16 %v529, %v528
        %v545 = vpack.c.b16 %v531, %v530
        %v546 = vpack.c.b16 %v533, %v532
        %v547 = vpack.c.b16 %v535, %v534
        %v548 = vpack.c.b16 %v537, %v536
        %v549 = vpack.c.b16 %v539, %v538
        %v550 = vpack.c.b16 %v541, %v540
        %v551 = vpack.c.b16 %v543, %v542
        %560 = vmatpush.bf16.msra.mxu0 %v551
        %561 = vmatpush.bf16.msra.mxu0 %v550
        %562 = vmatpush.bf16.msra.mxu0 %v549
        %563 = vmatpush.bf16.msra.mxu0 %v548
        %564 = vmatpush.bf16.msra.mxu0 %v547
        %565 = vmatpush.bf16.msra.mxu0 %v546
        %566 = vmatpush.bf16.msra.mxu0 %v545
        %567 = vmatpush.bf16.msra.mxu0 %v544
        %568 = vmatmul.bf16.gmra.mxu0 %v491
        %v569 = vpop.f32.mrf.mxu0
        %v570 = vadd.f32 %v510, %v569
        %v571 = vpop.f32.mrf.mxu0
        %v572 = vadd.f32 %v510, %v571
        %573 = vdwg.mxu0
        %v574 = vld [vmem:[%s485] sm:$0x1]
        %v575 = vld [vmem:[%s485 + $0x1] sm:$0x1]
        %v576 = vpack.c.bf16 %v570, %v570
        %v577 = vpack.c.bf16 %v572, %v572
        %v579 = vunpack.c.l.b16 %v576
        %v580 = vpack.c.b16 %v579, %v579
        %581 = vrot.lane.b32.xlu0 %v580, 96
        %v582 = vpop.permute.xlu0 %581
        %vm583 = vcmask 64512
        %v585 = vsel %vm583, %v576, 0
        %v588 = vsel %vm583, %v582, 0
        %590 = vmatpush.bf16.xpose.msra.mxu0 0
        %591 = vmatpush.bf16.xpose.msra.mxu0 0
        %592 = vmatpush.bf16.xpose.msra.mxu0 0
        %593 = vmatpush.bf16.xpose.msra.mxu0 0
        %594 = vmatpush.bf16.xpose.msra.mxu0 0
        %595 = vmatpush.bf16.xpose.msra.mxu0 0
        %596 = vmatpush.bf16.xpose.msra.mxu0 0
        %597 = vmatpush.bf16.xpose.msra.mxu0 %v588
        %598 = vmatmul.bf16.gmra.mxu0 %v585
        %v599 = vpop.f32.mrf.mxu0
        %v600 = vadd.f32 0.0, %v599
        %v601 = vpop.f32.mrf.mxu0
        %602 = vdwg.mxu0
        %v604 = vunpack.c.l.b16 %v577
        %v605 = vpack.c.b16 %v604, %v604
        %606 = vrot.lane.b32.xlu0 %v605, 96
        %v607 = vpop.permute.xlu0 %606
        %v609 = vsel %vm583, %v577, 0
        %v612 = vsel %vm583, %v607, 0
        %614 = vmatpush.bf16.xpose.msra.mxu0 0
        %615 = vmatpush.bf16.xpose.msra.mxu0 0
        %616 = vmatpush.bf16.xpose.msra.mxu0 0
        %617 = vmatpush.bf16.xpose.msra.mxu0 0
        %618 = vmatpush.bf16.xpose.msra.mxu0 0
        %619 = vmatpush.bf16.xpose.msra.mxu0 0
        %620 = vmatpush.bf16.xpose.msra.mxu0 0
        %621 = vmatpush.bf16.xpose.msra.mxu0 %v612
        %622 = vmatmul.bf16.gmra.mxu0 %v609
        %v623 = vpop.f32.mrf.mxu0
        %v624 = vadd.f32 0.0, %v623
        %v625 = vpop.f32.mrf.mxu0
        %626 = vdwg.mxu0
        %v627 = vmul.f32 %v600, 0.35355338
        %v628 = vmul.f32 %v624, 0.35355338
        %v631 = vperm.slane %v574, 0
        %v632 = vperm.slane %v575, 0
        %v635 = vadd.f32 %v627, %v631
        %v636 = vadd.f32 %v628, %v632
        %v637 = vsel %vm583, %v635, -inf
        %638 = vmax.xlane.f32.xlu0 %v637
        %v639 = vpop.xlane.xlu0 %638
        %v640 = vsel %vm583, %v636, -inf
        %641 = vmax.xlane.f32.xlu0 %v640
        %v642 = vpop.xlane.xlu0 %641
        %v643 = vsub.f32 %v635, %v639
        %v644 = vsub.f32 %v636, %v642
        %v645 = vmul.f32 %v643, 1.442695
        %v646 = vpow.pop %v645
        %v647 = vmul.f32 %v644, 1.442695
        %v648 = vpow.pop %v647
        %v649 = vsel %vm583, %v646, 0.0
        %650 = vadd.xlane.f32.xlu0 %v649
        %v651 = vpop.xlane.xlu0 %650
        %v652 = vsel %vm583, %v648, 0.0
        %653 = vadd.xlane.f32.xlu0 %v652
        %v654 = vpop.xlane.xlu0 %653
        %v655 = vpack.c.bf16 %v646, %v646
        %v656 = vpack.c.bf16 %v648, %v648
        %657 = vrot.lane.b32.xlu0 %v580, 64
        %v658 = vpop.permute.xlu0 %657
        %v660 = vsel %vm583, %v655, 0
        %vm662 = vcmask 1043456
        %v664 = vsel %vm662, %v658, 0
        %666 = vmatpush.bf16.msra.mxu0 0
        %667 = vmatpush.bf16.msra.mxu0 0
        %668 = vmatpush.bf16.msra.mxu0 0
        %669 = vmatpush.bf16.msra.mxu0 0
        %670 = vmatpush.bf16.msra.mxu0 0
        %671 = vmatpush.bf16.msra.mxu0 0
        %672 = vmatpush.bf16.msra.mxu0 0
        %673 = vmatpush.bf16.msra.mxu0 %v664
        %674 = vmatmul.bf16.gmra.mxu0 %v660
        %v675 = vpop.f32.mrf.mxu0
        %v676 = vadd.f32 0.0, %v675
        %v677 = vpop.f32.mrf.mxu0
        %678 = vdwg.mxu0
        %679 = vrot.lane.b32.xlu0 %v605, 64
        %v680 = vpop.permute.xlu0 %679
        %v682 = vsel %vm583, %v656, 0
        %v685 = vsel %vm662, %v680, 0
        %687 = vmatpush.bf16.msra.mxu0 0
        %688 = vmatpush.bf16.msra.mxu0 0
        %689 = vmatpush.bf16.msra.mxu0 0
        %690 = vmatpush.bf16.msra.mxu0 0
        %691 = vmatpush.bf16.msra.mxu0 0
        %692 = vmatpush.bf16.msra.mxu0 0
        %693 = vmatpush.bf16.msra.mxu0 0
        %694 = vmatpush.bf16.msra.mxu0 %v685
        %695 = vmatmul.bf16.gmra.mxu0 %v682
        %v696 = vpop.f32.mrf.mxu0
        %v697 = vadd.f32 0.0, %v696
        %v698 = vpop.f32.mrf.mxu0
        %699 = vdwg.mxu0
        %v700 = vrcp.pop %v651
        %v701 = vrcp.pop %v654
        %v702 = vmul.f32 %v676, %v700
        %v703 = vmul.f32 %v697, %v701
        %704 = vrot.lane.b32.xlu0 %v580, 120
        %v705 = vpop.permute.xlu0 %704
        %706 = vrot.lane.b32.xlu0 %v580, 88
        %v707 = vpop.permute.xlu0 %706
        %v709 = vsel %vm583, %v705, 0
        %v712 = vsel %vm583, %v707, 0
        %714 = vmatpush.bf16.xpose.msra.mxu0 0
        %715 = vmatpush.bf16.xpose.msra.mxu0 0
        %716 = vmatpush.bf16.xpose.msra.mxu0 0
        %717 = vmatpush.bf16.xpose.msra.mxu0 0
        %718 = vmatpush.bf16.xpose.msra.mxu0 0
        %719 = vmatpush.bf16.xpose.msra.mxu0 0
        %720 = vmatpush.bf16.xpose.msra.mxu0 0
        %721 = vmatpush.bf16.xpose.msra.mxu0 %v712
        %722 = vmatmul.bf16.gmra.mxu0 %v709
        %v723 = vpop.f32.mrf.mxu0
        %v724 = vadd.f32 0.0, %v723
        %v725 = vpop.f32.mrf.mxu0
        %726 = vdwg.mxu0
        %727 = vrot.lane.b32.xlu0 %v605, 120
        %v728 = vpop.permute.xlu0 %727
        %729 = vrot.lane.b32.xlu0 %v605, 88
        %v730 = vpop.permute.xlu0 %729
        %v732 = vsel %vm583, %v728, 0
        %v735 = vsel %vm583, %v730, 0
        %737 = vmatpush.bf16.xpose.msra.mxu0 0
        %738 = vmatpush.bf16.xpose.msra.mxu0 0
        %739 = vmatpush.bf16.xpose.msra.mxu0 0
        %740 = vmatpush.bf16.xpose.msra.mxu0 0
        %741 = vmatpush.bf16.xpose.msra.mxu0 0
        %742 = vmatpush.bf16.xpose.msra.mxu0 0
        %743 = vmatpush.bf16.xpose.msra.mxu0 0
        %744 = vmatpush.bf16.xpose.msra.mxu0 %v735
        %745 = vmatmul.bf16.gmra.mxu0 %v732
        %v746 = vpop.f32.mrf.mxu0
        %v747 = vadd.f32 0.0, %v746
        %v748 = vpop.f32.mrf.mxu0
        %749 = vdwg.mxu0
        %v750 = vmul.f32 %v724, 0.35355338
        %v751 = vmul.f32 %v747, 0.35355338
        %v752 = vadd.f32 %v750, %v631
        %v753 = vadd.f32 %v751, %v632
        %v754 = vsel %vm583, %v752, -inf
        %755 = vmax.xlane.f32.xlu0 %v754
        %v756 = vpop.xlane.xlu0 %755
        %v757 = vsel %vm583, %v753, -inf
        %758 = vmax.xlane.f32.xlu0 %v757
        %v759 = vpop.xlane.xlu0 %758
        %v760 = vsub.f32 %v752, %v756
        %v761 = vsub.f32 %v753, %v759
        %v762 = vmul.f32 %v760, 1.442695
        %v763 = vpow.pop %v762
        %v764 = vmul.f32 %v761, 1.442695
        %v765 = vpow.pop %v764
        %v766 = vsel %vm583, %v763, 0.0
        %767 = vadd.xlane.f32.xlu0 %v766
        %v768 = vpop.xlane.xlu0 %767
        %v769 = vsel %vm583, %v765, 0.0
        %770 = vadd.xlane.f32.xlu0 %v769
        %v771 = vpop.xlane.xlu0 %770
        %v772 = vpack.c.bf16 %v763, %v763
        %v773 = vpack.c.bf16 %v765, %v765
        %774 = vrot.lane.b32.xlu0 %v580, 56
        %v775 = vpop.permute.xlu0 %774
        %v777 = vsel %vm583, %v772, 0
        %v780 = vsel %vm662, %v775, 0
        %782 = vmatpush.bf16.msra.mxu0 0
        %783 = vmatpush.bf16.msra.mxu0 0
        %784 = vmatpush.bf16.msra.mxu0 0
        %785 = vmatpush.bf16.msra.mxu0 0
        %786 = vmatpush.bf16.msra.mxu0 0
        %787 = vmatpush.bf16.msra.mxu0 0
        %788 = vmatpush.bf16.msra.mxu0 0
        %789 = vmatpush.bf16.msra.mxu0 %v780
        %790 = vmatmul.bf16.gmra.mxu0 %v777
        %v791 = vpop.f32.mrf.mxu0
        %v792 = vadd.f32 0.0, %v791
        %v793 = vpop.f32.mrf.mxu0
        %794 = vdwg.mxu0
        %795 = vrot.lane.b32.xlu0 %v605, 56
        %v796 = vpop.permute.xlu0 %795
        %v798 = vsel %vm583, %v773, 0
        %v801 = vsel %vm662, %v796, 0
        %803 = vmatpush.bf16.msra.mxu0 0
        %804 = vmatpush.bf16.msra.mxu0 0
        %805 = vmatpush.bf16.msra.mxu0 0
        %806 = vmatpush.bf16.msra.mxu0 0
        %807 = vmatpush.bf16.msra.mxu0 0
        %808 = vmatpush.bf16.msra.mxu0 0
        %809 = vmatpush.bf16.msra.mxu0 0
        %810 = vmatpush.bf16.msra.mxu0 %v801
        %811 = vmatmul.bf16.gmra.mxu0 %v798
        %v812 = vpop.f32.mrf.mxu0
        %v813 = vadd.f32 0.0, %v812
        %v814 = vpop.f32.mrf.mxu0
        %815 = vdwg.mxu0
        %v816 = vrcp.pop %v768
        %v817 = vrcp.pop %v771
        %v818 = vmul.f32 %v792, %v816
        %v819 = vmul.f32 %v813, %v817
        %820 = vrot.lane.b32.xlu0 %v580, 112
        %v821 = vpop.permute.xlu0 %820
        %822 = vrot.lane.b32.xlu0 %v580, 80
        %v823 = vpop.permute.xlu0 %822
        %v825 = vsel %vm583, %v821, 0
        %v828 = vsel %vm583, %v823, 0
        %830 = vmatpush.bf16.xpose.msra.mxu0 0
        %831 = vmatpush.bf16.xpose.msra.mxu0 0
        %832 = vmatpush.bf16.xpose.msra.mxu0 0
        %833 = vmatpush.bf16.xpose.msra.mxu0 0
        %834 = vmatpush.bf16.xpose.msra.mxu0 0
        %835 = vmatpush.bf16.xpose.msra.mxu0 0
        %836 = vmatpush.bf16.xpose.msra.mxu0 0
        %837 = vmatpush.bf16.xpose.msra.mxu0 %v828
        %838 = vmatmul.bf16.gmra.mxu0 %v825
        %v839 = vpop.f32.mrf.mxu0
        %v840 = vadd.f32 0.0, %v839
        %v841 = vpop.f32.mrf.mxu0
        %842 = vdwg.mxu0
        %843 = vrot.lane.b32.xlu0 %v605, 112
        %v844 = vpop.permute.xlu0 %843
        %845 = vrot.lane.b32.xlu0 %v605, 80
        %v846 = vpop.permute.xlu0 %845
        %v848 = vsel %vm583, %v844, 0
        %v851 = vsel %vm583, %v846, 0
        %853 = vmatpush.bf16.xpose.msra.mxu0 0
        %854 = vmatpush.bf16.xpose.msra.mxu0 0
        %855 = vmatpush.bf16.xpose.msra.mxu0 0
        %856 = vmatpush.bf16.xpose.msra.mxu0 0
        %857 = vmatpush.bf16.xpose.msra.mxu0 0
        %858 = vmatpush.bf16.xpose.msra.mxu0 0
        %859 = vmatpush.bf16.xpose.msra.mxu0 0
        %860 = vmatpush.bf16.xpose.msra.mxu0 %v851
        %861 = vmatmul.bf16.gmra.mxu0 %v848
        %v862 = vpop.f32.mrf.mxu0
        %v863 = vadd.f32 0.0, %v862
        %v864 = vpop.f32.mrf.mxu0
        %865 = vdwg.mxu0
        %v866 = vmul.f32 %v840, 0.35355338
        %v867 = vmul.f32 %v863, 0.35355338
        %v868 = vadd.f32 %v866, %v631
        %v869 = vadd.f32 %v867, %v632
        %v870 = vsel %vm583, %v868, -inf
        %871 = vmax.xlane.f32.xlu0 %v870
        %v872 = vpop.xlane.xlu0 %871
        %v873 = vsel %vm583, %v869, -inf
        %874 = vmax.xlane.f32.xlu0 %v873
        %v875 = vpop.xlane.xlu0 %874
        %v876 = vsub.f32 %v868, %v872
        %v877 = vsub.f32 %v869, %v875
        %v878 = vmul.f32 %v876, 1.442695
        %v879 = vpow.pop %v878
        %v880 = vmul.f32 %v877, 1.442695
        %v881 = vpow.pop %v880
        %v882 = vsel %vm583, %v879, 0.0
        %883 = vadd.xlane.f32.xlu0 %v882
        %v884 = vpop.xlane.xlu0 %883
        %v885 = vsel %vm583, %v881, 0.0
        %886 = vadd.xlane.f32.xlu0 %v885
        %v887 = vpop.xlane.xlu0 %886
        %v888 = vpack.c.bf16 %v879, %v879
        %v889 = vpack.c.bf16 %v881, %v881
        %890 = vrot.lane.b32.xlu0 %v580, 48
        %v891 = vpop.permute.xlu0 %890
        %v893 = vsel %vm583, %v888, 0
        %v896 = vsel %vm662, %v891, 0
        %898 = vmatpush.bf16.msra.mxu0 0
        %899 = vmatpush.bf16.msra.mxu0 0
        %900 = vmatpush.bf16.msra.mxu0 0
        %901 = vmatpush.bf16.msra.mxu0 0
        %902 = vmatpush.bf16.msra.mxu0 0
        %903 = vmatpush.bf16.msra.mxu0 0
        %904 = vmatpush.bf16.msra.mxu0 0
        %905 = vmatpush.bf16.msra.mxu0 %v896
        %906 = vmatmul.bf16.gmra.mxu0 %v893
        %v907 = vpop.f32.mrf.mxu0
        %v908 = vadd.f32 0.0, %v907
        %v909 = vpop.f32.mrf.mxu0
        %910 = vdwg.mxu0
        %911 = vrot.lane.b32.xlu0 %v605, 48
        %v912 = vpop.permute.xlu0 %911
        %v914 = vsel %vm583, %v889, 0
        %v917 = vsel %vm662, %v912, 0
        %919 = vmatpush.bf16.msra.mxu0 0
        %920 = vmatpush.bf16.msra.mxu0 0
        %921 = vmatpush.bf16.msra.mxu0 0
        %922 = vmatpush.bf16.msra.mxu0 0
        %923 = vmatpush.bf16.msra.mxu0 0
        %924 = vmatpush.bf16.msra.mxu0 0
        %925 = vmatpush.bf16.msra.mxu0 0
        %926 = vmatpush.bf16.msra.mxu0 %v917
        %927 = vmatmul.bf16.gmra.mxu0 %v914
        %v928 = vpop.f32.mrf.mxu0
        %v929 = vadd.f32 0.0, %v928
        %v930 = vpop.f32.mrf.mxu0
        %931 = vdwg.mxu0
        %v932 = vrcp.pop %v884
        %v933 = vrcp.pop %v887
        %v934 = vmul.f32 %v908, %v932
        %v935 = vmul.f32 %v929, %v933
        %936 = vrot.lane.b32.xlu0 %v580, 104
        %v937 = vpop.permute.xlu0 %936
        %938 = vrot.lane.b32.xlu0 %v580, 72
        %v939 = vpop.permute.xlu0 %938
        %v941 = vsel %vm583, %v937, 0
        %v944 = vsel %vm583, %v939, 0
        %946 = vmatpush.bf16.xpose.msra.mxu0 0
        %947 = vmatpush.bf16.xpose.msra.mxu0 0
        %948 = vmatpush.bf16.xpose.msra.mxu0 0
        %949 = vmatpush.bf16.xpose.msra.mxu0 0
        %950 = vmatpush.bf16.xpose.msra.mxu0 0
        %951 = vmatpush.bf16.xpose.msra.mxu0 0
        %952 = vmatpush.bf16.xpose.msra.mxu0 0
        %953 = vmatpush.bf16.xpose.msra.mxu0 %v944
        %954 = vmatmul.bf16.gmra.mxu0 %v941
        %v955 = vpop.f32.mrf.mxu0
        %v956 = vadd.f32 0.0, %v955
        %v957 = vpop.f32.mrf.mxu0
        %958 = vdwg.mxu0
        %959 = vrot.lane.b32.xlu0 %v605, 104
        %v960 = vpop.permute.xlu0 %959
        %961 = vrot.lane.b32.xlu0 %v605, 72
        %v962 = vpop.permute.xlu0 %961
        %v964 = vsel %vm583, %v960, 0
        %v967 = vsel %vm583, %v962, 0
        %969 = vmatpush.bf16.xpose.msra.mxu0 0
        %970 = vmatpush.bf16.xpose.msra.mxu0 0
        %971 = vmatpush.bf16.xpose.msra.mxu0 0
        %972 = vmatpush.bf16.xpose.msra.mxu0 0
        %973 = vmatpush.bf16.xpose.msra.mxu0 0
        %974 = vmatpush.bf16.xpose.msra.mxu0 0
        %975 = vmatpush.bf16.xpose.msra.mxu0 0
        %976 = vmatpush.bf16.xpose.msra.mxu0 %v967
        %977 = vmatmul.bf16.gmra.mxu0 %v964
        %v978 = vpop.f32.mrf.mxu0
        %v979 = vadd.f32 0.0, %v978
        %v980 = vpop.f32.mrf.mxu0
        %981 = vdwg.mxu0
        %v982 = vmul.f32 %v956, 0.35355338
        %v983 = vmul.f32 %v979, 0.35355338
        %v984 = vadd.f32 %v982, %v631
        %v985 = vadd.f32 %v983, %v632
        %v986 = vsel %vm583, %v984, -inf
        %987 = vmax.xlane.f32.xlu0 %v986
        %v988 = vpop.xlane.xlu0 %987
        %v989 = vsel %vm583, %v985, -inf
        %990 = vmax.xlane.f32.xlu0 %v989
        %v991 = vpop.xlane.xlu0 %990
        %v992 = vsub.f32 %v984, %v988
        %v993 = vsub.f32 %v985, %v991
        %v994 = vmul.f32 %v992, 1.442695
        %v995 = vpow.pop %v994
        %v996 = vmul.f32 %v993, 1.442695
        %v997 = vpow.pop %v996
        %v998 = vsel %vm583, %v995, 0.0
        %999 = vadd.xlane.f32.xlu0 %v998
        %v1000 = vpop.xlane.xlu0 %999
        %v1001 = vsel %vm583, %v997, 0.0
        %1002 = vadd.xlane.f32.xlu0 %v1001
        %v1003 = vpop.xlane.xlu0 %1002
        %v1004 = vpack.c.bf16 %v995, %v995
        %v1005 = vpack.c.bf16 %v997, %v997
        %1006 = vrot.lane.b32.xlu0 %v580, 40
        %v1007 = vpop.permute.xlu0 %1006
        %v1009 = vsel %vm583, %v1004, 0
        %v1012 = vsel %vm662, %v1007, 0
        %1014 = vmatpush.bf16.msra.mxu0 0
        %1015 = vmatpush.bf16.msra.mxu0 0
        %1016 = vmatpush.bf16.msra.mxu0 0
        %1017 = vmatpush.bf16.msra.mxu0 0
        %1018 = vmatpush.bf16.msra.mxu0 0
        %1019 = vmatpush.bf16.msra.mxu0 0
        %1020 = vmatpush.bf16.msra.mxu0 0
        %1021 = vmatpush.bf16.msra.mxu0 %v1012
        %1022 = vmatmul.bf16.gmra.mxu0 %v1009
        %v1023 = vpop.f32.mrf.mxu0
        %v1024 = vadd.f32 0.0, %v1023
        %v1025 = vpop.f32.mrf.mxu0
        %1026 = vdwg.mxu0
        %1027 = vrot.lane.b32.xlu0 %v605, 40
        %v1028 = vpop.permute.xlu0 %1027
        %v1030 = vsel %vm583, %v1005, 0
        %v1033 = vsel %vm662, %v1028, 0
        %1035 = vmatpush.bf16.msra.mxu0 0
        %1036 = vmatpush.bf16.msra.mxu0 0
        %1037 = vmatpush.bf16.msra.mxu0 0
        %1038 = vmatpush.bf16.msra.mxu0 0
        %1039 = vmatpush.bf16.msra.mxu0 0
        %1040 = vmatpush.bf16.msra.mxu0 0
        %1041 = vmatpush.bf16.msra.mxu0 0
        %1042 = vmatpush.bf16.msra.mxu0 %v1033
        %1043 = vmatmul.bf16.gmra.mxu0 %v1030
        %v1044 = vpop.f32.mrf.mxu0
        %v1045 = vadd.f32 0.0, %v1044
        %v1046 = vpop.f32.mrf.mxu0
        %1047 = vdwg.mxu0
        %v1048 = vrcp.pop %v1000
        %v1049 = vrcp.pop %v1003
        %v1050 = vmul.f32 %v1024, %v1048
        %v1051 = vmul.f32 %v1045, %v1049
        %1054 = vrot.lane.b32.xlu0 %v818, 8
        %v1055 = vpop.permute.xlu0 %1054
        %1056 = vrot.lane.b32.xlu0 %v819, 8
        %v1057 = vpop.permute.xlu0 %1056
        %1062 = vrot.lane.b32.xlu0 %v934, 16
        %v1063 = vpop.permute.xlu0 %1062
        %1064 = vrot.lane.b32.xlu0 %v935, 16
        %v1065 = vpop.permute.xlu0 %1064
        %1070 = vrot.lane.b32.xlu0 %v1050, 24
        %v1071 = vpop.permute.xlu0 %1070
        %1072 = vrot.lane.b32.xlu0 %v1051, 24
        %v1073 = vpop.permute.xlu0 %1072
        %v1076 = vsel %vm583, %v702, %v1055
        %v1077 = vsel %vm583, %v703, %v1057
        %vm1078 = vcmask 130048
        %v1079 = vsel %vm1078, %v1076, %v1063
        %v1080 = vsel %vm1078, %v1077, %v1065
        %vm1081 = vcmask 195584
        %v1082 = vsel %vm1081, %v1079, %v1071
        %v1083 = vsel %vm1081, %v1080, %v1073
        %v1084 = vpack.c.bf16 %v1083, %v1082
        %v1085 = vld [vmem:[%s4] sm:$0xf]
        %v1086 = vld [vmem:[%s4 + $0x4] sm:$0xf]
        %v1087 = vld [vmem:[%s4 + $0x8] sm:$0xf]
        %v1088 = vld [vmem:[%s4 + $0xc] sm:$0xf]
        %v1089 = vld [vmem:[%s5] sm:$0x1]
        %v1091 = vperm.slane %v1089, 0
        %v1097 = vunpack.c.l.b16 %v1085
        %v1098 = vunpack.c.l.b16 %v1086
        %v1099 = vunpack.c.l.b16 %v1087
        %v1100 = vunpack.c.l.b16 %v1088
        %v1101 = vpack.c.b16 %v1098, %v1097
        %v1102 = vpack.c.b16 %v1100, %v1099
        %vm1105 = vcmask 261120
        %v1107 = vsel %vm1105, %v1084, 0
        %1109 = vmatpush.bf16.msra.mxu0 0
        %1110 = vmatpush.bf16.msra.mxu0 0
        %1111 = vmatpush.bf16.msra.mxu0 0
        %1112 = vmatpush.bf16.msra.mxu0 0
        %1113 = vmatpush.bf16.msra.mxu0 0
        %1114 = vmatpush.bf16.msra.mxu0 0
        %1115 = vmatpush.bf16.msra.mxu0 %v1102
        %1116 = vmatpush.bf16.msra.mxu0 %v1101
        %1117 = vmatmul.bf16.gmra.mxu0 %v1107
        %v1118 = vpop.f32.mrf.mxu0
        %v1119 = vadd.f32 %v1091, %v1118
        %v1120 = vpop.f32.mrf.mxu0
        %v1121 = vadd.f32 %v1091, %v1120
        %1122 = vdwg.mxu0
        %v1123 = vadd.f32 %v489, %v1119
        %v1124 = vadd.f32 %v490, %v1121
        %1125 = vadd.xlane.f32.xlu0 %v1123
        %v1126 = vpop.xlane.xlu0 %1125
        %1127 = vadd.xlane.f32.xlu0 %v1124
        %v1128 = vpop.xlane.xlu0 %1127
        %v1129 = vmul.f32 %v1126, 0.03125
        %v1130 = vmul.f32 %v1128, 0.03125
        %v1131 = vmul.f32 %v1123, %v1123
        %v1132 = vmul.f32 %v1124, %v1124
        %1133 = vadd.xlane.f32.xlu0 %v1131
        %v1134 = vpop.xlane.xlu0 %1133
        %1135 = vadd.xlane.f32.xlu0 %v1132
        %v1136 = vpop.xlane.xlu0 %1135
        %v1137 = vmul.f32 %v1134, 0.03125
        %v1138 = vmul.f32 %v1136, 0.03125
        %v1139 = vmul.f32 %v1129, %v1129
        %v1140 = vmul.f32 %v1130, %v1130
        %v1141 = vsub.f32 %v1137, %v1139
        %v1142 = vsub.f32 %v1138, %v1140
        %v1143 = vsub.f32 %v1123, %v1129
        %v1144 = vsub.f32 %v1124, %v1130
        %v1145 = vadd.f32 %v1141, 1e-05
        %v1146 = vadd.f32 %v1142, 1e-05
        %v1147 = vrsqrt.pop %v1145
        %v1148 = vmul.f32 %v1147, %v1145
        %v1149 = vmul.f32 %v1148, %v1147
        %v1150 = vmul.f32 0.5, %v1149
        %v1151 = vsub.f32 1.5, %v1150
        %v1152 = vmul.f32 %v1147, %v1151
        %vm1153 = vweird.f32 %v1145
        %vm1154 = vweird.f32 %v1147
        %vm1155 = vmor %vm1153, %vm1154
        %v1156 = vsel %vm1155, %v1147, %v1152
        %v1157 = vrsqrt.pop %v1146
        %v1158 = vmul.f32 %v1157, %v1146
        %v1159 = vmul.f32 %v1158, %v1157
        %v1160 = vmul.f32 0.5, %v1159
        %v1161 = vsub.f32 1.5, %v1160
        %v1162 = vmul.f32 %v1157, %v1161
        %vm1163 = vweird.f32 %v1146
        %vm1164 = vweird.f32 %v1157
        %vm1165 = vmor %vm1163, %vm1164
        %v1166 = vsel %vm1165, %v1157, %v1162
        %v1167 = vmul.f32 %v1143, %v1156
        %v1168 = vmul.f32 %v1144, %v1166
        %v1169 = vld [vmem:[%s6] sm:$0x1]
        %v1171 = vperm.slane %v1169, 0
        %v1173 = vmul.f32 %v1167, %v1171
        %v1174 = vmul.f32 %v1168, %v1171
        %v1175 = vld [vmem:[%s7] sm:$0x1]
        %v1177 = vperm.slane %v1175, 0
        %v1179 = vadd.f32 %v1173, %v1177
        %v1180 = vadd.f32 %v1174, %v1177
        %1181 = vst [vmem:[#allocation2] sm:$0x1] 0.0
        %1182 = vst [vmem:[#allocation2 + $0x10] sm:$0x1] 0.0
        %1183 = vst [vmem:[#allocation2 + $0x9] sm:$0x1] 0.0
        %1184 = vst [vmem:[#allocation2 + $0x19] sm:$0x1] 0.0
        %1185 = vst [vmem:[#allocation2 + $0x1] sm:$0xff] %v1179
        %1186 = vst [vmem:[#allocation2 + $0x11] sm:$0xff] %v1180
        %v1187 = vld [vmem:[%s9] sm:$0x1]
        %v1189 = vperm.slane %v1187, 0
        %v1191 = vld [vmem:[#allocation2] sm:$0xff]
        %v1192 = vld [vmem:[#allocation2 + $0x10] sm:$0xff]
        %v1193 = vpack.c.bf16 %v1192, %v1191
        %v1194 = vld [vmem:[%s8] sm:$0xf]
        %v1195 = vld [vmem:[%s8 + $0x4] sm:$0xf]
        %v1196 = vld [vmem:[%s8 + $0x8] sm:$0xf]
        %v1197 = vld [vmem:[%s8 + $0xc] sm:$0xf]
        %v1198 = vld [vmem:[%s8 + $0x10] sm:$0xf]
        %v1199 = vld [vmem:[%s8 + $0x14] sm:$0xf]
        %v1200 = vld [vmem:[%s8 + $0x18] sm:$0xf]
        %v1201 = vld [vmem:[%s8 + $0x1c] sm:$0xf]
        %v1202 = vld [vmem:[%s8 + $0x20] sm:$0xf]
        %v1203 = vld [vmem:[%s8 + $0x24] sm:$0xf]
        %v1204 = vld [vmem:[%s8 + $0x28] sm:$0xf]
        %v1205 = vld [vmem:[%s8 + $0x2c] sm:$0xf]
        %v1206 = vld [vmem:[%s8 + $0x30] sm:$0xf]
        %v1207 = vld [vmem:[%s8 + $0x34] sm:$0xf]
        %v1208 = vld [vmem:[%s8 + $0x38] sm:$0xf]
        %v1209 = vld [vmem:[%s8 + $0x3c] sm:$0xf]
        %v1226 = vunpack.c.l.b16 %v1194
        %v1227 = vunpack.c.l.b16 %v1195
        %v1228 = vunpack.c.l.b16 %v1196
        %v1229 = vunpack.c.l.b16 %v1197
        %v1230 = vunpack.c.l.b16 %v1198
        %v1231 = vunpack.c.l.b16 %v1199
        %v1232 = vunpack.c.l.b16 %v1200
        %v1233 = vunpack.c.l.b16 %v1201
        %v1234 = vunpack.c.l.b16 %v1202
        %v1235 = vunpack.c.l.b16 %v1203
        %v1236 = vunpack.c.l.b16 %v1204
        %v1237 = vunpack.c.l.b16 %v1205
        %v1238 = vunpack.c.l.b16 %v1206
        %v1239 = vunpack.c.l.b16 %v1207
        %v1240 = vunpack.c.l.b16 %v1208
        %v1241 = vunpack.c.l.b16 %v1209
        %v1242 = vpack.c.b16 %v1227, %v1226
        %v1243 = vpack.c.b16 %v1229, %v1228
        %v1244 = vpack.c.b16 %v1231, %v1230
        %v1245 = vpack.c.b16 %v1233, %v1232
        %v1246 = vpack.c.b16 %v1235, %v1234
        %v1247 = vpack.c.b16 %v1237, %v1236
        %v1248 = vpack.c.b16 %v1239, %v1238
        %v1249 = vpack.c.b16 %v1241, %v1240
        %1258 = vmatpush.bf16.msra.mxu0 %v1249
        %1259 = vmatpush.bf16.msra.mxu0 %v1248
        %1260 = vmatpush.bf16.msra.mxu0 %v1247
        %1261 = vmatpush.bf16.msra.mxu0 %v1246
        %1262 = vmatpush.bf16.msra.mxu0 %v1245
        %1263 = vmatpush.bf16.msra.mxu0 %v1244
        %1264 = vmatpush.bf16.msra.mxu0 %v1243
        %1265 = vmatpush.bf16.msra.mxu0 %v1242
        %1266 = vmatmul.bf16.gmra.mxu0 %v1193
        %v1267 = vpop.f32.mrf.mxu0
        %v1268 = vadd.f32 0.0, %v1267
        %v1269 = vpop.f32.mrf.mxu0
        %v1270 = vadd.f32 0.0, %v1269
        %1271 = vdwg.mxu0
        %v1272 = vadd.f32 %v1189, %v1268
        %v1273 = vadd.f32 %v1189, %v1270
        %v1274 = vld [vmem:[#allocation2 + $0x1] sm:$0xff]
        %v1275 = vld [vmem:[#allocation2 + $0x11] sm:$0xff]
        %v1276 = vpack.c.bf16 %v1275, %v1274
        %s1277 = scalar_lea.vmem %s8, 64
        %v1278 = vld [vmem:[%s1277] sm:$0xf]
        %v1279 = vld [vmem:[%s1277 + $0x4] sm:$0xf]
        %v1280 = vld [vmem:[%s1277 + $0x8] sm:$0xf]
        %v1281 = vld [vmem:[%s1277 + $0xc] sm:$0xf]
        %v1282 = vld [vmem:[%s1277 + $0x10] sm:$0xf]
        %v1283 = vld [vmem:[%s1277 + $0x14] sm:$0xf]
        %v1284 = vld [vmem:[%s1277 + $0x18] sm:$0xf]
        %v1285 = vld [vmem:[%s1277 + $0x1c] sm:$0xf]
        %v1286 = vld [vmem:[%s1277 + $0x20] sm:$0xf]
        %v1287 = vld [vmem:[%s1277 + $0x24] sm:$0xf]
        %v1288 = vld [vmem:[%s1277 + $0x28] sm:$0xf]
        %v1289 = vld [vmem:[%s1277 + $0x2c] sm:$0xf]
        %v1290 = vld [vmem:[%s1277 + $0x30] sm:$0xf]
        %v1291 = vld [vmem:[%s1277 + $0x34] sm:$0xf]
        %v1292 = vld [vmem:[%s1277 + $0x38] sm:$0xf]
        %v1293 = vld [vmem:[%s1277 + $0x3c] sm:$0xf]
        %v1310 = vunpack.c.l.b16 %v1278
        %v1311 = vunpack.c.l.b16 %v1279
        %v1312 = vunpack.c.l.b16 %v1280
        %v1313 = vunpack.c.l.b16 %v1281
        %v1314 = vunpack.c.l.b16 %v1282
        %v1315 = vunpack.c.l.b16 %v1283
        %v1316 = vunpack.c.l.b16 %v1284
        %v1317 = vunpack.c.l.b16 %v1285
        %v1318 = vunpack.c.l.b16 %v1286
        %v1319 = vunpack.c.l.b16 %v1287
        %v1320 = vunpack.c.l.b16 %v1288
        %v1321 = vunpack.c.l.b16 %v1289
        %v1322 = vunpack.c.l.b16 %v1290
        %v1323 = vunpack.c.l.b16 %v1291
        %v1324 = vunpack.c.l.b16 %v1292
        %v1325 = vunpack.c.l.b16 %v1293
        %v1326 = vpack.c.b16 %v1311, %v1310
        %v1327 = vpack.c.b16 %v1313, %v1312
        %v1328 = vpack.c.b16 %v1315, %v1314
        %v1329 = vpack.c.b16 %v1317, %v1316
        %v1330 = vpack.c.b16 %v1319, %v1318
        %v1331 = vpack.c.b16 %v1321, %v1320
        %v1332 = vpack.c.b16 %v1323, %v1322
        %v1333 = vpack.c.b16 %v1325, %v1324
        %1342 = vmatpush.bf16.msra.mxu0 %v1333
        %1343 = vmatpush.bf16.msra.mxu0 %v1332
        %1344 = vmatpush.bf16.msra.mxu0 %v1331
        %1345 = vmatpush.bf16.msra.mxu0 %v1330
        %1346 = vmatpush.bf16.msra.mxu0 %v1329
        %1347 = vmatpush.bf16.msra.mxu0 %v1328
        %1348 = vmatpush.bf16.msra.mxu0 %v1327
        %1349 = vmatpush.bf16.msra.mxu0 %v1326
        %1350 = vmatmul.bf16.gmra.mxu0 %v1276
        %v1351 = vpop.f32.mrf.mxu0
        %v1352 = vadd.f32 0.0, %v1351
        %v1353 = vpop.f32.mrf.mxu0
        %v1354 = vadd.f32 0.0, %v1353
        %1355 = vdwg.mxu0
        %v1356 = vadd.f32 %v1272, %v1352
        %v1357 = vadd.f32 %v1273, %v1354
        %v1358 = vld [vmem:[#allocation2 + $0x2] sm:$0xff]
        %v1359 = vld [vmem:[#allocation2 + $0x12] sm:$0xff]
        %v1360 = vpack.c.bf16 %v1359, %v1358
        %s1361 = scalar_lea.vmem %s8, 128
        %v1362 = vld [vmem:[%s1361] sm:$0xf]
        %v1363 = vld [vmem:[%s1361 + $0x4] sm:$0xf]
        %v1364 = vld [vmem:[%s1361 + $0x8] sm:$0xf]
        %v1365 = vld [vmem:[%s1361 + $0xc] sm:$0xf]
        %v1366 = vld [vmem:[%s1361 + $0x10] sm:$0xf]
        %v1367 = vld [vmem:[%s1361 + $0x14] sm:$0xf]
        %v1368 = vld [vmem:[%s1361 + $0x18] sm:$0xf]
        %v1369 = vld [vmem:[%s1361 + $0x1c] sm:$0xf]
        %v1370 = vld [vmem:[%s1361 + $0x20] sm:$0xf]
        %v1371 = vld [vmem:[%s1361 + $0x24] sm:$0xf]
        %v1372 = vld [vmem:[%s1361 + $0x28] sm:$0xf]
        %v1373 = vld [vmem:[%s1361 + $0x2c] sm:$0xf]
        %v1374 = vld [vmem:[%s1361 + $0x30] sm:$0xf]
        %v1375 = vld [vmem:[%s1361 + $0x34] sm:$0xf]
        %v1376 = vld [vmem:[%s1361 + $0x38] sm:$0xf]
        %v1377 = vld [vmem:[%s1361 + $0x3c] sm:$0xf]
        %v1394 = vunpack.c.l.b16 %v1362
        %v1395 = vunpack.c.l.b16 %v1363
        %v1396 = vunpack.c.l.b16 %v1364
        %v1397 = vunpack.c.l.b16 %v1365
        %v1398 = vunpack.c.l.b16 %v1366
        %v1399 = vunpack.c.l.b16 %v1367
        %v1400 = vunpack.c.l.b16 %v1368
        %v1401 = vunpack.c.l.b16 %v1369
        %v1402 = vunpack.c.l.b16 %v1370
        %v1403 = vunpack.c.l.b16 %v1371
        %v1404 = vunpack.c.l.b16 %v1372
        %v1405 = vunpack.c.l.b16 %v1373
        %v1406 = vunpack.c.l.b16 %v1374
        %v1407 = vunpack.c.l.b16 %v1375
        %v1408 = vunpack.c.l.b16 %v1376
        %v1409 = vunpack.c.l.b16 %v1377
        %v1410 = vpack.c.b16 %v1395, %v1394
        %v1411 = vpack.c.b16 %v1397, %v1396
        %v1412 = vpack.c.b16 %v1399, %v1398
        %v1413 = vpack.c.b16 %v1401, %v1400
        %v1414 = vpack.c.b16 %v1403, %v1402
        %v1415 = vpack.c.b16 %v1405, %v1404
        %v1416 = vpack.c.b16 %v1407, %v1406
        %v1417 = vpack.c.b16 %v1409, %v1408
        %1426 = vmatpush.bf16.msra.mxu0 %v1417
        %1427 = vmatpush.bf16.msra.mxu0 %v1416
        %1428 = vmatpush.bf16.msra.mxu0 %v1415
        %1429 = vmatpush.bf16.msra.mxu0 %v1414
        %1430 = vmatpush.bf16.msra.mxu0 %v1413
        %1431 = vmatpush.bf16.msra.mxu0 %v1412
        %1432 = vmatpush.bf16.msra.mxu0 %v1411
        %1433 = vmatpush.bf16.msra.mxu0 %v1410
        %1434 = vmatmul.bf16.gmra.mxu0 %v1360
        %v1435 = vpop.f32.mrf.mxu0
        %v1436 = vadd.f32 0.0, %v1435
        %v1437 = vpop.f32.mrf.mxu0
        %v1438 = vadd.f32 0.0, %v1437
        %1439 = vdwg.mxu0
        %v1440 = vadd.f32 %v1356, %v1436
        %v1441 = vadd.f32 %v1357, %v1438
        %v1442 = vmax.f32 %v1440, 0.0
        %v1443 = vmax.f32 %v1441, 0.0
        %v1444 = vpack.c.bf16 %v1443, %v1442
        %v1445 = vld [vmem:[%s10] sm:$0xf]
        %v1446 = vld [vmem:[%s10 + $0x4] sm:$0xf]
        %v1447 = vld [vmem:[%s10 + $0x8] sm:$0xf]
        %v1448 = vld [vmem:[%s10 + $0xc] sm:$0xf]
        %v1449 = vld [vmem:[%s10 + $0x10] sm:$0xf]
        %v1450 = vld [vmem:[%s10 + $0x14] sm:$0xf]
        %v1451 = vld [vmem:[%s10 + $0x18] sm:$0xf]
        %v1452 = vld [vmem:[%s10 + $0x1c] sm:$0xf]
        %v1453 = vld [vmem:[%s11] sm:$0x1]
        %v1455 = vperm.slane %v1453, 0
        %v1465 = vunpack.c.l.b16 %v1445
        %v1466 = vunpack.c.l.b16 %v1446
        %v1467 = vunpack.c.l.b16 %v1447
        %v1468 = vunpack.c.l.b16 %v1448
        %v1469 = vunpack.c.l.b16 %v1449
        %v1470 = vunpack.c.l.b16 %v1450
        %v1471 = vunpack.c.l.b16 %v1451
        %v1472 = vunpack.c.l.b16 %v1452
        %v1473 = vpack.c.b16 %v1466, %v1465
        %v1474 = vpack.c.b16 %v1468, %v1467
        %v1475 = vpack.c.b16 %v1470, %v1469
        %v1476 = vpack.c.b16 %v1472, %v1471
        %vm1481 = vcmask 523264
        %v1483 = vsel %vm1481, %v1444, 0
        %1485 = vmatpush.bf16.msra.mxu0 0
        %1486 = vmatpush.bf16.msra.mxu0 0
        %1487 = vmatpush.bf16.msra.mxu0 0
        %1488 = vmatpush.bf16.msra.mxu0 0
        %1489 = vmatpush.bf16.msra.mxu0 %v1476
        %1490 = vmatpush.bf16.msra.mxu0 %v1475
        %1491 = vmatpush.bf16.msra.mxu0 %v1474
        %1492 = vmatpush.bf16.msra.mxu0 %v1473
        %1493 = vmatmul.bf16.gmra.mxu0 %v1483
        %v1494 = vpop.f32.mrf.mxu0
        %v1495 = vadd.f32 %v1455, %v1494
        %v1496 = vpop.f32.mrf.mxu0
        %v1497 = vadd.f32 %v1455, %v1496
        %1498 = vdwg.mxu0
        %v1499 = vadd.f32 %v1179, %v1495
        %v1500 = vadd.f32 %v1180, %v1497
        %1501 = vadd.xlane.f32.xlu0 %v1499
        %v1502 = vpop.xlane.xlu0 %1501
        %1503 = vadd.xlane.f32.xlu0 %v1500
        %v1504 = vpop.xlane.xlu0 %1503
        %v1505 = vmul.f32 %v1502, 0.03125
        %v1506 = vmul.f32 %v1504, 0.03125
        %v1507 = vmul.f32 %v1499, %v1499
        %v1508 = vmul.f32 %v1500, %v1500
        %1509 = vadd.xlane.f32.xlu0 %v1507
        %v1510 = vpop.xlane.xlu0 %1509
        %1511 = vadd.xlane.f32.xlu0 %v1508
        %v1512 = vpop.xlane.xlu0 %1511
        %v1513 = vmul.f32 %v1510, 0.03125
        %v1514 = vmul.f32 %v1512, 0.03125
        %v1515 = vmul.f32 %v1505, %v1505
        %v1516 = vmul.f32 %v1506, %v1506
        %v1517 = vsub.f32 %v1513, %v1515
        %v1518 = vsub.f32 %v1514, %v1516
        %v1519 = vsub.f32 %v1499, %v1505
        %v1520 = vsub.f32 %v1500, %v1506
        %v1521 = vadd.f32 %v1517, 1e-05
        %v1522 = vadd.f32 %v1518, 1e-05
        %v1523 = vrsqrt.pop %v1521
        %v1524 = vmul.f32 %v1523, %v1521
        %v1525 = vmul.f32 %v1524, %v1523
        %v1526 = vmul.f32 0.5, %v1525
        %v1527 = vsub.f32 1.5, %v1526
        %v1528 = vmul.f32 %v1523, %v1527
        %vm1529 = vweird.f32 %v1521
        %vm1530 = vweird.f32 %v1523
        %vm1531 = vmor %vm1529, %vm1530
        %v1532 = vsel %vm1531, %v1523, %v1528
        %v1533 = vrsqrt.pop %v1522
        %v1534 = vmul.f32 %v1533, %v1522
        %v1535 = vmul.f32 %v1534, %v1533
        %v1536 = vmul.f32 0.5, %v1535
        %v1537 = vsub.f32 1.5, %v1536
        %v1538 = vmul.f32 %v1533, %v1537
        %vm1539 = vweird.f32 %v1522
        %vm1540 = vweird.f32 %v1533
        %vm1541 = vmor %vm1539, %vm1540
        %v1542 = vsel %vm1541, %v1533, %v1538
        %v1543 = vmul.f32 %v1519, %v1532
        %v1544 = vmul.f32 %v1520, %v1542
        %v1545 = vld [vmem:[%s12] sm:$0x1]
        %v1547 = vperm.slane %v1545, 0
        %v1549 = vmul.f32 %v1543, %v1547
        %v1550 = vmul.f32 %v1544, %v1547
        %v1551 = vld [vmem:[%s13] sm:$0x1]
        %v1553 = vperm.slane %v1551, 0
        %v1555 = vadd.f32 %v1549, %v1553
        %v1556 = vadd.f32 %v1550, %v1553
        %1557 = vst [vmem:[%s475] sm:$0xff] %v1555
        %1558 = vst [vmem:[%s475 + $0x8] sm:$0xff] %v1556
        %s1559 = sand.u32 %s340, 1
        %s1560 = scalar_lea.sflag [#allocation4], %s1559
        %s1561 = sand.u32 %s340, 1
        %s1562 = smul.addr %s1561, 16
        %s1563 = scalar_lea.vmem [#allocation3], %s1562
        // Predicated region
        $region77: #{tpu_custom_call.1} parent=75 // pred_check
          %p1564 = pneg %p350
        $region78: #{tpu_custom_call.1} parent=75 // pred_check_branch
          %1566 = sbr.rel (%p1564) target = $region80
        $region79: #{tpu_custom_call.1} parent=75 // pred_region
          %s1567 = smul.u32 2, %s28
          %1569 = vsyncadd %s1560, 0
          %s1570 = smul.addr %s1567, 8
          %s1571 = scalar_lea.hbm %s14, %s1570
          %s1572 = sshll.u32 %s1563, 4
          %s1573 = int_to_ptr.vmem [resolvable:$true] %s1572
          %s1574 = sshll.u32 %s1571, 4
          %s1575 = int_to_ptr.hbm [resolvable:$true] %s1574
          %1580 = dma.vmem_to_hbm [thread:$0]  %s1573, 256, %s1575, %s1560, 128, 128, 8
        $region80: #{tpu_custom_call.1} parent=75 // pred_fallthru
          _
      $region76: #{tpu_custom_call.1} parent=5 // pred_fallthru
        _
      %p1581 = scmp.le.s32.totalorder 2, %s23
      // Predicated region
      $region81: #{tpu_custom_call.1} parent=5 // pred_check
        %p1582 = pneg %p1581
      $region82: #{tpu_custom_call.1} parent=5 // pred_check_branch
        %1584 = sbr.rel (%p1582) target = $region84
      $region83: #{tpu_custom_call.1} parent=5 // pred_region
        %s1585 = ssub.s32 %s23, 2
        // Predicated region
        $region85: #{tpu_custom_call.1} parent=83 // pred_check
          %p1586 = pneg %p356
        $region86: #{tpu_custom_call.1} parent=83 // pred_check_branch
          %1588 = sbr.rel (%p1586) target = $region88
        $region87: #{tpu_custom_call.1} parent=83 // pred_region
          %s1589 = sand.u32 %s341, 1
          %s1590 = scalar_lea.sflag [#allocation4], %s1589
          %s1591 = sand.u32 %s341, 1
          %s1592 = smul.addr %s1591, 16
          %s1593 = scalar_lea.vmem [#allocation3], %s1592
          %1595 = dma.done %s1590, 256
        $region88: #{tpu_custom_call.1} parent=83 // pred_fallthru
          _
      $region84: #{tpu_custom_call.1} parent=5 // pred_fallthru
        _
    $region6: #{tpu_custom_call.1} parent=1 // loop_footer
      %s27 = sadd.s32 1, %s23
    $region7: #{tpu_custom_call.1} parent=1 // loop_footer_branch
      %22 = sbr.rel target = $region3
    $region8: #{tpu_custom_call.1} parent=1 // loop_exit
      _
    %1596 = vsyncpa [#allocation4], 1
    %s1597 = scalar_lea.sflag [#allocation4], 1
    %1598 = vsyncpa %s1597, 1

</llo_original>
